<compile_context>
chip_gen: v7x
topology: tpu7x:2x2x1
jax: 0.10.0
libtpu: 0.0.40
codegen_flags: <defaults>
</compile_context>

<pallas_src>
import functools

import jax
import jax.numpy as jnp
from jax import lax
from jax.experimental import pallas as pl
from jax.experimental.pallas import tpu as pltpu

F32 = jnp.float32
BF16 = jnp.bfloat16

CONS_NFEATS = 5
EDGE_NFEATS = 1
VAR_NFEATS = 19

_VMEM_LIMIT_BYTES = 32 * 1024 * 1024  # safe on v5e/v6e (128 MiB) and v7x (64 MiB)


# --------------------------------------------------------------------------
# helpers
# --------------------------------------------------------------------------
def _round_up(n, m):
    return ((n + m - 1) // m) * m


def _row_tile(n, max_tile):
    """Row tile (multiple of 8) and padded row count (multiple of the tile)."""
    t = min(max_tile, _round_up(n, 8))
    return t, _round_up(n, t)


def _pad_rows(x, n_rows, value=0):
    pad = n_rows - x.shape[0]
    if pad == 0:
        return x
    return jnp.pad(x, ((0, pad), (0, 0)), constant_values=value)


def _block_diag_att(att, heads, out_ch):
    """(1, H*C) attention vector -> (H*C, H) block-diagonal matrix so that
    per-head logits become a single MXU matmul: a = x_proj @ att_bd."""
    a = att.reshape(heads, out_ch).astype(F32)          # (H, C)
    eye = jnp.eye(heads, dtype=F32)                     # (H, H)
    return (a[:, :, None] * eye[:, None, :]).reshape(heads * out_ch, heads)


# --------------------------------------------------------------------------
# Fused Linear (+ bias + optional ReLU), row-tiled
# --------------------------------------------------------------------------
def _linear_kernel(x_ref, w_ref, b_ref, o_ref, *, relu):
    y = jnp.dot(x_ref[...].astype(BF16), w_ref[...].astype(BF16),
                preferred_element_type=F32)
    y = y + b_ref[...]
    if relu:
        y = jnp.maximum(y, 0.0)
    o_ref[...] = y


def linear(x, w, b=None, relu=False, max_tile=512):
    x = x.astype(F32)
    n, k = x.shape
    out = w.shape[1]
    if b is None:
        b = jnp.zeros((out,), F32)
    tr, n_pad = _row_tile(n, max_tile)
    xp = _pad_rows(x, n_pad)
    y = pl.pallas_call(
        functools.partial(_linear_kernel, relu=relu),
        out_shape=jax.ShapeDtypeStruct((n_pad, out), F32),
        grid=(n_pad // tr,),
        in_specs=[
            pl.BlockSpec((tr, k), lambda i: (i, 0)),
            pl.BlockSpec((k, out), lambda i: (0, 0)),
            pl.BlockSpec((1, out), lambda i: (0, 0)),
        ],
        out_specs=pl.BlockSpec((tr, out), lambda i: (i, 0)),
        compiler_params=pltpu.CompilerParams(
            dimension_semantics=("parallel",),
            vmem_limit_bytes=_VMEM_LIMIT_BYTES),
    )(xp, w.astype(F32), b.reshape(1, out).astype(F32))
    return y[:n]


# --------------------------------------------------------------------------
# Fused 2-layer MLP: Linear -> ReLU -> Linear (+bias) [-> ReLU], row-tiled
# --------------------------------------------------------------------------
def _mlp2_kernel(x_ref, w1_ref, b1_ref, w2_ref, b2_ref, o_ref, *, relu2):
    h = jnp.dot(x_ref[...].astype(BF16), w1_ref[...].astype(BF16),
                preferred_element_type=F32) + b1_ref[...]
    h = jnp.maximum(h, 0.0)
    y = jnp.dot(h.astype(BF16), w2_ref[...].astype(BF16),
                preferred_element_type=F32) + b2_ref[...]
    if relu2:
        y = jnp.maximum(y, 0.0)
    o_ref[...] = y


def mlp2(x, w1, b1, w2, b2=None, relu2=True, max_tile=512):
    x = x.astype(F32)
    n, k = x.shape
    hdim = w1.shape[1]
    out = w2.shape[1]
    if b2 is None:
        b2 = jnp.zeros((out,), F32)
    tr, n_pad = _row_tile(n, max_tile)
    xp = _pad_rows(x, n_pad)
    y = pl.pallas_call(
        functools.partial(_mlp2_kernel, relu2=relu2),
        out_shape=jax.ShapeDtypeStruct((n_pad, out), F32),
        grid=(n_pad // tr,),
        in_specs=[
            pl.BlockSpec((tr, k), lambda i: (i, 0)),
            pl.BlockSpec((k, hdim), lambda i: (0, 0)),
            pl.BlockSpec((1, hdim), lambda i: (0, 0)),
            pl.BlockSpec((hdim, out), lambda i: (0, 0)),
            pl.BlockSpec((1, out), lambda i: (0, 0)),
        ],
        out_specs=pl.BlockSpec((tr, out), lambda i: (i, 0)),
        compiler_params=pltpu.CompilerParams(
            dimension_semantics=("parallel",),
            vmem_limit_bytes=_VMEM_LIMIT_BYTES),
    )(xp, w1.astype(F32), b1.reshape(1, hdim).astype(F32),
      w2.astype(F32), b2.reshape(1, out).astype(F32))
    return y[:n]


# --------------------------------------------------------------------------
# Fused GAT source projection + per-head attention logit, row-tiled
#   xs = x @ W        (n, H*C)
#   a  = xs @ att_bd  (n, H)
# --------------------------------------------------------------------------
def _project_kernel(x_ref, w_ref, attbd_ref, xs_ref, a_ref):
    xs = jnp.dot(x_ref[...].astype(BF16), w_ref[...].astype(BF16),
                 preferred_element_type=F32)
    xs_ref[...] = xs
    a_ref[...] = jnp.dot(xs.astype(BF16), attbd_ref[...].astype(BF16),
                         preferred_element_type=F32)


def project(x, w, att_blockdiag, max_tile=512):
    x = x.astype(F32)
    n, k = x.shape
    hc = w.shape[1]
    heads = att_blockdiag.shape[1]
    tr, n_pad = _row_tile(n, max_tile)
    xp = _pad_rows(x, n_pad)
    xs, a = pl.pallas_call(
        _project_kernel,
        out_shape=(jax.ShapeDtypeStruct((n_pad, hc), F32),
                   jax.ShapeDtypeStruct((n_pad, heads), F32)),
        grid=(n_pad // tr,),
        in_specs=[
            pl.BlockSpec((tr, k), lambda i: (i, 0)),
            pl.BlockSpec((k, hc), lambda i: (0, 0)),
            pl.BlockSpec((hc, heads), lambda i: (0, 0)),
        ],
        out_specs=(pl.BlockSpec((tr, hc), lambda i: (i, 0)),
                   pl.BlockSpec((tr, heads), lambda i: (i, 0))),
        compiler_params=pltpu.CompilerParams(
            dimension_semantics=("parallel",),
            vmem_limit_bytes=_VMEM_LIMIT_BYTES),
    )(xp, w.astype(F32), att_blockdiag.astype(F32))
    return xs[:n], a[:n]


# --------------------------------------------------------------------------
# GAT aggregation: edge-tiled grid, accumulators resident across the edge axis.
# PyG GATConv semantics (add_self_loops=False, concat=True, slope=0.2, eval).
# --------------------------------------------------------------------------
def _gat_agg_kernel(src_ref, dst_ref, xs_ref, a_src_ref, a_dst_ref, a_edge_ref,
                    shift_ref, expand_ref, bias_ref, o_ref,
                    acc_num, acc_den, *, n_src, n_dst):
    e = pl.program_id(0)

    @pl.when(e == 0)
    def _():
        acc_num[...] = jnp.zeros_like(acc_num)
        acc_den[...] = jnp.zeros_like(acc_den)

    te = src_ref.shape[0]
    # One-hot gather/scatter matrices for this edge tile (padded edges carry
    # index -1 -> all-zero rows/columns -> contribute nothing).
    src_oh = (src_ref[...] == lax.broadcasted_iota(
        jnp.int32, (te, n_src), 1)).astype(BF16)                 # (TE, n_src)
    dst_oh = (dst_ref[...] == lax.broadcasted_iota(
        jnp.int32, (te, n_dst), 1)).astype(BF16)                 # (TE, n_dst)

    # per-edge attention logits (single MXU matmuls against tiny (N, H) tables)
    a_src_e = jnp.dot(src_oh, a_src_ref[...], preferred_element_type=F32)
    a_dst_e = jnp.dot(dst_oh, a_dst_ref[...], preferred_element_type=F32)
    alpha = a_src_e + a_dst_e + a_edge_ref[...]                  # (TE, H)
    alpha = jnp.where(alpha > 0, alpha, 0.2 * alpha)             # LeakyReLU(0.2)
    # shift is a uniform (per-head) upper bound on all edge logits -> exp <= 1
    ex = jnp.exp(alpha - shift_ref[...])                         # (TE, H), f32

    # gather source features, weight per head, scatter-add to destinations
    xs_e = jnp.dot(src_oh, xs_ref[...], preferred_element_type=F32)     # (TE, HC)
    ex_full = jnp.dot(ex, expand_ref[...], preferred_element_type=F32)  # (TE, HC)
    msg = (xs_e * ex_full).astype(BF16)

    acc_num[...] += lax.dot_general(
        dst_oh, msg, (((0,), (0,)), ((), ())), preferred_element_type=F32)
    acc_den[...] += lax.dot_general(
        dst_oh, ex.astype(BF16), (((0,), (0,)), ((), ())),
        preferred_element_type=F32)

    @pl.when(e == pl.num_programs(0) - 1)
    def _():
        den_full = jnp.dot(acc_den[...], expand_ref[...],
                           preferred_element_type=F32)
        o_ref[...] = acc_num[...] / (den_full + 1e-16) + bias_ref[...]


def gat_conv(x_src, x_dst, edge_src, edge_dst, edge_attr, p, heads, out_ch,
             edge_tile=256):
    """PyG-style GATConv((src, dst)) with edge features, concat heads, bias."""
    hc = heads * out_ch
    n_src, n_dst = x_src.shape[0], x_dst.shape[0]
    n_edge = edge_attr.shape[0]

    att_src_bd = _block_diag_att(p["att_src"], heads, out_ch)    # (HC, H)
    att_dst_bd = _block_diag_att(p["att_dst"], heads, out_ch)
    att_edge_bd = _block_diag_att(p["att_edge"], heads, out_ch)
    # per-head broadcast matrix: expand[h, h*C:(h+1)*C] = 1
    expand = jnp.kron(jnp.eye(heads, dtype=F32), jnp.ones((1, out_ch), F32))

    # lin_src is needed in full (gathered into messages); its per-head logit is
    # fused into the same kernel. lin_dst / lin_edge only enter through their
    # logits, so projection + per-head reduction compose into one small matmul.
    xs, a_src = project(x_src, p["w_src"], att_src_bd)           # (n_src,HC),(n_src,H)
    a_dst = linear(x_dst, jnp.dot(p["w_dst"].astype(F32), att_dst_bd))      # (n_dst,H)
    a_edge = linear(edge_attr, jnp.dot(p["w_edge"].astype(F32), att_edge_bd))  # (E,H)

    # Uniform per-head shift >= every edge logit (LeakyReLU is monotone), so
    # the segment softmax is unchanged and exp() cannot overflow in any tile.
    shift = (jnp.max(a_src, axis=0) + jnp.max(a_dst, axis=0)
             + jnp.max(a_edge, axis=0))
    shift = jnp.where(shift > 0, shift, 0.2 * shift).reshape(1, heads)

    te, e_pad = _row_tile(n_edge, edge_tile)
    src_idx = _pad_rows(edge_src.reshape(n_edge, 1).astype(jnp.int32), e_pad, -1)
    dst_idx = _pad_rows(edge_dst.reshape(n_edge, 1).astype(jnp.int32), e_pad, -1)
    a_edge_p = _pad_rows(a_edge, e_pad)

    kernel = functools.partial(_gat_agg_kernel, n_src=n_src, n_dst=n_dst)
    return pl.pallas_call(
        kernel,
        out_shape=jax.ShapeDtypeStruct((n_dst, hc), F32),
        grid=(e_pad // te,),
        in_specs=[
            pl.BlockSpec((te, 1), lambda e: (e, 0)),            # edge src idx
            pl.BlockSpec((te, 1), lambda e: (e, 0)),            # edge dst idx
            pl.BlockSpec((n_src, hc), lambda e: (0, 0)),        # xs (bf16, resident)
            pl.BlockSpec((n_src, heads), lambda e: (0, 0)),     # a_src (bf16)
            pl.BlockSpec((n_dst, heads), lambda e: (0, 0)),     # a_dst (bf16)
            pl.BlockSpec((te, heads), lambda e: (e, 0)),        # a_edge tile
            pl.BlockSpec((1, heads), lambda e: (0, 0)),         # shift
            pl.BlockSpec((heads, hc), lambda e: (0, 0)),        # expand
            pl.BlockSpec((1, hc), lambda e: (0, 0)),            # bias
        ],
        out_specs=pl.BlockSpec((n_dst, hc), lambda e: (0, 0)),
        scratch_shapes=[pltpu.VMEM((n_dst, hc), F32),
                        pltpu.VMEM((n_dst, heads), F32)],
        compiler_params=pltpu.CompilerParams(
            dimension_semantics=("arbitrary",),
            vmem_limit_bytes=_VMEM_LIMIT_BYTES),
    )(src_idx, dst_idx, xs.astype(BF16), a_src.astype(BF16), a_dst.astype(BF16),
      a_edge_p, shift.astype(F32), expand,
      p["bias"].reshape(1, hc).astype(F32))


# --------------------------------------------------------------------------
# Parameter construction (deterministic; synthetic weights, not a checkpoint)
# --------------------------------------------------------------------------
def init_params(key, emb_size=32, heads=2):
    def nxt():
        nonlocal key
        key, sub = jax.random.split(key)
        return sub

    def w(i, o, scale=0.1):
        return (scale * jax.random.normal(nxt(), (i, o))).astype(F32)

    def b(o):
        return (0.01 * jax.random.normal(nxt(), (o,))).astype(F32)

    HC = heads * emb_size

    def gat_params(in_src, in_dst):
        return dict(
            w_src=w(in_src, HC), w_dst=w(in_dst, HC), w_edge=w(emb_size, HC),
            att_src=w(1, HC), att_dst=w(1, HC), att_edge=w(1, HC),
            bias=b(HC))

    return dict(
        # PreNormLayer buffers (default: shift=0, scale=1)
        cons_pn_shift=jnp.zeros((CONS_NFEATS,), F32),
        cons_pn_scale=jnp.ones((CONS_NFEATS,), F32),
        edge_pn_shift=jnp.zeros((EDGE_NFEATS,), F32),
        edge_pn_scale=jnp.ones((EDGE_NFEATS,), F32),
        var_pn_shift=jnp.zeros((VAR_NFEATS,), F32),
        var_pn_scale=jnp.ones((VAR_NFEATS,), F32),
        # embeddings
        cons_w1=w(CONS_NFEATS, emb_size), cons_b1=b(emb_size),
        cons_w2=w(emb_size, emb_size), cons_b2=b(emb_size),
        edge_w1=w(EDGE_NFEATS, emb_size), edge_b1=b(emb_size),
        var_w1=w(VAR_NFEATS, emb_size), var_b1=b(emb_size),
        var_w2=w(emb_size, emb_size), var_b2=b(emb_size),
        # GAT layers
        gat_v_to_c=gat_params(emb_size, emb_size),
        gat_c_to_v=gat_params(HC, emb_size),
        # output module
        out_w1=w(HC, HC), out_b1=b(HC),
        out_w2=w(HC, 1))  # bias=False


# --------------------------------------------------------------------------
# GNNPolicy.forward (eval mode)
# --------------------------------------------------------------------------
def gnn_policy_forward(params, constraint_features, edge_indices, edge_features,
                       variable_features, *, emb_size, heads):
    variable_features = jnp.nan_to_num(variable_features, nan=0.0)

    # PreNormLayer (identity shift/scale buffers): (x + shift) * scale
    cf = (constraint_features + params["cons_pn_shift"]) * params["cons_pn_scale"]
    ef = (edge_features + params["edge_pn_shift"]) * params["edge_pn_scale"]
    vf = (variable_features + params["var_pn_shift"]) * params["var_pn_scale"]

    # embeddings (fused 2-layer MLPs / fused Linear+ReLU Pallas kernels)
    cf = mlp2(cf, params["cons_w1"], params["cons_b1"],
              params["cons_w2"], params["cons_b2"], relu2=True)
    vf = mlp2(vf, params["var_w1"], params["var_b1"],
              params["var_w2"], params["var_b2"], relu2=True)
    ef = linear(ef, params["edge_w1"], params["edge_b1"], relu=True)

    cons_idx = edge_indices[0]
    var_idx = edge_indices[1]

    # gat_v_to_c (reversed edges): source = variables, destination = constraints
    cf = gat_conv(vf, cf, var_idx, cons_idx, ef,
                  params["gat_v_to_c"], heads, emb_size)         # (n_cons, H*emb)
    # gat_c_to_v (original edges): source = constraints, destination = variables
    vf = gat_conv(cf, vf, cons_idx, var_idx, ef,
                  params["gat_c_to_v"], heads, emb_size)         # (n_var, H*emb)

    # output module: Linear -> ReLU -> Linear(1, bias=False) -> squeeze(-1), fused
    out = mlp2(vf, params["out_w1"], params["out_b1"],
               params["out_w2"], None, relu2=False)              # (n_var, 1)
    return out[:, 0]

    # TODO(synk): PreNormLayer's online-stats pre-training path and GATConv
    # attention dropout are training-only and intentionally not implemented.


# --------------------------------------------------------------------------
if __name__ == "__main__":
    key = jax.random.PRNGKey(0)
    k_par, k_cons, k_var, k_edge, k_ci, k_vi = jax.random.split(key, 6)

    EMB, HEADS = 32, 2
    N_CONS, N_VAR, N_EDGE = 12, 20, 40

    params = init_params(k_par, emb_size=EMB, heads=HEADS)

    constraint_features = jax.random.normal(k_cons, (N_CONS, CONS_NFEATS), F32)
    variable_features = jax.random.normal(k_var, (N_VAR, VAR_NFEATS), F32)
    # inject a NaN to exercise nan_to_num
    variable_features = variable_features.at[0, 0].set(jnp.nan)
    edge_features = jax.random.normal(k_edge, (N_EDGE, EDGE_NFEATS), F32)
    edge_indices = jnp.stack([
        jax.random.randint(k_ci, (N_EDGE,), 0, N_CONS),
        jax.random.randint(k_vi, (N_EDGE,), 0, N_VAR),
    ], axis=0).astype(jnp.int32)                    # (2, E): row0=cons, row1=var

    fwd = jax.jit(functools.partial(gnn_policy_forward, emb_size=EMB, heads=HEADS))
    out = fwd(params, constraint_features, edge_indices, edge_features,
              variable_features)
    jax.block_until_ready(out)

    assert out.shape == (N_VAR,), out.shape
    assert bool(jnp.all(jnp.isfinite(out)))
    print("KERNEL_OK")
</pallas_src>

<mosaic_0001>
module attributes {stable_mosaic.version = 11 : i64} {
  func.func @_project_kernel(%arg0: i32, %arg1: memref<24x32xf32, #tpu.memory_space<vmem>>, %arg2: memref<32x64xf32, #tpu.memory_space<vmem>>, %arg3: memref<64x2xf32, #tpu.memory_space<vmem>>, %arg4: memref<24x64xf32, #tpu.memory_space<vmem>>, %arg5: memref<24x2xf32, #tpu.memory_space<vmem>>) attributes {dimension_semantics = [#tpu.dimension_semantics<parallel>], iteration_bounds = array<i64: 1>, scalar_prefetch = 0 : i64, scratch_operands = 0 : i64, tpu.core_type = #tpu.core_type<tc>, window_params = [{transform_indices = @transform_0, window_bounds = array<i64: 24, 32>}, {pipeline_mode = #tpu.pipeline_mode<synchronous>, transform_indices = @transform_1, window_bounds = array<i64: 32, 64>}, {pipeline_mode = #tpu.pipeline_mode<synchronous>, transform_indices = @transform_2, window_bounds = array<i64: 64, 2>}, {transform_indices = @transform_3, window_bounds = array<i64: 24, 64>}, {transform_indices = @transform_4, window_bounds = array<i64: 24, 2>}]} {
    %c0 = arith.constant 0 : index
    %c0_0 = arith.constant 0 : index
    %0 = vector.load %arg1[%c0, %c0_0] : memref<24x32xf32, #tpu.memory_space<vmem>>, vector<24x32xf32>
    %1 = arith.truncf %0 : vector<24x32xf32> to vector<24x32xbf16>
    %c0_1 = arith.constant 0 : index
    %c0_2 = arith.constant 0 : index
    %2 = vector.load %arg2[%c0_1, %c0_2] : memref<32x64xf32, #tpu.memory_space<vmem>>, vector<32x64xf32>
    %3 = arith.truncf %2 : vector<32x64xf32> to vector<32x64xbf16>
    %cst = arith.constant dense<0.000000e+00> : vector<24x64xf32>
    %4 = tpu.matmul %1, %3, %cst {dimension_numbers = #tpu.dot_dimension_numbers<[1], [0], [0], [1], [0, 0, 1, 1], [], []>} : vector<24x32xbf16>, vector<32x64xbf16>, vector<24x64xf32> -> vector<24x64xf32>
    %c0_3 = arith.constant 0 : index
    %c0_4 = arith.constant 0 : index
    %5 = vector.load %arg4[%c0_3, %c0_4] : memref<24x64xf32, #tpu.memory_space<vmem>>, vector<24x64xf32>
    tpu.vector_store %arg4[%c0_3, %c0_4], %4 {strides = array<i32>} : memref<24x64xf32, #tpu.memory_space<vmem>>, vector<24x64xf32>,
    %6 = arith.truncf %4 : vector<24x64xf32> to vector<24x64xbf16>
    %c0_5 = arith.constant 0 : index
    %c0_6 = arith.constant 0 : index
    %7 = vector.load %arg3[%c0_5, %c0_6] : memref<64x2xf32, #tpu.memory_space<vmem>>, vector<64x2xf32>
    %8 = arith.truncf %7 : vector<64x2xf32> to vector<64x2xbf16>
    %cst_7 = arith.constant dense<0.000000e+00> : vector<24x2xf32>
    %9 = tpu.matmul %6, %8, %cst_7 {dimension_numbers = #tpu.dot_dimension_numbers<[1], [0], [0], [1], [0, 0, 1, 1], [], []>} : vector<24x64xbf16>, vector<64x2xbf16>, vector<24x2xf32> -> vector<24x2xf32>
    %c0_8 = arith.constant 0 : index
    %c0_9 = arith.constant 0 : index
    %10 = vector.load %arg5[%c0_8, %c0_9] : memref<24x2xf32, #tpu.memory_space<vmem>>, vector<24x2xf32>
    tpu.vector_store %arg5[%c0_8, %c0_9], %9 {strides = array<i32>} : memref<24x2xf32, #tpu.memory_space<vmem>>, vector<24x2xf32>,
    return
  }
  func.func @transform_0(%arg0: i32) -> (i32, i32) {
    %c0_i32 = arith.constant 0 : i32
    %c0_i32_0 = arith.constant 0 : i32
    return %arg0, %c0_i32 : i32, i32
  }
  func.func @transform_1(%arg0: i32) -> (i32, i32) {
    %c0_i32 = arith.constant 0 : i32
    %c0_i32_0 = arith.constant 0 : i32
    %c0_i32_1 = arith.constant 0 : i32
    return %c0_i32, %c0_i32_0 : i32, i32
  }
  func.func @transform_2(%arg0: i32) -> (i32, i32) {
    %c0_i32 = arith.constant 0 : i32
    %c0_i32_0 = arith.constant 0 : i32
    %c0_i32_1 = arith.constant 0 : i32
    return %c0_i32, %c0_i32_0 : i32, i32
  }
  func.func @transform_3(%arg0: i32) -> (i32, i32) {
    %c0_i32 = arith.constant 0 : i32
    %c0_i32_0 = arith.constant 0 : i32
    return %arg0, %c0_i32 : i32, i32
  }
  func.func @transform_4(%arg0: i32) -> (i32, i32) {
    %c0_i32 = arith.constant 0 : i32
    %c0_i32_0 = arith.constant 0 : i32
    return %arg0, %c0_i32 : i32, i32
  }
}

module attributes {stable_mosaic.version = 11 : i64} {
  func.func @_linear_kernel(%arg0: i32, %arg1: memref<40x1xf32, #tpu.memory_space<vmem>>, %arg2: memref<1x32xf32, #tpu.memory_space<vmem>>, %arg3: memref<1x32xf32, #tpu.memory_space<vmem>>, %arg4: memref<40x32xf32, #tpu.memory_space<vmem>>) attributes {dimension_semantics = [#tpu.dimension_semantics<parallel>], iteration_bounds = array<i64: 1>, scalar_prefetch = 0 : i64, scratch_operands = 0 : i64, tpu.core_type = #tpu.core_type<tc>, window_params = [{transform_indices = @transform_0, window_bounds = array<i64: 40, 1>}, {pipeline_mode = #tpu.pipeline_mode<synchronous>, transform_indices = @transform_1, window_bounds = array<i64: 1, 32>}, {pipeline_mode = #tpu.pipeline_mode<synchronous>, transform_indices = @transform_2, window_bounds = array<i64: 1, 32>}, {transform_indices = @transform_3, window_bounds = array<i64: 40, 32>}]} {
    %c0 = arith.constant 0 : index
    %c0_0 = arith.constant 0 : index
    %0 = vector.load %arg1[%c0, %c0_0] : memref<40x1xf32, #tpu.memory_space<vmem>>, vector<40x1xf32>
    %1 = arith.truncf %0 : vector<40x1xf32> to vector<40x1xbf16>
    %c0_1 = arith.constant 0 : index
    %c0_2 = arith.constant 0 : index
    %2 = vector.load %arg2[%c0_1, %c0_2] : memref<1x32xf32, #tpu.memory_space<vmem>>, vector<1x32xf32>
    %3 = arith.truncf %2 : vector<1x32xf32> to vector<1x32xbf16>
    %cst = arith.constant dense<0.000000e+00> : vector<40x32xf32>
    %4 = tpu.matmul %1, %3, %cst {dimension_numbers = #tpu.dot_dimension_numbers<[1], [0], [0], [1], [0, 0, 1, 1], [], []>} : vector<40x1xbf16>, vector<1x32xbf16>, vector<40x32xf32> -> vector<40x32xf32>
    %c0_3 = arith.constant 0 : index
    %c0_4 = arith.constant 0 : index
    %5 = vector.load %arg3[%c0_3, %c0_4] : memref<1x32xf32, #tpu.memory_space<vmem>>, vector<1x32xf32>
    %6 = vector.broadcast %5 : vector<1x32xf32> to vector<40x32xf32>
    %7 = arith.addf %4, %6 : vector<40x32xf32>
    %cst_5 = arith.constant 0.000000e+00 : f32
    %8 = vector.broadcast %cst_5 : f32 to vector<40x32xf32>
    %9 = arith.maximumf %7, %8 : vector<40x32xf32>
    %c0_6 = arith.constant 0 : index
    %c0_7 = arith.constant 0 : index
    %10 = vector.load %arg4[%c0_6, %c0_7] : memref<40x32xf32, #tpu.memory_space<vmem>>, vector<40x32xf32>
    tpu.vector_store %arg4[%c0_6, %c0_7], %9 {strides = array<i32>} : memref<40x32xf32, #tpu.memory_space<vmem>>, vector<40x32xf32>,
    return
  }
  func.func @transform_0(%arg0: i32) -> (i32, i32) {
    %c0_i32 = arith.constant 0 : i32
    %c0_i32_0 = arith.constant 0 : i32
    return %arg0, %c0_i32 : i32, i32
  }
  func.func @transform_1(%arg0: i32) -> (i32, i32) {
    %c0_i32 = arith.constant 0 : i32
    %c0_i32_0 = arith.constant 0 : i32
    %c0_i32_1 = arith.constant 0 : i32
    return %c0_i32, %c0_i32_0 : i32, i32
  }
  func.func @transform_2(%arg0: i32) -> (i32, i32) {
    %c0_i32 = arith.constant 0 : i32
    %c0_i32_0 = arith.constant 0 : i32
    %c0_i32_1 = arith.constant 0 : i32
    return %c0_i32, %c0_i32_0 : i32, i32
  }
  func.func @transform_3(%arg0: i32) -> (i32, i32) {
    %c0_i32 = arith.constant 0 : i32
    %c0_i32_0 = arith.constant 0 : i32
    return %arg0, %c0_i32 : i32, i32
  }
}

module attributes {stable_mosaic.version = 11 : i64} {
  func.func @_linear_kernel(%arg0: i32, %arg1: memref<40x32xf32, #tpu.memory_space<vmem>>, %arg2: memref<32x2xf32, #tpu.memory_space<vmem>>, %arg3: memref<1x2xf32, #tpu.memory_space<vmem>>, %arg4: memref<40x2xf32, #tpu.memory_space<vmem>>) attributes {dimension_semantics = [#tpu.dimension_semantics<parallel>], iteration_bounds = array<i64: 1>, scalar_prefetch = 0 : i64, scratch_operands = 0 : i64, tpu.core_type = #tpu.core_type<tc>, window_params = [{transform_indices = @transform_0, window_bounds = array<i64: 40, 32>}, {pipeline_mode = #tpu.pipeline_mode<synchronous>, transform_indices = @transform_1, window_bounds = array<i64: 32, 2>}, {pipeline_mode = #tpu.pipeline_mode<synchronous>, transform_indices = @transform_2, window_bounds = array<i64: 1, 2>}, {transform_indices = @transform_3, window_bounds = array<i64: 40, 2>}]} {
    %c0 = arith.constant 0 : index
    %c0_0 = arith.constant 0 : index
    %0 = vector.load %arg1[%c0, %c0_0] : memref<40x32xf32, #tpu.memory_space<vmem>>, vector<40x32xf32>
    %1 = arith.truncf %0 : vector<40x32xf32> to vector<40x32xbf16>
    %c0_1 = arith.constant 0 : index
    %c0_2 = arith.constant 0 : index
    %2 = vector.load %arg2[%c0_1, %c0_2] : memref<32x2xf32, #tpu.memory_space<vmem>>, vector<32x2xf32>
    %3 = arith.truncf %2 : vector<32x2xf32> to vector<32x2xbf16>
    %cst = arith.constant dense<0.000000e+00> : vector<40x2xf32>
    %4 = tpu.matmul %1, %3, %cst {dimension_numbers = #tpu.dot_dimension_numbers<[1], [0], [0], [1], [0, 0, 1, 1], [], []>} : vector<40x32xbf16>, vector<32x2xbf16>, vector<40x2xf32> -> vector<40x2xf32>
    %c0_3 = arith.constant 0 : index
    %c0_4 = arith.constant 0 : index
    %5 = vector.load %arg3[%c0_3, %c0_4] : memref<1x2xf32, #tpu.memory_space<vmem>>, vector<1x2xf32>
    %6 = vector.broadcast %5 : vector<1x2xf32> to vector<40x2xf32>
    %7 = arith.addf %4, %6 : vector<40x2xf32>
    %c0_5 = arith.constant 0 : index
    %c0_6 = arith.constant 0 : index
    %8 = vector.load %arg4[%c0_5, %c0_6] : memref<40x2xf32, #tpu.memory_space<vmem>>, vector<40x2xf32>
    tpu.vector_store %arg4[%c0_5, %c0_6], %7 {strides = array<i32>} : memref<40x2xf32, #tpu.memory_space<vmem>>, vector<40x2xf32>,
    return
  }
  func.func @transform_0(%arg0: i32) -> (i32, i32) {
    %c0_i32 = arith.constant 0 : i32
    %c0_i32_0 = arith.constant 0 : i32
    return %arg0, %c0_i32 : i32, i32
  }
  func.func @transform_1(%arg0: i32) -> (i32, i32) {
    %c0_i32 = arith.constant 0 : i32
    %c0_i32_0 = arith.constant 0 : i32
    %c0_i32_1 = arith.constant 0 : i32
    return %c0_i32, %c0_i32_0 : i32, i32
  }
  func.func @transform_2(%arg0: i32) -> (i32, i32) {
    %c0_i32 = arith.constant 0 : i32
    %c0_i32_0 = arith.constant 0 : i32
    %c0_i32_1 = arith.constant 0 : i32
    return %c0_i32, %c0_i32_0 : i32, i32
  }
  func.func @transform_3(%arg0: i32) -> (i32, i32) {
    %c0_i32 = arith.constant 0 : i32
    %c0_i32_0 = arith.constant 0 : i32
    return %arg0, %c0_i32 : i32, i32
  }
}

module attributes {stable_mosaic.version = 11 : i64} {
  func.func @_mlp2_kernel(%arg0: i32, %arg1: memref<24x19xf32, #tpu.memory_space<vmem>>, %arg2: memref<19x32xf32, #tpu.memory_space<vmem>>, %arg3: memref<1x32xf32, #tpu.memory_space<vmem>>, %arg4: memref<32x32xf32, #tpu.memory_space<vmem>>, %arg5: memref<1x32xf32, #tpu.memory_space<vmem>>, %arg6: memref<24x32xf32, #tpu.memory_space<vmem>>) attributes {dimension_semantics = [#tpu.dimension_semantics<parallel>], iteration_bounds = array<i64: 1>, scalar_prefetch = 0 : i64, scratch_operands = 0 : i64, tpu.core_type = #tpu.core_type<tc>, window_params = [{transform_indices = @transform_0, window_bounds = array<i64: 24, 19>}, {pipeline_mode = #tpu.pipeline_mode<synchronous>, transform_indices = @transform_1, window_bounds = array<i64: 19, 32>}, {pipeline_mode = #tpu.pipeline_mode<synchronous>, transform_indices = @transform_2, window_bounds = array<i64: 1, 32>}, {pipeline_mode = #tpu.pipeline_mode<synchronous>, transform_indices = @transform_3, window_bounds = array<i64: 32, 32>}, {pipeline_mode = #tpu.pipeline_mode<synchronous>, transform_indices = @transform_4, window_bounds = array<i64: 1, 32>}, {transform_indices = @transform_5, window_bounds = array<i64: 24, 32>}]} {
    %c0 = arith.constant 0 : index
    %c0_0 = arith.constant 0 : index
    %0 = vector.load %arg1[%c0, %c0_0] : memref<24x19xf32, #tpu.memory_space<vmem>>, vector<24x19xf32>
    %1 = arith.truncf %0 : vector<24x19xf32> to vector<24x19xbf16>
    %c0_1 = arith.constant 0 : index
    %c0_2 = arith.constant 0 : index
    %2 = vector.load %arg2[%c0_1, %c0_2] : memref<19x32xf32, #tpu.memory_space<vmem>>, vector<19x32xf32>
    %3 = arith.truncf %2 : vector<19x32xf32> to vector<19x32xbf16>
    %cst = arith.constant dense<0.000000e+00> : vector<24x32xf32>
    %4 = tpu.matmul %1, %3, %cst {dimension_numbers = #tpu.dot_dimension_numbers<[1], [0], [0], [1], [0, 0, 1, 1], [], []>} : vector<24x19xbf16>, vector<19x32xbf16>, vector<24x32xf32> -> vector<24x32xf32>
    %c0_3 = arith.constant 0 : index
    %c0_4 = arith.constant 0 : index
    %5 = vector.load %arg3[%c0_3, %c0_4] : memref<1x32xf32, #tpu.memory_space<vmem>>, vector<1x32xf32>
    %6 = vector.broadcast %5 : vector<1x32xf32> to vector<24x32xf32>
    %7 = arith.addf %4, %6 : vector<24x32xf32>
    %cst_5 = arith.constant 0.000000e+00 : f32
    %8 = vector.broadcast %cst_5 : f32 to vector<24x32xf32>
    %9 = arith.maximumf %7, %8 : vector<24x32xf32>
    %10 = arith.truncf %9 : vector<24x32xf32> to vector<24x32xbf16>
    %c0_6 = arith.constant 0 : index
    %c0_7 = arith.constant 0 : index
    %11 = vector.load %arg4[%c0_6, %c0_7] : memref<32x32xf32, #tpu.memory_space<vmem>>, vector<32x32xf32>
    %12 = arith.truncf %11 : vector<32x32xf32> to vector<32x32xbf16>
    %cst_8 = arith.constant dense<0.000000e+00> : vector<24x32xf32>
    %13 = tpu.matmul %10, %12, %cst_8 {dimension_numbers = #tpu.dot_dimension_numbers<[1], [0], [0], [1], [0, 0, 1, 1], [], []>} : vector<24x32xbf16>, vector<32x32xbf16>, vector<24x32xf32> -> vector<24x32xf32>
    %c0_9 = arith.constant 0 : index
    %c0_10 = arith.constant 0 : index
    %14 = vector.load %arg5[%c0_9, %c0_10] : memref<1x32xf32, #tpu.memory_space<vmem>>, vector<1x32xf32>
    %15 = vector.broadcast %14 : vector<1x32xf32> to vector<24x32xf32>
    %16 = arith.addf %13, %15 : vector<24x32xf32>
    %cst_11 = arith.constant 0.000000e+00 : f32
    %17 = vector.broadcast %cst_11 : f32 to vector<24x32xf32>
    %18 = arith.maximumf %16, %17 : vector<24x32xf32>
    %c0_12 = arith.constant 0 : index
    %c0_13 = arith.constant 0 : index
    %19 = vector.load %arg6[%c0_12, %c0_13] : memref<24x32xf32, #tpu.memory_space<vmem>>, vector<24x32xf32>
    tpu.vector_store %arg6[%c0_12, %c0_13], %18 {strides = array<i32>} : memref<24x32xf32, #tpu.memory_space<vmem>>, vector<24x32xf32>,
    return
  }
  func.func @transform_0(%arg0: i32) -> (i32, i32) {
    %c0_i32 = arith.constant 0 : i32
    %c0_i32_0 = arith.constant 0 : i32
    return %arg0, %c0_i32 : i32, i32
  }
  func.func @transform_1(%arg0: i32) -> (i32, i32) {
    %c0_i32 = arith.constant 0 : i32
    %c0_i32_0 = arith.constant 0 : i32
    %c0_i32_1 = arith.constant 0 : i32
    return %c0_i32, %c0_i32_0 : i32, i32
  }
  func.func @transform_2(%arg0: i32) -> (i32, i32) {
    %c0_i32 = arith.constant 0 : i32
    %c0_i32_0 = arith.constant 0 : i32
    %c0_i32_1 = arith.constant 0 : i32
    return %c0_i32, %c0_i32_0 : i32, i32
  }
  func.func @transform_3(%arg0: i32) -> (i32, i32) {
    %c0_i32 = arith.constant 0 : i32
    %c0_i32_0 = arith.constant 0 : i32
    %c0_i32_1 = arith.constant 0 : i32
    return %c0_i32, %c0_i32_0 : i32, i32
  }
  func.func @transform_4(%arg0: i32) -> (i32, i32) {
    %c0_i32 = arith.constant 0 : i32
    %c0_i32_0 = arith.constant 0 : i32
    %c0_i32_1 = arith.constant 0 : i32
    return %c0_i32, %c0_i32_0 : i32, i32
  }
  func.func @transform_5(%arg0: i32) -> (i32, i32) {
    %c0_i32 = arith.constant 0 : i32
    %c0_i32_0 = arith.constant 0 : i32
    return %arg0, %c0_i32 : i32, i32
  }
}

module attributes {stable_mosaic.version = 11 : i64} {
  func.func @_mlp2_kernel(%arg0: i32, %arg1: memref<16x5xf32, #tpu.memory_space<vmem>>, %arg2: memref<5x32xf32, #tpu.memory_space<vmem>>, %arg3: memref<1x32xf32, #tpu.memory_space<vmem>>, %arg4: memref<32x32xf32, #tpu.memory_space<vmem>>, %arg5: memref<1x32xf32, #tpu.memory_space<vmem>>, %arg6: memref<16x32xf32, #tpu.memory_space<vmem>>) attributes {dimension_semantics = [#tpu.dimension_semantics<parallel>], iteration_bounds = array<i64: 1>, scalar_prefetch = 0 : i64, scratch_operands = 0 : i64, tpu.core_type = #tpu.core_type<tc>, window_params = [{transform_indices = @transform_0, window_bounds = array<i64: 16, 5>}, {pipeline_mode = #tpu.pipeline_mode<synchronous>, transform_indices = @transform_1, window_bounds = array<i64: 5, 32>}, {pipeline_mode = #tpu.pipeline_mode<synchronous>, transform_indices = @transform_2, window_bounds = array<i64: 1, 32>}, {pipeline_mode = #tpu.pipeline_mode<synchronous>, transform_indices = @transform_3, window_bounds = array<i64: 32, 32>}, {pipeline_mode = #tpu.pipeline_mode<synchronous>, transform_indices = @transform_4, window_bounds = array<i64: 1, 32>}, {transform_indices = @transform_5, window_bounds = array<i64: 16, 32>}]} {
    %c0 = arith.constant 0 : index
    %c0_0 = arith.constant 0 : index
    %0 = vector.load %arg1[%c0, %c0_0] : memref<16x5xf32, #tpu.memory_space<vmem>>, vector<16x5xf32>
    %1 = arith.truncf %0 : vector<16x5xf32> to vector<16x5xbf16>
    %c0_1 = arith.constant 0 : index
    %c0_2 = arith.constant 0 : index
    %2 = vector.load %arg2[%c0_1, %c0_2] : memref<5x32xf32, #tpu.memory_space<vmem>>, vector<5x32xf32>
    %3 = arith.truncf %2 : vector<5x32xf32> to vector<5x32xbf16>
    %cst = arith.constant dense<0.000000e+00> : vector<16x32xf32>
    %4 = tpu.matmul %1, %3, %cst {dimension_numbers = #tpu.dot_dimension_numbers<[1], [0], [0], [1], [0, 0, 1, 1], [], []>} : vector<16x5xbf16>, vector<5x32xbf16>, vector<16x32xf32> -> vector<16x32xf32>
    %c0_3 = arith.constant 0 : index
    %c0_4 = arith.constant 0 : index
    %5 = vector.load %arg3[%c0_3, %c0_4] : memref<1x32xf32, #tpu.memory_space<vmem>>, vector<1x32xf32>
    %6 = vector.broadcast %5 : vector<1x32xf32> to vector<16x32xf32>
    %7 = arith.addf %4, %6 : vector<16x32xf32>
    %cst_5 = arith.constant 0.000000e+00 : f32
    %8 = vector.broadcast %cst_5 : f32 to vector<16x32xf32>
    %9 = arith.maximumf %7, %8 : vector<16x32xf32>
    %10 = arith.truncf %9 : vector<16x32xf32> to vector<16x32xbf16>
    %c0_6 = arith.constant 0 : index
    %c0_7 = arith.constant 0 : index
    %11 = vector.load %arg4[%c0_6, %c0_7] : memref<32x32xf32, #tpu.memory_space<vmem>>, vector<32x32xf32>
    %12 = arith.truncf %11 : vector<32x32xf32> to vector<32x32xbf16>
    %cst_8 = arith.constant dense<0.000000e+00> : vector<16x32xf32>
    %13 = tpu.matmul %10, %12, %cst_8 {dimension_numbers = #tpu.dot_dimension_numbers<[1], [0], [0], [1], [0, 0, 1, 1], [], []>} : vector<16x32xbf16>, vector<32x32xbf16>, vector<16x32xf32> -> vector<16x32xf32>
    %c0_9 = arith.constant 0 : index
    %c0_10 = arith.constant 0 : index
    %14 = vector.load %arg5[%c0_9, %c0_10] : memref<1x32xf32, #tpu.memory_space<vmem>>, vector<1x32xf32>
    %15 = vector.broadcast %14 : vector<1x32xf32> to vector<16x32xf32>
    %16 = arith.addf %13, %15 : vector<16x32xf32>
    %cst_11 = arith.constant 0.000000e+00 : f32
    %17 = vector.broadcast %cst_11 : f32 to vector<16x32xf32>
    %18 = arith.maximumf %16, %17 : vector<16x32xf32>
    %c0_12 = arith.constant 0 : index
    %c0_13 = arith.constant 0 : index
    %19 = vector.load %arg6[%c0_12, %c0_13] : memref<16x32xf32, #tpu.memory_space<vmem>>, vector<16x32xf32>
    tpu.vector_store %arg6[%c0_12, %c0_13], %18 {strides = array<i32>} : memref<16x32xf32, #tpu.memory_space<vmem>>, vector<16x32xf32>,
    return
  }
  func.func @transform_0(%arg0: i32) -> (i32, i32) {
    %c0_i32 = arith.constant 0 : i32
    %c0_i32_0 = arith.constant 0 : i32
    return %arg0, %c0_i32 : i32, i32
  }
  func.func @transform_1(%arg0: i32) -> (i32, i32) {
    %c0_i32 = arith.constant 0 : i32
    %c0_i32_0 = arith.constant 0 : i32
    %c0_i32_1 = arith.constant 0 : i32
    return %c0_i32, %c0_i32_0 : i32, i32
  }
  func.func @transform_2(%arg0: i32) -> (i32, i32) {
    %c0_i32 = arith.constant 0 : i32
    %c0_i32_0 = arith.constant 0 : i32
    %c0_i32_1 = arith.constant 0 : i32
    return %c0_i32, %c0_i32_0 : i32, i32
  }
  func.func @transform_3(%arg0: i32) -> (i32, i32) {
    %c0_i32 = arith.constant 0 : i32
    %c0_i32_0 = arith.constant 0 : i32
    %c0_i32_1 = arith.constant 0 : i32
    return %c0_i32, %c0_i32_0 : i32, i32
  }
  func.func @transform_4(%arg0: i32) -> (i32, i32) {
    %c0_i32 = arith.constant 0 : i32
    %c0_i32_0 = arith.constant 0 : i32
    %c0_i32_1 = arith.constant 0 : i32
    return %c0_i32, %c0_i32_0 : i32, i32
  }
  func.func @transform_5(%arg0: i32) -> (i32, i32) {
    %c0_i32 = arith.constant 0 : i32
    %c0_i32_0 = arith.constant 0 : i32
    return %arg0, %c0_i32 : i32, i32
  }
}

module attributes {stable_mosaic.version = 11 : i64} {
  func.func @_linear_kernel(%arg0: i32, %arg1: memref<16x32xf32, #tpu.memory_space<vmem>>, %arg2: memref<32x2xf32, #tpu.memory_space<vmem>>, %arg3: memref<1x2xf32, #tpu.memory_space<vmem>>, %arg4: memref<16x2xf32, #tpu.memory_space<vmem>>) attributes {dimension_semantics = [#tpu.dimension_semantics<parallel>], iteration_bounds = array<i64: 1>, scalar_prefetch = 0 : i64, scratch_operands = 0 : i64, tpu.core_type = #tpu.core_type<tc>, window_params = [{transform_indices = @transform_0, window_bounds = array<i64: 16, 32>}, {pipeline_mode = #tpu.pipeline_mode<synchronous>, transform_indices = @transform_1, window_bounds = array<i64: 32, 2>}, {pipeline_mode = #tpu.pipeline_mode<synchronous>, transform_indices = @transform_2, window_bounds = array<i64: 1, 2>}, {transform_indices = @transform_3, window_bounds = array<i64: 16, 2>}]} {
    %c0 = arith.constant 0 : index
    %c0_0 = arith.constant 0 : index
    %0 = vector.load %arg1[%c0, %c0_0] : memref<16x32xf32, #tpu.memory_space<vmem>>, vector<16x32xf32>
    %1 = arith.truncf %0 : vector<16x32xf32> to vector<16x32xbf16>
    %c0_1 = arith.constant 0 : index
    %c0_2 = arith.constant 0 : index
    %2 = vector.load %arg2[%c0_1, %c0_2] : memref<32x2xf32, #tpu.memory_space<vmem>>, vector<32x2xf32>
    %3 = arith.truncf %2 : vector<32x2xf32> to vector<32x2xbf16>
    %cst = arith.constant dense<0.000000e+00> : vector<16x2xf32>
    %4 = tpu.matmul %1, %3, %cst {dimension_numbers = #tpu.dot_dimension_numbers<[1], [0], [0], [1], [0, 0, 1, 1], [], []>} : vector<16x32xbf16>, vector<32x2xbf16>, vector<16x2xf32> -> vector<16x2xf32>
    %c0_3 = arith.constant 0 : index
    %c0_4 = arith.constant 0 : index
    %5 = vector.load %arg3[%c0_3, %c0_4] : memref<1x2xf32, #tpu.memory_space<vmem>>, vector<1x2xf32>
    %6 = vector.broadcast %5 : vector<1x2xf32> to vector<16x2xf32>
    %7 = arith.addf %4, %6 : vector<16x2xf32>
    %c0_5 = arith.constant 0 : index
    %c0_6 = arith.constant 0 : index
    %8 = vector.load %arg4[%c0_5, %c0_6] : memref<16x2xf32, #tpu.memory_space<vmem>>, vector<16x2xf32>
    tpu.vector_store %arg4[%c0_5, %c0_6], %7 {strides = array<i32>} : memref<16x2xf32, #tpu.memory_space<vmem>>, vector<16x2xf32>,
    return
  }
  func.func @transform_0(%arg0: i32) -> (i32, i32) {
    %c0_i32 = arith.constant 0 : i32
    %c0_i32_0 = arith.constant 0 : i32
    return %arg0, %c0_i32 : i32, i32
  }
  func.func @transform_1(%arg0: i32) -> (i32, i32) {
    %c0_i32 = arith.constant 0 : i32
    %c0_i32_0 = arith.constant 0 : i32
    %c0_i32_1 = arith.constant 0 : i32
    return %c0_i32, %c0_i32_0 : i32, i32
  }
  func.func @transform_2(%arg0: i32) -> (i32, i32) {
    %c0_i32 = arith.constant 0 : i32
    %c0_i32_0 = arith.constant 0 : i32
    %c0_i32_1 = arith.constant 0 : i32
    return %c0_i32, %c0_i32_0 : i32, i32
  }
  func.func @transform_3(%arg0: i32) -> (i32, i32) {
    %c0_i32 = arith.constant 0 : i32
    %c0_i32_0 = arith.constant 0 : i32
    return %arg0, %c0_i32 : i32, i32
  }
}

module attributes {stable_mosaic.version = 11 : i64} {
  func.func @_project_kernel(%arg0: i32, %arg1: memref<16x64xf32, #tpu.memory_space<vmem>>, %arg2: memref<64x64xf32, #tpu.memory_space<vmem>>, %arg3: memref<64x2xf32, #tpu.memory_space<vmem>>, %arg4: memref<16x64xf32, #tpu.memory_space<vmem>>, %arg5: memref<16x2xf32, #tpu.memory_space<vmem>>) attributes {dimension_semantics = [#tpu.dimension_semantics<parallel>], iteration_bounds = array<i64: 1>, scalar_prefetch = 0 : i64, scratch_operands = 0 : i64, tpu.core_type = #tpu.core_type<tc>, window_params = [{transform_indices = @transform_0, window_bounds = array<i64: 16, 64>}, {pipeline_mode = #tpu.pipeline_mode<synchronous>, transform_indices = @transform_1, window_bounds = array<i64: 64, 64>}, {pipeline_mode = #tpu.pipeline_mode<synchronous>, transform_indices = @transform_2, window_bounds = array<i64: 64, 2>}, {transform_indices = @transform_3, window_bounds = array<i64: 16, 64>}, {transform_indices = @transform_4, window_bounds = array<i64: 16, 2>}]} {
    %c0 = arith.constant 0 : index
    %c0_0 = arith.constant 0 : index
    %0 = vector.load %arg1[%c0, %c0_0] : memref<16x64xf32, #tpu.memory_space<vmem>>, vector<16x64xf32>
    %1 = arith.truncf %0 : vector<16x64xf32> to vector<16x64xbf16>
    %c0_1 = arith.constant 0 : index
    %c0_2 = arith.constant 0 : index
    %2 = vector.load %arg2[%c0_1, %c0_2] : memref<64x64xf32, #tpu.memory_space<vmem>>, vector<64x64xf32>
    %3 = arith.truncf %2 : vector<64x64xf32> to vector<64x64xbf16>
    %cst = arith.constant dense<0.000000e+00> : vector<16x64xf32>
    %4 = tpu.matmul %1, %3, %cst {dimension_numbers = #tpu.dot_dimension_numbers<[1], [0], [0], [1], [0, 0, 1, 1], [], []>} : vector<16x64xbf16>, vector<64x64xbf16>, vector<16x64xf32> -> vector<16x64xf32>
    %c0_3 = arith.constant 0 : index
    %c0_4 = arith.constant 0 : index
    %5 = vector.load %arg4[%c0_3, %c0_4] : memref<16x64xf32, #tpu.memory_space<vmem>>, vector<16x64xf32>
    tpu.vector_store %arg4[%c0_3, %c0_4], %4 {strides = array<i32>} : memref<16x64xf32, #tpu.memory_space<vmem>>, vector<16x64xf32>,
    %6 = arith.truncf %4 : vector<16x64xf32> to vector<16x64xbf16>
    %c0_5 = arith.constant 0 : index
    %c0_6 = arith.constant 0 : index
    %7 = vector.load %arg3[%c0_5, %c0_6] : memref<64x2xf32, #tpu.memory_space<vmem>>, vector<64x2xf32>
    %8 = arith.truncf %7 : vector<64x2xf32> to vector<64x2xbf16>
    %cst_7 = arith.constant dense<0.000000e+00> : vector<16x2xf32>
    %9 = tpu.matmul %6, %8, %cst_7 {dimension_numbers = #tpu.dot_dimension_numbers<[1], [0], [0], [1], [0, 0, 1, 1], [], []>} : vector<16x64xbf16>, vector<64x2xbf16>, vector<16x2xf32> -> vector<16x2xf32>
    %c0_8 = arith.constant 0 : index
    %c0_9 = arith.constant 0 : index
    %10 = vector.load %arg5[%c0_8, %c0_9] : memref<16x2xf32, #tpu.memory_space<vmem>>, vector<16x2xf32>
    tpu.vector_store %arg5[%c0_8, %c0_9], %9 {strides = array<i32>} : memref<16x2xf32, #tpu.memory_space<vmem>>, vector<16x2xf32>,
    return
  }
  func.func @transform_0(%arg0: i32) -> (i32, i32) {
    %c0_i32 = arith.constant 0 : i32
    %c0_i32_0 = arith.constant 0 : i32
    return %arg0, %c0_i32 : i32, i32
  }
  func.func @transform_1(%arg0: i32) -> (i32, i32) {
    %c0_i32 = arith.constant 0 : i32
    %c0_i32_0 = arith.constant 0 : i32
    %c0_i32_1 = arith.constant 0 : i32
    return %c0_i32, %c0_i32_0 : i32, i32
  }
  func.func @transform_2(%arg0: i32) -> (i32, i32) {
    %c0_i32 = arith.constant 0 : i32
    %c0_i32_0 = arith.constant 0 : i32
    %c0_i32_1 = arith.constant 0 : i32
    return %c0_i32, %c0_i32_0 : i32, i32
  }
  func.func @transform_3(%arg0: i32) -> (i32, i32) {
    %c0_i32 = arith.constant 0 : i32
    %c0_i32_0 = arith.constant 0 : i32
    return %arg0, %c0_i32 : i32, i32
  }
  func.func @transform_4(%arg0: i32) -> (i32, i32) {
    %c0_i32 = arith.constant 0 : i32
    %c0_i32_0 = arith.constant 0 : i32
    return %arg0, %c0_i32 : i32, i32
  }
}

module attributes {stable_mosaic.version = 11 : i64} {
  func.func @_gat_agg_kernel(%arg0: i32, %arg1: memref<40x1xi32, #tpu.memory_space<vmem>>, %arg2: memref<40x1xi32, #tpu.memory_space<vmem>>, %arg3: memref<20x64xbf16, #tpu.memory_space<vmem>>, %arg4: memref<20x2xbf16, #tpu.memory_space<vmem>>, %arg5: memref<12x2xbf16, #tpu.memory_space<vmem>>, %arg6: memref<40x2xf32, #tpu.memory_space<vmem>>, %arg7: memref<1x2xf32, #tpu.memory_space<vmem>>, %arg8: memref<2x64xf32, #tpu.memory_space<vmem>>, %arg9: memref<1x64xf32, #tpu.memory_space<vmem>>, %arg10: memref<12x64xf32, #tpu.memory_space<vmem>>, %arg11: memref<12x64xf32, #tpu.memory_space<vmem>>, %arg12: memref<12x2xf32, #tpu.memory_space<vmem>>) attributes {dimension_semantics = [#tpu.dimension_semantics<arbitrary>], iteration_bounds = array<i64: 1>, scalar_prefetch = 0 : i64, scratch_operands = 2 : i64, tpu.core_type = #tpu.core_type<tc>, window_params = [{transform_indices = @transform_0, window_bounds = array<i64: 40, 1>}, {transform_indices = @transform_1, window_bounds = array<i64: 40, 1>}, {pipeline_mode = #tpu.pipeline_mode<synchronous>, transform_indices = @transform_2, window_bounds = array<i64: 20, 64>}, {pipeline_mode = #tpu.pipeline_mode<synchronous>, transform_indices = @transform_3, window_bounds = array<i64: 20, 2>}, {pipeline_mode = #tpu.pipeline_mode<synchronous>, transform_indices = @transform_4, window_bounds = array<i64: 12, 2>}, {transform_indices = @transform_5, window_bounds = array<i64: 40, 2>}, {pipeline_mode = #tpu.pipeline_mode<synchronous>, transform_indices = @transform_6, window_bounds = array<i64: 1, 2>}, {pipeline_mode = #tpu.pipeline_mode<synchronous>, transform_indices = @transform_7, window_bounds = array<i64: 2, 64>}, {pipeline_mode = #tpu.pipeline_mode<synchronous>, transform_indices = @transform_8, window_bounds = array<i64: 1, 64>}, {pipeline_mode = #tpu.pipeline_mode<synchronous>, transform_indices = @transform_9, window_bounds = array<i64: 12, 64>}]} {
    %c0_i32 = arith.constant 0 : i32
    %0 = arith.cmpi eq, %arg0, %c0_i32 : i32
    %1 = arith.extui %0 : i1 to i32
    %c0_i32_0 = arith.constant 0 : i32
    %2 = arith.cmpi ne, %1, %c0_i32_0 : i32
    scf.if %2 {
      %cst_33 = arith.constant 0.000000e+00 : f32
      %51 = vector.broadcast %cst_33 : f32 to vector<12x64xf32>
      %c0_34 = arith.constant 0 : index
      %c0_35 = arith.constant 0 : index
      %52 = vector.load %arg11[%c0_34, %c0_35] : memref<12x64xf32, #tpu.memory_space<vmem>>, vector<12x64xf32>
      tpu.vector_store %arg11[%c0_34, %c0_35], %51 {strides = array<i32>} : memref<12x64xf32, #tpu.memory_space<vmem>>, vector<12x64xf32>,
      %cst_36 = arith.constant 0.000000e+00 : f32
      %53 = vector.broadcast %cst_36 : f32 to vector<12x2xf32>
      %c0_37 = arith.constant 0 : index
      %c0_38 = arith.constant 0 : index
      %54 = vector.load %arg12[%c0_37, %c0_38] : memref<12x2xf32, #tpu.memory_space<vmem>>, vector<12x2xf32>
      tpu.vector_store %arg12[%c0_37, %c0_38], %53 {strides = array<i32>} : memref<12x2xf32, #tpu.memory_space<vmem>>, vector<12x2xf32>,
    } else {
    }
    %c0 = arith.constant 0 : index
    %c0_1 = arith.constant 0 : index
    %3 = vector.load %arg1[%c0, %c0_1] : memref<40x1xi32, #tpu.memory_space<vmem>>, vector<40x1xi32>
    %4 = tpu.iota {dimensions = array<i32: 1>} : vector<40x20xi32>
    %5 = vector.broadcast %3 : vector<40x1xi32> to vector<40x20xi32>
    %6 = arith.cmpi eq, %5, %4 : vector<40x20xi32>
    %7 = arith.extui %6 : vector<40x20xi1> to vector<40x20xi32>
    %8 = arith.sitofp %7 : vector<40x20xi32> to vector<40x20xf32>
    %9 = arith.truncf %8 : vector<40x20xf32> to vector<40x20xbf16>
    %c0_2 = arith.constant 0 : index
    %c0_3 = arith.constant 0 : index
    %10 = vector.load %arg2[%c0_2, %c0_3] : memref<40x1xi32, #tpu.memory_space<vmem>>, vector<40x1xi32>
    %11 = tpu.iota {dimensions = array<i32: 1>} : vector<40x12xi32>
    %12 = vector.broadcast %10 : vector<40x1xi32> to vector<40x12xi32>
    %13 = arith.cmpi eq, %12, %11 : vector<40x12xi32>
    %14 = arith.extui %13 : vector<40x12xi1> to vector<40x12xi32>
    %15 = arith.sitofp %14 : vector<40x12xi32> to vector<40x12xf32>
    %16 = arith.truncf %15 : vector<40x12xf32> to vector<40x12xbf16>
    %c0_4 = arith.constant 0 : index
    %c0_5 = arith.constant 0 : index
    %17 = vector.load %arg4[%c0_4, %c0_5] : memref<20x2xbf16, #tpu.memory_space<vmem>>, vector<20x2xbf16>
    %cst = arith.constant dense<0.000000e+00> : vector<40x2xf32>
    %18 = tpu.matmul %9, %17, %cst {dimension_numbers = #tpu.dot_dimension_numbers<[1], [0], [0], [1], [0, 0, 1, 1], [], []>} : vector<40x20xbf16>, vector<20x2xbf16>, vector<40x2xf32> -> vector<40x2xf32>
    %c0_6 = arith.constant 0 : index
    %c0_7 = arith.constant 0 : index
    %19 = vector.load %arg5[%c0_6, %c0_7] : memref<12x2xbf16, #tpu.memory_space<vmem>>, vector<12x2xbf16>
    %cst_8 = arith.constant dense<0.000000e+00> : vector<40x2xf32>
    %20 = tpu.matmul %16, %19, %cst_8 {dimension_numbers = #tpu.dot_dimension_numbers<[1], [0], [0], [1], [0, 0, 1, 1], [], []>} : vector<40x12xbf16>, vector<12x2xbf16>, vector<40x2xf32> -> vector<40x2xf32>
    %21 = arith.addf %18, %20 : vector<40x2xf32>
    %c0_9 = arith.constant 0 : index
    %c0_10 = arith.constant 0 : index
    %22 = vector.load %arg6[%c0_9, %c0_10] : memref<40x2xf32, #tpu.memory_space<vmem>>, vector<40x2xf32>
    %23 = arith.addf %21, %22 : vector<40x2xf32>
    %cst_11 = arith.constant 0.000000e+00 : f32
    %24 = vector.broadcast %cst_11 : f32 to vector<40x2xf32>
    %25 = arith.cmpf ogt, %23, %24 : vector<40x2xf32>
    %cst_12 = arith.constant 2.000000e-01 : f32
    %26 = vector.broadcast %cst_12 : f32 to vector<40x2xf32>
    %27 = arith.mulf %26, %23 : vector<40x2xf32>
    %28 = arith.select %25, %23, %27 : vector<40x2xi1>, vector<40x2xf32>
    %c0_13 = arith.constant 0 : index
    %c0_14 = arith.constant 0 : index
    %29 = vector.load %arg7[%c0_13, %c0_14] : memref<1x2xf32, #tpu.memory_space<vmem>>, vector<1x2xf32>
    %30 = vector.broadcast %29 : vector<1x2xf32> to vector<40x2xf32>
    %31 = arith.subf %28, %30 : vector<40x2xf32>
    %32 = math.exp %31 : vector<40x2xf32>
    %c0_15 = arith.constant 0 : index
    %c0_16 = arith.constant 0 : index
    %33 = vector.load %arg3[%c0_15, %c0_16] : memref<20x64xbf16, #tpu.memory_space<vmem>>, vector<20x64xbf16>
    %cst_17 = arith.constant dense<0.000000e+00> : vector<40x64xf32>
    %34 = tpu.matmul %9, %33, %cst_17 {dimension_numbers = #tpu.dot_dimension_numbers<[1], [0], [0], [1], [0, 0, 1, 1], [], []>} : vector<40x20xbf16>, vector<20x64xbf16>, vector<40x64xf32> -> vector<40x64xf32>
    %c0_18 = arith.constant 0 : index
    %c0_19 = arith.constant 0 : index
    %35 = vector.load %arg8[%c0_18, %c0_19] : memref<2x64xf32, #tpu.memory_space<vmem>>, vector<2x64xf32>
    %cst_20 = arith.constant dense<0.000000e+00> : vector<40x64xf32>
    %36 = tpu.matmul %32, %35, %cst_20 {dimension_numbers = #tpu.dot_dimension_numbers<[1], [0], [0], [1], [0, 0, 1, 1], [], []>} : vector<40x2xf32>, vector<2x64xf32>, vector<40x64xf32> -> vector<40x64xf32>
    %37 = arith.mulf %34, %36 : vector<40x64xf32>
    %38 = arith.truncf %37 : vector<40x64xf32> to vector<40x64xbf16>
    %c0_21 = arith.constant 0 : index
    %c0_22 = arith.constant 0 : index
    %39 = vector.load %arg11[%c0_21, %c0_22] : memref<12x64xf32, #tpu.memory_space<vmem>>, vector<12x64xf32>
    %cst_23 = arith.constant dense<0.000000e+00> : vector<12x64xf32>
    %40 = tpu.matmul %16, %38, %cst_23 {dimension_numbers = #tpu.dot_dimension_numbers<[0], [0], [1], [1], [0, 1, 1, 1], [], []>} : vector<40x12xbf16>, vector<40x64xbf16>, vector<12x64xf32> -> vector<12x64xf32>
    %41 = arith.addf %39, %40 : vector<12x64xf32>
    %c0_24 = arith.constant 0 : index
    %c0_25 = arith.constant 0 : index
    %42 = vector.load %arg11[%c0_24, %c0_25] : memref<12x64xf32, #tpu.memory_space<vmem>>, vector<12x64xf32>
    tpu.vector_store %arg11[%c0_24, %c0_25], %41 {strides = array<i32>} : memref<12x64xf32, #tpu.memory_space<vmem>>, vector<12x64xf32>,
    %c0_26 = arith.constant 0 : index
    %c0_27 = arith.constant 0 : index
    %43 = vector.load %arg12[%c0_26, %c0_27] : memref<12x2xf32, #tpu.memory_space<vmem>>, vector<12x2xf32>
    %44 = arith.truncf %32 : vector<40x2xf32> to vector<40x2xbf16>
    %cst_28 = arith.constant dense<0.000000e+00> : vector<12x2xf32>
    %45 = tpu.matmul %16, %44, %cst_28 {dimension_numbers = #tpu.dot_dimension_numbers<[0], [0], [1], [1], [0, 1, 1, 1], [], []>} : vector<40x12xbf16>, vector<40x2xbf16>, vector<12x2xf32> -> vector<12x2xf32>
    %46 = arith.addf %43, %45 : vector<12x2xf32>
    %c0_29 = arith.constant 0 : index
    %c0_30 = arith.constant 0 : index
    %47 = vector.load %arg12[%c0_29, %c0_30] : memref<12x2xf32, #tpu.memory_space<vmem>>, vector<12x2xf32>
    tpu.vector_store %arg12[%c0_29, %c0_30], %46 {strides = array<i32>} : memref<12x2xf32, #tpu.memory_space<vmem>>, vector<12x2xf32>,
    %c0_i32_31 = arith.constant 0 : i32
    %48 = arith.cmpi eq, %arg0, %c0_i32_31 : i32
    %49 = arith.extui %48 : i1 to i32
    %c0_i32_32 = arith.constant 0 : i32
    %50 = arith.cmpi ne, %49, %c0_i32_32 : i32
    scf.if %50 {
      %c0_33 = arith.constant 0 : index
      %c0_34 = arith.constant 0 : index
      %51 = vector.load %arg12[%c0_33, %c0_34] : memref<12x2xf32, #tpu.memory_space<vmem>>, vector<12x2xf32>
      %c0_35 = arith.constant 0 : index
      %c0_36 = arith.constant 0 : index
      %52 = vector.load %arg8[%c0_35, %c0_36] : memref<2x64xf32, #tpu.memory_space<vmem>>, vector<2x64xf32>
      %cst_37 = arith.constant dense<0.000000e+00> : vector<12x64xf32>
      %53 = tpu.matmul %51, %52, %cst_37 {dimension_numbers = #tpu.dot_dimension_numbers<[1], [0], [0], [1], [0, 0, 1, 1], [], []>} : vector<12x2xf32>, vector<2x64xf32>, vector<12x64xf32> -> vector<12x64xf32>
      %c0_38 = arith.constant 0 : index
      %c0_39 = arith.constant 0 : index
      %54 = vector.load %arg11[%c0_38, %c0_39] : memref<12x64xf32, #tpu.memory_space<vmem>>, vector<12x64xf32>
      %cst_40 = arith.constant 1.000000e-16 : f32
      %55 = vector.broadcast %cst_40 : f32 to vector<12x64xf32>
      %56 = arith.addf %53, %55 : vector<12x64xf32>
      %57 = arith.divf %54, %56 : vector<12x64xf32>
      %c0_41 = arith.constant 0 : index
      %c0_42 = arith.constant 0 : index
      %58 = vector.load %arg9[%c0_41, %c0_42] : memref<1x64xf32, #tpu.memory_space<vmem>>, vector<1x64xf32>
      %59 = vector.broadcast %58 : vector<1x64xf32> to vector<12x64xf32>
      %60 = arith.addf %57, %59 : vector<12x64xf32>
      %c0_43 = arith.constant 0 : index
      %c0_44 = arith.constant 0 : index
      %61 = vector.load %arg10[%c0_43, %c0_44] : memref<12x64xf32, #tpu.memory_space<vmem>>, vector<12x64xf32>
      tpu.vector_store %arg10[%c0_43, %c0_44], %60 {strides = array<i32>} : memref<12x64xf32, #tpu.memory_space<vmem>>, vector<12x64xf32>,
    } else {
    }
    return
  }
  func.func @transform_0(%arg0: i32) -> (i32, i32) {
    %c0_i32 = arith.constant 0 : i32
    %c0_i32_0 = arith.constant 0 : i32
    return %arg0, %c0_i32 : i32, i32
  }
  func.func @transform_1(%arg0: i32) -> (i32, i32) {
    %c0_i32 = arith.constant 0 : i32
    %c0_i32_0 = arith.constant 0 : i32
    return %arg0, %c0_i32 : i32, i32
  }
  func.func @transform_2(%arg0: i32) -> (i32, i32) {
    %c0_i32 = arith.constant 0 : i32
    %c0_i32_0 = arith.constant 0 : i32
    %c0_i32_1 = arith.constant 0 : i32
    return %c0_i32, %c0_i32_0 : i32, i32
  }
  func.func @transform_3(%arg0: i32) -> (i32, i32) {
    %c0_i32 = arith.constant 0 : i32
    %c0_i32_0 = arith.constant 0 : i32
    %c0_i32_1 = arith.constant 0 : i32
    return %c0_i32, %c0_i32_0 : i32, i32
  }
  func.func @transform_4(%arg0: i32) -> (i32, i32) {
    %c0_i32 = arith.constant 0 : i32
    %c0_i32_0 = arith.constant 0 : i32
    %c0_i32_1 = arith.constant 0 : i32
    return %c0_i32, %c0_i32_0 : i32, i32
  }
  func.func @transform_5(%arg0: i32) -> (i32, i32) {
    %c0_i32 = arith.constant 0 : i32
    %c0_i32_0 = arith.constant 0 : i32
    return %arg0, %c0_i32 : i32, i32
  }
  func.func @transform_6(%arg0: i32) -> (i32, i32) {
    %c0_i32 = arith.constant 0 : i32
    %c0_i32_0 = arith.constant 0 : i32
    %c0_i32_1 = arith.constant 0 : i32
    return %c0_i32, %c0_i32_0 : i32, i32
  }
  func.func @transform_7(%arg0: i32) -> (i32, i32) {
    %c0_i32 = arith.constant 0 : i32
    %c0_i32_0 = arith.constant 0 : i32
    %c0_i32_1 = arith.constant 0 : i32
    return %c0_i32, %c0_i32_0 : i32, i32
  }
  func.func @transform_8(%arg0: i32) -> (i32, i32) {
    %c0_i32 = arith.constant 0 : i32
    %c0_i32_0 = arith.constant 0 : i32
    %c0_i32_1 = arith.constant 0 : i32
    return %c0_i32, %c0_i32_0 : i32, i32
  }
  func.func @transform_9(%arg0: i32) -> (i32, i32) {
    %c0_i32 = arith.constant 0 : i32
    %c0_i32_0 = arith.constant 0 : i32
    %c0_i32_1 = arith.constant 0 : i32
    return %c0_i32, %c0_i32_0 : i32, i32
  }
}

module attributes {stable_mosaic.version = 11 : i64} {
  func.func @_linear_kernel(%arg0: i32, %arg1: memref<24x32xf32, #tpu.memory_space<vmem>>, %arg2: memref<32x2xf32, #tpu.memory_space<vmem>>, %arg3: memref<1x2xf32, #tpu.memory_space<vmem>>, %arg4: memref<24x2xf32, #tpu.memory_space<vmem>>) attributes {dimension_semantics = [#tpu.dimension_semantics<parallel>], iteration_bounds = array<i64: 1>, scalar_prefetch = 0 : i64, scratch_operands = 0 : i64, tpu.core_type = #tpu.core_type<tc>, window_params = [{transform_indices = @transform_0, window_bounds = array<i64: 24, 32>}, {pipeline_mode = #tpu.pipeline_mode<synchronous>, transform_indices = @transform_1, window_bounds = array<i64: 32, 2>}, {pipeline_mode = #tpu.pipeline_mode<synchronous>, transform_indices = @transform_2, window_bounds = array<i64: 1, 2>}, {transform_indices = @transform_3, window_bounds = array<i64: 24, 2>}]} {
    %c0 = arith.constant 0 : index
    %c0_0 = arith.constant 0 : index
    %0 = vector.load %arg1[%c0, %c0_0] : memref<24x32xf32, #tpu.memory_space<vmem>>, vector<24x32xf32>
    %1 = arith.truncf %0 : vector<24x32xf32> to vector<24x32xbf16>
    %c0_1 = arith.constant 0 : index
    %c0_2 = arith.constant 0 : index
    %2 = vector.load %arg2[%c0_1, %c0_2] : memref<32x2xf32, #tpu.memory_space<vmem>>, vector<32x2xf32>
    %3 = arith.truncf %2 : vector<32x2xf32> to vector<32x2xbf16>
    %cst = arith.constant dense<0.000000e+00> : vector<24x2xf32>
    %4 = tpu.matmul %1, %3, %cst {dimension_numbers = #tpu.dot_dimension_numbers<[1], [0], [0], [1], [0, 0, 1, 1], [], []>} : vector<24x32xbf16>, vector<32x2xbf16>, vector<24x2xf32> -> vector<24x2xf32>
    %c0_3 = arith.constant 0 : index
    %c0_4 = arith.constant 0 : index
    %5 = vector.load %arg3[%c0_3, %c0_4] : memref<1x2xf32, #tpu.memory_space<vmem>>, vector<1x2xf32>
    %6 = vector.broadcast %5 : vector<1x2xf32> to vector<24x2xf32>
    %7 = arith.addf %4, %6 : vector<24x2xf32>
    %c0_5 = arith.constant 0 : index
    %c0_6 = arith.constant 0 : index
    %8 = vector.load %arg4[%c0_5, %c0_6] : memref<24x2xf32, #tpu.memory_space<vmem>>, vector<24x2xf32>
    tpu.vector_store %arg4[%c0_5, %c0_6], %7 {strides = array<i32>} : memref<24x2xf32, #tpu.memory_space<vmem>>, vector<24x2xf32>,
    return
  }
  func.func @transform_0(%arg0: i32) -> (i32, i32) {
    %c0_i32 = arith.constant 0 : i32
    %c0_i32_0 = arith.constant 0 : i32
    return %arg0, %c0_i32 : i32, i32
  }
  func.func @transform_1(%arg0: i32) -> (i32, i32) {
    %c0_i32 = arith.constant 0 : i32
    %c0_i32_0 = arith.constant 0 : i32
    %c0_i32_1 = arith.constant 0 : i32
    return %c0_i32, %c0_i32_0 : i32, i32
  }
  func.func @transform_2(%arg0: i32) -> (i32, i32) {
    %c0_i32 = arith.constant 0 : i32
    %c0_i32_0 = arith.constant 0 : i32
    %c0_i32_1 = arith.constant 0 : i32
    return %c0_i32, %c0_i32_0 : i32, i32
  }
  func.func @transform_3(%arg0: i32) -> (i32, i32) {
    %c0_i32 = arith.constant 0 : i32
    %c0_i32_0 = arith.constant 0 : i32
    return %arg0, %c0_i32 : i32, i32
  }
}

module attributes {stable_mosaic.version = 11 : i64} {
  func.func @_gat_agg_kernel(%arg0: i32, %arg1: memref<40x1xi32, #tpu.memory_space<vmem>>, %arg2: memref<40x1xi32, #tpu.memory_space<vmem>>, %arg3: memref<12x64xbf16, #tpu.memory_space<vmem>>, %arg4: memref<12x2xbf16, #tpu.memory_space<vmem>>, %arg5: memref<20x2xbf16, #tpu.memory_space<vmem>>, %arg6: memref<40x2xf32, #tpu.memory_space<vmem>>, %arg7: memref<1x2xf32, #tpu.memory_space<vmem>>, %arg8: memref<2x64xf32, #tpu.memory_space<vmem>>, %arg9: memref<1x64xf32, #tpu.memory_space<vmem>>, %arg10: memref<20x64xf32, #tpu.memory_space<vmem>>, %arg11: memref<20x64xf32, #tpu.memory_space<vmem>>, %arg12: memref<20x2xf32, #tpu.memory_space<vmem>>) attributes {dimension_semantics = [#tpu.dimension_semantics<arbitrary>], iteration_bounds = array<i64: 1>, scalar_prefetch = 0 : i64, scratch_operands = 2 : i64, tpu.core_type = #tpu.core_type<tc>, window_params = [{transform_indices = @transform_0, window_bounds = array<i64: 40, 1>}, {transform_indices = @transform_1, window_bounds = array<i64: 40, 1>}, {pipeline_mode = #tpu.pipeline_mode<synchronous>, transform_indices = @transform_2, window_bounds = array<i64: 12, 64>}, {pipeline_mode = #tpu.pipeline_mode<synchronous>, transform_indices = @transform_3, window_bounds = array<i64: 12, 2>}, {pipeline_mode = #tpu.pipeline_mode<synchronous>, transform_indices = @transform_4, window_bounds = array<i64: 20, 2>}, {transform_indices = @transform_5, window_bounds = array<i64: 40, 2>}, {pipeline_mode = #tpu.pipeline_mode<synchronous>, transform_indices = @transform_6, window_bounds = array<i64: 1, 2>}, {pipeline_mode = #tpu.pipeline_mode<synchronous>, transform_indices = @transform_7, window_bounds = array<i64: 2, 64>}, {pipeline_mode = #tpu.pipeline_mode<synchronous>, transform_indices = @transform_8, window_bounds = array<i64: 1, 64>}, {pipeline_mode = #tpu.pipeline_mode<synchronous>, transform_indices = @transform_9, window_bounds = array<i64: 20, 64>}]} {
    %c0_i32 = arith.constant 0 : i32
    %0 = arith.cmpi eq, %arg0, %c0_i32 : i32
    %1 = arith.extui %0 : i1 to i32
    %c0_i32_0 = arith.constant 0 : i32
    %2 = arith.cmpi ne, %1, %c0_i32_0 : i32
    scf.if %2 {
      %cst_33 = arith.constant 0.000000e+00 : f32
      %51 = vector.broadcast %cst_33 : f32 to vector<20x64xf32>
      %c0_34 = arith.constant 0 : index
      %c0_35 = arith.constant 0 : index
      %52 = vector.load %arg11[%c0_34, %c0_35] : memref<20x64xf32, #tpu.memory_space<vmem>>, vector<20x64xf32>
      tpu.vector_store %arg11[%c0_34, %c0_35], %51 {strides = array<i32>} : memref<20x64xf32, #tpu.memory_space<vmem>>, vector<20x64xf32>,
      %cst_36 = arith.constant 0.000000e+00 : f32
      %53 = vector.broadcast %cst_36 : f32 to vector<20x2xf32>
      %c0_37 = arith.constant 0 : index
      %c0_38 = arith.constant 0 : index
      %54 = vector.load %arg12[%c0_37, %c0_38] : memref<20x2xf32, #tpu.memory_space<vmem>>, vector<20x2xf32>
      tpu.vector_store %arg12[%c0_37, %c0_38], %53 {strides = array<i32>} : memref<20x2xf32, #tpu.memory_space<vmem>>, vector<20x2xf32>,
    } else {
    }
    %c0 = arith.constant 0 : index
    %c0_1 = arith.constant 0 : index
    %3 = vector.load %arg1[%c0, %c0_1] : memref<40x1xi32, #tpu.memory_space<vmem>>, vector<40x1xi32>
    %4 = tpu.iota {dimensions = array<i32: 1>} : vector<40x12xi32>
    %5 = vector.broadcast %3 : vector<40x1xi32> to vector<40x12xi32>
    %6 = arith.cmpi eq, %5, %4 : vector<40x12xi32>
    %7 = arith.extui %6 : vector<40x12xi1> to vector<40x12xi32>
    %8 = arith.sitofp %7 : vector<40x12xi32> to vector<40x12xf32>
    %9 = arith.truncf %8 : vector<40x12xf32> to vector<40x12xbf16>
    %c0_2 = arith.constant 0 : index
    %c0_3 = arith.constant 0 : index
    %10 = vector.load %arg2[%c0_2, %c0_3] : memref<40x1xi32, #tpu.memory_space<vmem>>, vector<40x1xi32>
    %11 = tpu.iota {dimensions = array<i32: 1>} : vector<40x20xi32>
    %12 = vector.broadcast %10 : vector<40x1xi32> to vector<40x20xi32>
    %13 = arith.cmpi eq, %12, %11 : vector<40x20xi32>
    %14 = arith.extui %13 : vector<40x20xi1> to vector<40x20xi32>
    %15 = arith.sitofp %14 : vector<40x20xi32> to vector<40x20xf32>
    %16 = arith.truncf %15 : vector<40x20xf32> to vector<40x20xbf16>
    %c0_4 = arith.constant 0 : index
    %c0_5 = arith.constant 0 : index
    %17 = vector.load %arg4[%c0_4, %c0_5] : memref<12x2xbf16, #tpu.memory_space<vmem>>, vector<12x2xbf16>
    %cst = arith.constant dense<0.000000e+00> : vector<40x2xf32>
    %18 = tpu.matmul %9, %17, %cst {dimension_numbers = #tpu.dot_dimension_numbers<[1], [0], [0], [1], [0, 0, 1, 1], [], []>} : vector<40x12xbf16>, vector<12x2xbf16>, vector<40x2xf32> -> vector<40x2xf32>
    %c0_6 = arith.constant 0 : index
    %c0_7 = arith.constant 0 : index
    %19 = vector.load %arg5[%c0_6, %c0_7] : memref<20x2xbf16, #tpu.memory_space<vmem>>, vector<20x2xbf16>
    %cst_8 = arith.constant dense<0.000000e+00> : vector<40x2xf32>
    %20 = tpu.matmul %16, %19, %cst_8 {dimension_numbers = #tpu.dot_dimension_numbers<[1], [0], [0], [1], [0, 0, 1, 1], [], []>} : vector<40x20xbf16>, vector<20x2xbf16>, vector<40x2xf32> -> vector<40x2xf32>
    %21 = arith.addf %18, %20 : vector<40x2xf32>
    %c0_9 = arith.constant 0 : index
    %c0_10 = arith.constant 0 : index
    %22 = vector.load %arg6[%c0_9, %c0_10] : memref<40x2xf32, #tpu.memory_space<vmem>>, vector<40x2xf32>
    %23 = arith.addf %21, %22 : vector<40x2xf32>
    %cst_11 = arith.constant 0.000000e+00 : f32
    %24 = vector.broadcast %cst_11 : f32 to vector<40x2xf32>
    %25 = arith.cmpf ogt, %23, %24 : vector<40x2xf32>
    %cst_12 = arith.constant 2.000000e-01 : f32
    %26 = vector.broadcast %cst_12 : f32 to vector<40x2xf32>
    %27 = arith.mulf %26, %23 : vector<40x2xf32>
    %28 = arith.select %25, %23, %27 : vector<40x2xi1>, vector<40x2xf32>
    %c0_13 = arith.constant 0 : index
    %c0_14 = arith.constant 0 : index
    %29 = vector.load %arg7[%c0_13, %c0_14] : memref<1x2xf32, #tpu.memory_space<vmem>>, vector<1x2xf32>
    %30 = vector.broadcast %29 : vector<1x2xf32> to vector<40x2xf32>
    %31 = arith.subf %28, %30 : vector<40x2xf32>
    %32 = math.exp %31 : vector<40x2xf32>
    %c0_15 = arith.constant 0 : index
    %c0_16 = arith.constant 0 : index
    %33 = vector.load %arg3[%c0_15, %c0_16] : memref<12x64xbf16, #tpu.memory_space<vmem>>, vector<12x64xbf16>
    %cst_17 = arith.constant dense<0.000000e+00> : vector<40x64xf32>
    %34 = tpu.matmul %9, %33, %cst_17 {dimension_numbers = #tpu.dot_dimension_numbers<[1], [0], [0], [1], [0, 0, 1, 1], [], []>} : vector<40x12xbf16>, vector<12x64xbf16>, vector<40x64xf32> -> vector<40x64xf32>
    %c0_18 = arith.constant 0 : index
    %c0_19 = arith.constant 0 : index
    %35 = vector.load %arg8[%c0_18, %c0_19] : memref<2x64xf32, #tpu.memory_space<vmem>>, vector<2x64xf32>
    %cst_20 = arith.constant dense<0.000000e+00> : vector<40x64xf32>
    %36 = tpu.matmul %32, %35, %cst_20 {dimension_numbers = #tpu.dot_dimension_numbers<[1], [0], [0], [1], [0, 0, 1, 1], [], []>} : vector<40x2xf32>, vector<2x64xf32>, vector<40x64xf32> -> vector<40x64xf32>
    %37 = arith.mulf %34, %36 : vector<40x64xf32>
    %38 = arith.truncf %37 : vector<40x64xf32> to vector<40x64xbf16>
    %c0_21 = arith.constant 0 : index
    %c0_22 = arith.constant 0 : index
    %39 = vector.load %arg11[%c0_21, %c0_22] : memref<20x64xf32, #tpu.memory_space<vmem>>, vector<20x64xf32>
    %cst_23 = arith.constant dense<0.000000e+00> : vector<20x64xf32>
    %40 = tpu.matmul %16, %38, %cst_23 {dimension_numbers = #tpu.dot_dimension_numbers<[0], [0], [1], [1], [0, 1, 1, 1], [], []>} : vector<40x20xbf16>, vector<40x64xbf16>, vector<20x64xf32> -> vector<20x64xf32>
    %41 = arith.addf %39, %40 : vector<20x64xf32>
    %c0_24 = arith.constant 0 : index
    %c0_25 = arith.constant 0 : index
    %42 = vector.load %arg11[%c0_24, %c0_25] : memref<20x64xf32, #tpu.memory_space<vmem>>, vector<20x64xf32>
    tpu.vector_store %arg11[%c0_24, %c0_25], %41 {strides = array<i32>} : memref<20x64xf32, #tpu.memory_space<vmem>>, vector<20x64xf32>,
    %c0_26 = arith.constant 0 : index
    %c0_27 = arith.constant 0 : index
    %43 = vector.load %arg12[%c0_26, %c0_27] : memref<20x2xf32, #tpu.memory_space<vmem>>, vector<20x2xf32>
    %44 = arith.truncf %32 : vector<40x2xf32> to vector<40x2xbf16>
    %cst_28 = arith.constant dense<0.000000e+00> : vector<20x2xf32>
    %45 = tpu.matmul %16, %44, %cst_28 {dimension_numbers = #tpu.dot_dimension_numbers<[0], [0], [1], [1], [0, 1, 1, 1], [], []>} : vector<40x20xbf16>, vector<40x2xbf16>, vector<20x2xf32> -> vector<20x2xf32>
    %46 = arith.addf %43, %45 : vector<20x2xf32>
    %c0_29 = arith.constant 0 : index
    %c0_30 = arith.constant 0 : index
    %47 = vector.load %arg12[%c0_29, %c0_30] : memref<20x2xf32, #tpu.memory_space<vmem>>, vector<20x2xf32>
    tpu.vector_store %arg12[%c0_29, %c0_30], %46 {strides = array<i32>} : memref<20x2xf32, #tpu.memory_space<vmem>>, vector<20x2xf32>,
    %c0_i32_31 = arith.constant 0 : i32
    %48 = arith.cmpi eq, %arg0, %c0_i32_31 : i32
    %49 = arith.extui %48 : i1 to i32
    %c0_i32_32 = arith.constant 0 : i32
    %50 = arith.cmpi ne, %49, %c0_i32_32 : i32
    scf.if %50 {
      %c0_33 = arith.constant 0 : index
      %c0_34 = arith.constant 0 : index
      %51 = vector.load %arg12[%c0_33, %c0_34] : memref<20x2xf32, #tpu.memory_space<vmem>>, vector<20x2xf32>
      %c0_35 = arith.constant 0 : index
      %c0_36 = arith.constant 0 : index
      %52 = vector.load %arg8[%c0_35, %c0_36] : memref<2x64xf32, #tpu.memory_space<vmem>>, vector<2x64xf32>
      %cst_37 = arith.constant dense<0.000000e+00> : vector<20x64xf32>
      %53 = tpu.matmul %51, %52, %cst_37 {dimension_numbers = #tpu.dot_dimension_numbers<[1], [0], [0], [1], [0, 0, 1, 1], [], []>} : vector<20x2xf32>, vector<2x64xf32>, vector<20x64xf32> -> vector<20x64xf32>
      %c0_38 = arith.constant 0 : index
      %c0_39 = arith.constant 0 : index
      %54 = vector.load %arg11[%c0_38, %c0_39] : memref<20x64xf32, #tpu.memory_space<vmem>>, vector<20x64xf32>
      %cst_40 = arith.constant 1.000000e-16 : f32
      %55 = vector.broadcast %cst_40 : f32 to vector<20x64xf32>
      %56 = arith.addf %53, %55 : vector<20x64xf32>
      %57 = arith.divf %54, %56 : vector<20x64xf32>
      %c0_41 = arith.constant 0 : index
      %c0_42 = arith.constant 0 : index
      %58 = vector.load %arg9[%c0_41, %c0_42] : memref<1x64xf32, #tpu.memory_space<vmem>>, vector<1x64xf32>
      %59 = vector.broadcast %58 : vector<1x64xf32> to vector<20x64xf32>
      %60 = arith.addf %57, %59 : vector<20x64xf32>
      %c0_43 = arith.constant 0 : index
      %c0_44 = arith.constant 0 : index
      %61 = vector.load %arg10[%c0_43, %c0_44] : memref<20x64xf32, #tpu.memory_space<vmem>>, vector<20x64xf32>
      tpu.vector_store %arg10[%c0_43, %c0_44], %60 {strides = array<i32>} : memref<20x64xf32, #tpu.memory_space<vmem>>, vector<20x64xf32>,
    } else {
    }
    return
  }
  func.func @transform_0(%arg0: i32) -> (i32, i32) {
    %c0_i32 = arith.constant 0 : i32
    %c0_i32_0 = arith.constant 0 : i32
    return %arg0, %c0_i32 : i32, i32
  }
  func.func @transform_1(%arg0: i32) -> (i32, i32) {
    %c0_i32 = arith.constant 0 : i32
    %c0_i32_0 = arith.constant 0 : i32
    return %arg0, %c0_i32 : i32, i32
  }
  func.func @transform_2(%arg0: i32) -> (i32, i32) {
    %c0_i32 = arith.constant 0 : i32
    %c0_i32_0 = arith.constant 0 : i32
    %c0_i32_1 = arith.constant 0 : i32
    return %c0_i32, %c0_i32_0 : i32, i32
  }
  func.func @transform_3(%arg0: i32) -> (i32, i32) {
    %c0_i32 = arith.constant 0 : i32
    %c0_i32_0 = arith.constant 0 : i32
    %c0_i32_1 = arith.constant 0 : i32
    return %c0_i32, %c0_i32_0 : i32, i32
  }
  func.func @transform_4(%arg0: i32) -> (i32, i32) {
    %c0_i32 = arith.constant 0 : i32
    %c0_i32_0 = arith.constant 0 : i32
    %c0_i32_1 = arith.constant 0 : i32
    return %c0_i32, %c0_i32_0 : i32, i32
  }
  func.func @transform_5(%arg0: i32) -> (i32, i32) {
    %c0_i32 = arith.constant 0 : i32
    %c0_i32_0 = arith.constant 0 : i32
    return %arg0, %c0_i32 : i32, i32
  }
  func.func @transform_6(%arg0: i32) -> (i32, i32) {
    %c0_i32 = arith.constant 0 : i32
    %c0_i32_0 = arith.constant 0 : i32
    %c0_i32_1 = arith.constant 0 : i32
    return %c0_i32, %c0_i32_0 : i32, i32
  }
  func.func @transform_7(%arg0: i32) -> (i32, i32) {
    %c0_i32 = arith.constant 0 : i32
    %c0_i32_0 = arith.constant 0 : i32
    %c0_i32_1 = arith.constant 0 : i32
    return %c0_i32, %c0_i32_0 : i32, i32
  }
  func.func @transform_8(%arg0: i32) -> (i32, i32) {
    %c0_i32 = arith.constant 0 : i32
    %c0_i32_0 = arith.constant 0 : i32
    %c0_i32_1 = arith.constant 0 : i32
    return %c0_i32, %c0_i32_0 : i32, i32
  }
  func.func @transform_9(%arg0: i32) -> (i32, i32) {
    %c0_i32 = arith.constant 0 : i32
    %c0_i32_0 = arith.constant 0 : i32
    %c0_i32_1 = arith.constant 0 : i32
    return %c0_i32, %c0_i32_0 : i32, i32
  }
}

module attributes {stable_mosaic.version = 11 : i64} {
  func.func @_mlp2_kernel(%arg0: i32, %arg1: memref<24x64xf32, #tpu.memory_space<vmem>>, %arg2: memref<64x64xf32, #tpu.memory_space<vmem>>, %arg3: memref<1x64xf32, #tpu.memory_space<vmem>>, %arg4: memref<64x1xf32, #tpu.memory_space<vmem>>, %arg5: memref<1x1xf32, #tpu.memory_space<vmem>>, %arg6: memref<24x1xf32, #tpu.memory_space<vmem>>) attributes {dimension_semantics = [#tpu.dimension_semantics<parallel>], iteration_bounds = array<i64: 1>, scalar_prefetch = 0 : i64, scratch_operands = 0 : i64, tpu.core_type = #tpu.core_type<tc>, window_params = [{transform_indices = @transform_0, window_bounds = array<i64: 24, 64>}, {pipeline_mode = #tpu.pipeline_mode<synchronous>, transform_indices = @transform_1, window_bounds = array<i64: 64, 64>}, {pipeline_mode = #tpu.pipeline_mode<synchronous>, transform_indices = @transform_2, window_bounds = array<i64: 1, 64>}, {pipeline_mode = #tpu.pipeline_mode<synchronous>, transform_indices = @transform_3, window_bounds = array<i64: 64, 1>}, {pipeline_mode = #tpu.pipeline_mode<synchronous>, transform_indices = @transform_4, window_bounds = array<i64: 1, 1>}, {transform_indices = @transform_5, window_bounds = array<i64: 24, 1>}]} {
    %c0 = arith.constant 0 : index
    %c0_0 = arith.constant 0 : index
    %0 = vector.load %arg1[%c0, %c0_0] : memref<24x64xf32, #tpu.memory_space<vmem>>, vector<24x64xf32>
    %1 = arith.truncf %0 : vector<24x64xf32> to vector<24x64xbf16>
    %c0_1 = arith.constant 0 : index
    %c0_2 = arith.constant 0 : index
    %2 = vector.load %arg2[%c0_1, %c0_2] : memref<64x64xf32, #tpu.memory_space<vmem>>, vector<64x64xf32>
    %3 = arith.truncf %2 : vector<64x64xf32> to vector<64x64xbf16>
    %cst = arith.constant dense<0.000000e+00> : vector<24x64xf32>
    %4 = tpu.matmul %1, %3, %cst {dimension_numbers = #tpu.dot_dimension_numbers<[1], [0], [0], [1], [0, 0, 1, 1], [], []>} : vector<24x64xbf16>, vector<64x64xbf16>, vector<24x64xf32> -> vector<24x64xf32>
    %c0_3 = arith.constant 0 : index
    %c0_4 = arith.constant 0 : index
    %5 = vector.load %arg3[%c0_3, %c0_4] : memref<1x64xf32, #tpu.memory_space<vmem>>, vector<1x64xf32>
    %6 = vector.broadcast %5 : vector<1x64xf32> to vector<24x64xf32>
    %7 = arith.addf %4, %6 : vector<24x64xf32>
    %cst_5 = arith.constant 0.000000e+00 : f32
    %8 = vector.broadcast %cst_5 : f32 to vector<24x64xf32>
    %9 = arith.maximumf %7, %8 : vector<24x64xf32>
    %10 = arith.truncf %9 : vector<24x64xf32> to vector<24x64xbf16>
    %c0_6 = arith.constant 0 : index
    %c0_7 = arith.constant 0 : index
    %11 = vector.load %arg4[%c0_6, %c0_7] : memref<64x1xf32, #tpu.memory_space<vmem>>, vector<64x1xf32>
    %12 = arith.truncf %11 : vector<64x1xf32> to vector<64x1xbf16>
    %cst_8 = arith.constant dense<0.000000e+00> : vector<24x1xf32>
    %13 = tpu.matmul %10, %12, %cst_8 {dimension_numbers = #tpu.dot_dimension_numbers<[1], [0], [0], [1], [0, 0, 1, 1], [], []>} : vector<24x64xbf16>, vector<64x1xbf16>, vector<24x1xf32> -> vector<24x1xf32>
    %c0_9 = arith.constant 0 : index
    %c0_10 = arith.constant 0 : index
    %14 = vector.load %arg5[%c0_9, %c0_10] : memref<1x1xf32, #tpu.memory_space<vmem>>, vector<1x1xf32>
    %15 = vector.broadcast %14 : vector<1x1xf32> to vector<24x1xf32>
    %16 = arith.addf %13, %15 : vector<24x1xf32>
    %c0_11 = arith.constant 0 : index
    %c0_12 = arith.constant 0 : index
    %17 = vector.load %arg6[%c0_11, %c0_12] : memref<24x1xf32, #tpu.memory_space<vmem>>, vector<24x1xf32>
    tpu.vector_store %arg6[%c0_11, %c0_12], %16 {strides = array<i32>} : memref<24x1xf32, #tpu.memory_space<vmem>>, vector<24x1xf32>,
    return
  }
  func.func @transform_0(%arg0: i32) -> (i32, i32) {
    %c0_i32 = arith.constant 0 : i32
    %c0_i32_0 = arith.constant 0 : i32
    return %arg0, %c0_i32 : i32, i32
  }
  func.func @transform_1(%arg0: i32) -> (i32, i32) {
    %c0_i32 = arith.constant 0 : i32
    %c0_i32_0 = arith.constant 0 : i32
    %c0_i32_1 = arith.constant 0 : i32
    return %c0_i32, %c0_i32_0 : i32, i32
  }
  func.func @transform_2(%arg0: i32) -> (i32, i32) {
    %c0_i32 = arith.constant 0 : i32
    %c0_i32_0 = arith.constant 0 : i32
    %c0_i32_1 = arith.constant 0 : i32
    return %c0_i32, %c0_i32_0 : i32, i32
  }
  func.func @transform_3(%arg0: i32) -> (i32, i32) {
    %c0_i32 = arith.constant 0 : i32
    %c0_i32_0 = arith.constant 0 : i32
    %c0_i32_1 = arith.constant 0 : i32
    return %c0_i32, %c0_i32_0 : i32, i32
  }
  func.func @transform_4(%arg0: i32) -> (i32, i32) {
    %c0_i32 = arith.constant 0 : i32
    %c0_i32_0 = arith.constant 0 : i32
    %c0_i32_1 = arith.constant 0 : i32
    return %c0_i32, %c0_i32_0 : i32, i32
  }
  func.func @transform_5(%arg0: i32) -> (i32, i32) {
    %c0_i32 = arith.constant 0 : i32
    %c0_i32_0 = arith.constant 0 : i32
    return %arg0, %c0_i32 : i32, i32
  }
}

</mosaic_0001>

<llo_original>
// kernel: gnn_policy_forward.13
$region0: #{gnn_policy_forward.13}
  #allocation0 [shape = 'u32[]', space=smem, size = 0x4, offset = 0x4, fixed_abs, tag = 'smem constant byte address 0x4 - core index']
  #allocation1 [shape = 'u32[144,128]{1,0:T(1,128)}', space=vmem, size = 0x12000, scoped, tag = 'internal scratch']
  %s0 = inlined_call_operand.vmem [shape: f32[24,19], index: 0, kind: input, shape index: {}]
  %s1 = inlined_call_operand.vmem [shape: f32[19,32], index: 1, kind: input, shape index: {}]
  %s2 = inlined_call_operand.vmem [shape: f32[1,32], index: 2, kind: input, shape index: {}]
  %s3 = inlined_call_operand.vmem [shape: f32[32,32], index: 3, kind: input, shape index: {}]
  %s4 = inlined_call_operand.vmem [shape: f32[1,32], index: 4, kind: input, shape index: {}]
  %s5 = inlined_call_operand.vmem [shape: f32[24,32], index: 5, kind: output, shape index: {}]
  %s6 = sld [smem:[#allocation0]]
  $region30: #{gnn_policy_forward.13} parent=0
    _
  %s8 = ssub.s32 1, %s6
  %s9 = scalar_select 0, %s8, %s6
  // Predicated region
  $region2: #{gnn_policy_forward.13} parent=0 // pred_check
    _
  $region3: #{gnn_policy_forward.13} parent=0 // pred_check_branch
    %11 = sbr.rel (0) target = $region5
  $region4: #{gnn_policy_forward.13} parent=0 // pred_region
    _
  $region5: #{gnn_policy_forward.13} parent=0 // pred_fallthru
    _
  // Predicated region
  $region6: #{gnn_policy_forward.13} parent=0 // pred_check
    _
  $region7: #{gnn_policy_forward.13} parent=0 // pred_check_branch
    %13 = sbr.rel (0) target = $region9
  $region8: #{gnn_policy_forward.13} parent=0 // pred_region
    _
  $region9: #{gnn_policy_forward.13} parent=0 // pred_fallthru
    _
  // Predicated region
  $region10: #{gnn_policy_forward.13} parent=0 // pred_check
    _
  $region11: #{gnn_policy_forward.13} parent=0 // pred_check_branch
    %15 = sbr.rel (0) target = $region13
  $region12: #{gnn_policy_forward.13} parent=0 // pred_region
    _
  $region13: #{gnn_policy_forward.13} parent=0 // pred_fallthru
    _
  // Predicated region
  $region14: #{gnn_policy_forward.13} parent=0 // pred_check
    _
  $region15: #{gnn_policy_forward.13} parent=0 // pred_check_branch
    %17 = sbr.rel (0) target = $region17
  $region16: #{gnn_policy_forward.13} parent=0 // pred_region
    _
  $region17: #{gnn_policy_forward.13} parent=0 // pred_fallthru
    _
  // Predicated region
  $region18: #{gnn_policy_forward.13} parent=0 // pred_check
    _
  $region19: #{gnn_policy_forward.13} parent=0 // pred_check_branch
    %19 = sbr.rel (0) target = $region21
  $region20: #{gnn_policy_forward.13} parent=0 // pred_region
    _
  $region21: #{gnn_policy_forward.13} parent=0 // pred_fallthru
    _
  %v21 = vld [vmem:[%s0] sm:$0xff]
  %v22 = vld [vmem:[%s0 + $0x8] sm:$0xff]
  %v23 = vld [vmem:[%s0 + $0x10] sm:$0xff]
  %v24 = vpack.c.bf16 %v22, %v21
  %v25 = vpack.c.bf16 %v23, %v23
  %v26 = vld [vmem:[%s1] sm:$0xff]
  %v27 = vld [vmem:[%s1 + $0x8] sm:$0xff]
  %v28 = vld [vmem:[%s1 + $0x10] sm:$0x7]
  %v29 = vpack.c.bf16 %v27, %v26
  %v30 = vpack.c.bf16 %v28, %v28
  %v31 = vld [vmem:[%s2] sm:$0x1]
  %v33 = vlaneseq
  %v34 = vshrl.u32 %v33, 7
  %v35 = vsub.s32 0, %v34
  %v36 = vrot.slane %v31, %v35
  %vm38 = vcmask 154624
  %v40 = vsel %vm38, %v24, 0
  %v43 = vsel %vm38, %v25, 0
  %vm45 = vcmask 1040384
  %vm46 = vcmask 1041408
  %v47 = vsel %vm45, 4294967295, 65535
  %v48 = vsel %vm46, %v47, 0
  %v50 = vand.u32 %v30, %v48
  %52 = vmatprep.subr.bf16.mxu0 0
  %53 = vmatpush1.bf16.msra.mxu0 %v29
  %54 = vmatprep.subr.bf16.mxu0 0
  %55 = vmatpush1.bf16.msra.mxu0 %v50
  %56 = vmatprep.subr.bf16.mxu0 0
  %57 = vmatpush1.bf16.msra.mxu0 0
  %58 = vmatprep.subr.bf16.mxu0 0
  %59 = vmatpush1.bf16.msra.mxu0 0
  %60 = vmatprep.subr.bf16.mxu0 0
  %61 = vmatpush1.bf16.msra.mxu0 0
  %62 = vmatprep.subr.bf16.mxu0 0
  %63 = vmatpush1.bf16.msra.mxu0 0
  %64 = vmatprep.subr.bf16.mxu0 0
  %65 = vmatpush1.bf16.msra.mxu0 0
  %66 = vmatprep.subr.bf16.mxu0 0
  %67 = vmatpush1.bf16.msra.mxu0 0
  %68 = vmatprep.subr.bf16.mxu0 0
  %69 = vmatpush1.bf16.msra.mxu0 0
  %70 = vmatprep.subr.bf16.mxu0 0
  %71 = vmatpush1.bf16.msra.mxu0 0
  %72 = vmatprep.subr.bf16.mxu0 0
  %73 = vmatpush1.bf16.msra.mxu0 0
  %74 = vmatprep.subr.bf16.mxu0 0
  %75 = vmatpush1.bf16.msra.mxu0 0
  %76 = vmatprep.subr.bf16.mxu0 0
  %77 = vmatpush1.bf16.msra.mxu0 0
  %78 = vmatprep.subr.bf16.mxu0 0
  %79 = vmatpush1.bf16.msra.mxu0 0
  %80 = vmatprep.subr.bf16.mxu0 0
  %81 = vmatpush1.bf16.msra.mxu0 0
  %82 = vmatprep.subr.bf16.mxu0 0
  %83 = vmatpush1.bf16.msra.mxu0 0
  %84 = vmatprep.mubr.bf16.mxu0 0
  %85 = vmatmul.mubr.bf16.gmra.mrb[0].mxu0 %v40
  %v86 = vpop.f32.mrb[0].mxu0
  %v87 = vadd.f32 %v36, %v86
  %v88 = vpop.f32.mrb[0].mxu0
  %v89 = vpop.f32.mrb[0].mxu0
  %v90 = vadd.f32 %v36, %v89
  %v91 = vpop.f32.mrb[0].mxu0
  %92 = vmatprep.mubr.bf16.mxu0 0
  %93 = vmatmul.mubr.bf16.gmra.mrb[0].mxu0 %v43
  %v94 = vpop.f32.mrb[0].mxu0
  %v95 = vadd.f32 %v36, %v94
  %v96 = vpop.f32.mrb[0].mxu0
  %v97 = vpop.f32.mrb[0].mxu0
  %v98 = vpop.f32.mrb[0].mxu0
  %99 = vdwg.mxu0
  %v100 = vmax.f32 %v87, 0.0
  %v101 = vmax.f32 %v90, 0.0
  %v102 = vmax.f32 %v95, 0.0
  %v103 = vpack.c.bf16 %v101, %v100
  %v104 = vpack.c.bf16 %v102, %v102
  %v105 = vld [vmem:[%s3] sm:$0xff]
  %v106 = vld [vmem:[%s3 + $0x8] sm:$0xff]
  %v107 = vld [vmem:[%s3 + $0x10] sm:$0xff]
  %v108 = vld [vmem:[%s3 + $0x18] sm:$0xff]
  %v109 = vpack.c.bf16 %v106, %v105
  %v110 = vpack.c.bf16 %v108, %v107
  %v111 = vld [vmem:[%s4] sm:$0x1]
  %v113 = vlaneseq
  %v114 = vshrl.u32 %v113, 7
  %v115 = vsub.s32 0, %v114
  %v116 = vrot.slane %v111, %v115
  %vm118 = vcmask 261120
  %v120 = vsel %vm118, %v103, 0
  %v123 = vsel %vm118, %v104, 0
  %125 = vmatprep.subr.bf16.mxu0 0
  %126 = vmatpush1.bf16.msra.mxu0 %v109
  %127 = vmatprep.subr.bf16.mxu0 0
  %128 = vmatpush1.bf16.msra.mxu0 %v110
  %129 = vmatprep.subr.bf16.mxu0 0
  %130 = vmatpush1.bf16.msra.mxu0 0
  %131 = vmatprep.subr.bf16.mxu0 0
  %132 = vmatpush1.bf16.msra.mxu0 0
  %133 = vmatprep.subr.bf16.mxu0 0
  %134 = vmatpush1.bf16.msra.mxu0 0
  %135 = vmatprep.subr.bf16.mxu0 0
  %136 = vmatpush1.bf16.msra.mxu0 0
  %137 = vmatprep.subr.bf16.mxu0 0
  %138 = vmatpush1.bf16.msra.mxu0 0
  %139 = vmatprep.subr.bf16.mxu0 0
  %140 = vmatpush1.bf16.msra.mxu0 0
  %141 = vmatprep.subr.bf16.mxu0 0
  %142 = vmatpush1.bf16.msra.mxu0 0
  %143 = vmatprep.subr.bf16.mxu0 0
  %144 = vmatpush1.bf16.msra.mxu0 0
  %145 = vmatprep.subr.bf16.mxu0 0
  %146 = vmatpush1.bf16.msra.mxu0 0
  %147 = vmatprep.subr.bf16.mxu0 0
  %148 = vmatpush1.bf16.msra.mxu0 0
  %149 = vmatprep.subr.bf16.mxu0 0
  %150 = vmatpush1.bf16.msra.mxu0 0
  %151 = vmatprep.subr.bf16.mxu0 0
  %152 = vmatpush1.bf16.msra.mxu0 0
  %153 = vmatprep.subr.bf16.mxu0 0
  %154 = vmatpush1.bf16.msra.mxu0 0
  %155 = vmatprep.subr.bf16.mxu0 0
  %156 = vmatpush1.bf16.msra.mxu0 0
  %157 = vmatprep.mubr.bf16.mxu0 0
  %158 = vmatmul.mubr.bf16.gmra.mrb[0].mxu0 %v120
  %v159 = vpop.f32.mrb[0].mxu0
  %v160 = vadd.f32 %v116, %v159
  %v161 = vpop.f32.mrb[0].mxu0
  %v162 = vpop.f32.mrb[0].mxu0
  %v163 = vadd.f32 %v116, %v162
  %v164 = vpop.f32.mrb[0].mxu0
  %165 = vmatprep.mubr.bf16.mxu0 0
  %166 = vmatmul.mubr.bf16.gmra.mrb[0].mxu0 %v123
  %v167 = vpop.f32.mrb[0].mxu0
  %v168 = vadd.f32 %v116, %v167
  %v169 = vpop.f32.mrb[0].mxu0
  %v170 = vpop.f32.mrb[0].mxu0
  %v171 = vpop.f32.mrb[0].mxu0
  %172 = vdwg.mxu0
  %v173 = vmax.f32 %v160, 0.0
  %v174 = vmax.f32 %v163, 0.0
  %v175 = vmax.f32 %v168, 0.0
  %176 = vst.msk [vmem:[%s5] sm:$0xff] %vm118, %v173
  %177 = vst.msk [vmem:[%s5 + $0x8] sm:$0xff] %vm118, %v174
  %178 = vst.msk [vmem:[%s5 + $0x10] sm:$0xff] %vm118, %v175
  // Predicated region
  $region22: #{gnn_policy_forward.13} parent=0 // pred_check
    _
  $region23: #{gnn_policy_forward.13} parent=0 // pred_check_branch
    %180 = sbr.rel (0) target = $region25
  $region24: #{gnn_policy_forward.13} parent=0 // pred_region
    _
  $region25: #{gnn_policy_forward.13} parent=0 // pred_fallthru
    _
  // Predicated region
  $region26: #{gnn_policy_forward.13} parent=0 // pred_check
    _
  $region27: #{gnn_policy_forward.13} parent=0 // pred_check_branch
    %182 = sbr.rel (0) target = $region29
  $region28: #{gnn_policy_forward.13} parent=0 // pred_region
    _
  $region29: #{gnn_policy_forward.13} parent=0 // pred_fallthru
    _

// kernel: gnn_policy_forward.14
$region0: #{gnn_policy_forward.14}
  #allocation0 [shape = 'u32[]', space=smem, size = 0x4, offset = 0x4, fixed_abs, tag = 'smem constant byte address 0x4 - core index']
  #allocation1 [shape = 'u32[144,128]{1,0:T(1,128)}', space=vmem, size = 0x12000, scoped, tag = 'internal scratch']
  %s0 = inlined_call_operand.vmem [shape: f32[40,1], index: 0, kind: input, shape index: {}]
  %s1 = inlined_call_operand.vmem [shape: f32[1,32], index: 1, kind: input, shape index: {}]
  %s2 = inlined_call_operand.vmem [shape: f32[1,32], index: 2, kind: input, shape index: {}]
  %s3 = inlined_call_operand.vmem [shape: f32[40,32], index: 3, kind: output, shape index: {}]
  %s4 = sld [smem:[#allocation0]]
  $region22: #{gnn_policy_forward.14} parent=0
    _
  %s6 = ssub.s32 1, %s4
  %s7 = scalar_select 0, %s6, %s4
  // Predicated region
  $region2: #{gnn_policy_forward.14} parent=0 // pred_check
    _
  $region3: #{gnn_policy_forward.14} parent=0 // pred_check_branch
    %9 = sbr.rel (0) target = $region5
  $region4: #{gnn_policy_forward.14} parent=0 // pred_region
    _
  $region5: #{gnn_policy_forward.14} parent=0 // pred_fallthru
    _
  // Predicated region
  $region6: #{gnn_policy_forward.14} parent=0 // pred_check
    _
  $region7: #{gnn_policy_forward.14} parent=0 // pred_check_branch
    %11 = sbr.rel (0) target = $region9
  $region8: #{gnn_policy_forward.14} parent=0 // pred_region
    _
  $region9: #{gnn_policy_forward.14} parent=0 // pred_fallthru
    _
  // Predicated region
  $region10: #{gnn_policy_forward.14} parent=0 // pred_check
    _
  $region11: #{gnn_policy_forward.14} parent=0 // pred_check_branch
    %13 = sbr.rel (0) target = $region13
  $region12: #{gnn_policy_forward.14} parent=0 // pred_region
    _
  $region13: #{gnn_policy_forward.14} parent=0 // pred_fallthru
    _
  %v15 = vld [vmem:[%s0] sm:$0xff]
  %v16 = vld [vmem:[%s0 + $0x8] sm:$0xff]
  %v17 = vld [vmem:[%s0 + $0x10] sm:$0xff]
  %v18 = vld [vmem:[%s0 + $0x18] sm:$0xff]
  %v19 = vld [vmem:[%s0 + $0x20] sm:$0xff]
  %v20 = vpack.c.bf16 %v16, %v15
  %v21 = vpack.c.bf16 %v18, %v17
  %v22 = vpack.c.bf16 %v19, %v19
  %v23 = vld [vmem:[%s1] sm:$0x1]
  %v24 = vpack.c.bf16 %v23, %v23
  %v25 = vld [vmem:[%s2] sm:$0x1]
  %v27 = vlaneseq
  %v28 = vshrl.u32 %v27, 7
  %v29 = vsub.s32 0, %v28
  %v30 = vrot.slane %v25, %v29
  %vm32 = vcmask 7168
  %v34 = vsel %vm32, %v20, 0
  %v37 = vsel %vm32, %v21, 0
  %v40 = vsel %vm32, %v22, 0
  %vm42 = vcmask 1040384
  %v43 = vsel 0, 4294967295, 65535
  %v44 = vsel %vm42, %v43, 0
  %v46 = vand.u32 %v24, %v44
  %48 = vmatprep.subr.bf16.mxu0 0
  %49 = vmatpush1.bf16.msra.mxu0 %v46
  %50 = vmatprep.subr.bf16.mxu0 0
  %51 = vmatpush1.bf16.msra.mxu0 0
  %52 = vmatprep.subr.bf16.mxu0 0
  %53 = vmatpush1.bf16.msra.mxu0 0
  %54 = vmatprep.subr.bf16.mxu0 0
  %55 = vmatpush1.bf16.msra.mxu0 0
  %56 = vmatprep.subr.bf16.mxu0 0
  %57 = vmatpush1.bf16.msra.mxu0 0
  %58 = vmatprep.subr.bf16.mxu0 0
  %59 = vmatpush1.bf16.msra.mxu0 0
  %60 = vmatprep.subr.bf16.mxu0 0
  %61 = vmatpush1.bf16.msra.mxu0 0
  %62 = vmatprep.subr.bf16.mxu0 0
  %63 = vmatpush1.bf16.msra.mxu0 0
  %64 = vmatprep.subr.bf16.mxu0 0
  %65 = vmatpush1.bf16.msra.mxu0 0
  %66 = vmatprep.subr.bf16.mxu0 0
  %67 = vmatpush1.bf16.msra.mxu0 0
  %68 = vmatprep.subr.bf16.mxu0 0
  %69 = vmatpush1.bf16.msra.mxu0 0
  %70 = vmatprep.subr.bf16.mxu0 0
  %71 = vmatpush1.bf16.msra.mxu0 0
  %72 = vmatprep.subr.bf16.mxu0 0
  %73 = vmatpush1.bf16.msra.mxu0 0
  %74 = vmatprep.subr.bf16.mxu0 0
  %75 = vmatpush1.bf16.msra.mxu0 0
  %76 = vmatprep.subr.bf16.mxu0 0
  %77 = vmatpush1.bf16.msra.mxu0 0
  %78 = vmatprep.subr.bf16.mxu0 0
  %79 = vmatpush1.bf16.msra.mxu0 0
  %80 = vmatprep.mubr.bf16.mxu0 0
  %81 = vmatmul.mubr.bf16.gmra.mrb[0].mxu0 %v34
  %v82 = vpop.f32.mrb[0].mxu0
  %v83 = vadd.f32 %v30, %v82
  %v84 = vpop.f32.mrb[0].mxu0
  %v85 = vpop.f32.mrb[0].mxu0
  %v86 = vadd.f32 %v30, %v85
  %v87 = vpop.f32.mrb[0].mxu0
  %88 = vmatprep.mubr.bf16.mxu0 0
  %89 = vmatmul.mubr.bf16.gmra.mrb[0].mxu0 %v37
  %v90 = vpop.f32.mrb[0].mxu0
  %v91 = vadd.f32 %v30, %v90
  %v92 = vpop.f32.mrb[0].mxu0
  %v93 = vpop.f32.mrb[0].mxu0
  %v94 = vadd.f32 %v30, %v93
  %v95 = vpop.f32.mrb[0].mxu0
  %96 = vmatprep.mubr.bf16.mxu0 0
  %97 = vmatmul.mubr.bf16.gmra.mrb[0].mxu0 %v40
  %v98 = vpop.f32.mrb[0].mxu0
  %v99 = vadd.f32 %v30, %v98
  %v100 = vpop.f32.mrb[0].mxu0
  %v101 = vpop.f32.mrb[0].mxu0
  %v102 = vpop.f32.mrb[0].mxu0
  %103 = vdwg.mxu0
  %v104 = vmax.f32 %v83, 0.0
  %v105 = vmax.f32 %v86, 0.0
  %v106 = vmax.f32 %v91, 0.0
  %v107 = vmax.f32 %v94, 0.0
  %v108 = vmax.f32 %v99, 0.0
  %vm109 = vcmask 261120
  %110 = vst.msk [vmem:[%s3] sm:$0xff] %vm109, %v104
  %111 = vst.msk [vmem:[%s3 + $0x8] sm:$0xff] %vm109, %v105
  %112 = vst.msk [vmem:[%s3 + $0x10] sm:$0xff] %vm109, %v106
  %113 = vst.msk [vmem:[%s3 + $0x18] sm:$0xff] %vm109, %v107
  %114 = vst.msk [vmem:[%s3 + $0x20] sm:$0xff] %vm109, %v108
  // Predicated region
  $region14: #{gnn_policy_forward.14} parent=0 // pred_check
    _
  $region15: #{gnn_policy_forward.14} parent=0 // pred_check_branch
    %116 = sbr.rel (0) target = $region17
  $region16: #{gnn_policy_forward.14} parent=0 // pred_region
    _
  $region17: #{gnn_policy_forward.14} parent=0 // pred_fallthru
    _
  // Predicated region
  $region18: #{gnn_policy_forward.14} parent=0 // pred_check
    _
  $region19: #{gnn_policy_forward.14} parent=0 // pred_check_branch
    %118 = sbr.rel (0) target = $region21
  $region20: #{gnn_policy_forward.14} parent=0 // pred_region
    _
  $region21: #{gnn_policy_forward.14} parent=0 // pred_fallthru
    _

// kernel: gnn_policy_forward.15
$region0: #{gnn_policy_forward.15}
  #allocation0 [shape = 'u32[]', space=smem, size = 0x4, offset = 0x4, fixed_abs, tag = 'smem constant byte address 0x4 - core index']
  #allocation1 [shape = 'u32[144,128]{1,0:T(1,128)}', space=vmem, size = 0x12000, scoped, tag = 'internal scratch']
  %s0 = inlined_call_operand.vmem [shape: f32[24,32], index: 0, kind: input, shape index: {}]
  %s1 = inlined_call_operand.vmem [shape: f32[32,64], index: 1, kind: input, shape index: {}]
  %s2 = inlined_call_operand.vmem [shape: f32[64,2], index: 2, kind: input, shape index: {}]
  %s3 = inlined_call_operand.vmem [shape: f32[24,64], index: 3, kind: output, shape index: {0}]
  %s4 = inlined_call_operand.vmem [shape: f32[24,2], index: 4, kind: output, shape index: {1}]
  %5 = xla_tuple %s3, %s4
  %s6 = sld [smem:[#allocation0]]
  $region30: #{gnn_policy_forward.15} parent=0
    _
  %s8 = ssub.s32 1, %s6
  %s9 = scalar_select 0, %s8, %s6
  // Predicated region
  $region2: #{gnn_policy_forward.15} parent=0 // pred_check
    _
  $region3: #{gnn_policy_forward.15} parent=0 // pred_check_branch
    %11 = sbr.rel (0) target = $region5
  $region4: #{gnn_policy_forward.15} parent=0 // pred_region
    _
  $region5: #{gnn_policy_forward.15} parent=0 // pred_fallthru
    _
  // Predicated region
  $region6: #{gnn_policy_forward.15} parent=0 // pred_check
    _
  $region7: #{gnn_policy_forward.15} parent=0 // pred_check_branch
    %13 = sbr.rel (0) target = $region9
  $region8: #{gnn_policy_forward.15} parent=0 // pred_region
    _
  $region9: #{gnn_policy_forward.15} parent=0 // pred_fallthru
    _
  // Predicated region
  $region10: #{gnn_policy_forward.15} parent=0 // pred_check
    _
  $region11: #{gnn_policy_forward.15} parent=0 // pred_check_branch
    %15 = sbr.rel (0) target = $region13
  $region12: #{gnn_policy_forward.15} parent=0 // pred_region
    _
  $region13: #{gnn_policy_forward.15} parent=0 // pred_fallthru
    _
  %v17 = vld [vmem:[%s0] sm:$0xff]
  %v18 = vld [vmem:[%s0 + $0x8] sm:$0xff]
  %v19 = vld [vmem:[%s0 + $0x10] sm:$0xff]
  %v20 = vpack.c.bf16 %v18, %v17
  %v21 = vpack.c.bf16 %v19, %v19
  %v22 = vld [vmem:[%s1] sm:$0xff]
  %v23 = vld [vmem:[%s1 + $0x8] sm:$0xff]
  %v24 = vld [vmem:[%s1 + $0x10] sm:$0xff]
  %v25 = vld [vmem:[%s1 + $0x18] sm:$0xff]
  %v26 = vpack.c.bf16 %v23, %v22
  %v27 = vpack.c.bf16 %v25, %v24
  %vm28 = vcmask 261120
  %v30 = vsel %vm28, %v20, 0
  %v33 = vsel %vm28, %v21, 0
  %35 = vmatprep.subr.bf16.mxu0 0
  %36 = vmatpush1.bf16.msra.mxu0 %v26
  %37 = vmatprep.subr.bf16.mxu0 0
  %38 = vmatpush1.bf16.msra.mxu0 %v27
  %39 = vmatprep.subr.bf16.mxu0 0
  %40 = vmatpush1.bf16.msra.mxu0 0
  %41 = vmatprep.subr.bf16.mxu0 0
  %42 = vmatpush1.bf16.msra.mxu0 0
  %43 = vmatprep.subr.bf16.mxu0 0
  %44 = vmatpush1.bf16.msra.mxu0 0
  %45 = vmatprep.subr.bf16.mxu0 0
  %46 = vmatpush1.bf16.msra.mxu0 0
  %47 = vmatprep.subr.bf16.mxu0 0
  %48 = vmatpush1.bf16.msra.mxu0 0
  %49 = vmatprep.subr.bf16.mxu0 0
  %50 = vmatpush1.bf16.msra.mxu0 0
  %51 = vmatprep.subr.bf16.mxu0 0
  %52 = vmatpush1.bf16.msra.mxu0 0
  %53 = vmatprep.subr.bf16.mxu0 0
  %54 = vmatpush1.bf16.msra.mxu0 0
  %55 = vmatprep.subr.bf16.mxu0 0
  %56 = vmatpush1.bf16.msra.mxu0 0
  %57 = vmatprep.subr.bf16.mxu0 0
  %58 = vmatpush1.bf16.msra.mxu0 0
  %59 = vmatprep.subr.bf16.mxu0 0
  %60 = vmatpush1.bf16.msra.mxu0 0
  %61 = vmatprep.subr.bf16.mxu0 0
  %62 = vmatpush1.bf16.msra.mxu0 0
  %63 = vmatprep.subr.bf16.mxu0 0
  %64 = vmatpush1.bf16.msra.mxu0 0
  %65 = vmatprep.subr.bf16.mxu0 0
  %66 = vmatpush1.bf16.msra.mxu0 0
  %67 = vmatprep.mubr.bf16.mxu0 0
  %68 = vmatmul.mubr.bf16.gmra.mrb[0].mxu0 %v30
  %v69 = vpop.f32.mrb[0].mxu0
  %v70 = vadd.f32 0.0, %v69
  %v71 = vpop.f32.mrb[0].mxu0
  %v72 = vpop.f32.mrb[0].mxu0
  %v73 = vadd.f32 0.0, %v72
  %v74 = vpop.f32.mrb[0].mxu0
  %75 = vmatprep.mubr.bf16.mxu0 0
  %76 = vmatmul.mubr.bf16.gmra.mrb[0].mxu0 %v33
  %v77 = vpop.f32.mrb[0].mxu0
  %v78 = vadd.f32 0.0, %v77
  %v79 = vpop.f32.mrb[0].mxu0
  %v80 = vpop.f32.mrb[0].mxu0
  %v81 = vpop.f32.mrb[0].mxu0
  %82 = vdwg.mxu0
  %vm83 = vcmask 523264
  %84 = vst.msk [vmem:[%s3] sm:$0xff] %vm83, %v70
  %85 = vst.msk [vmem:[%s3 + $0x8] sm:$0xff] %vm83, %v73
  %86 = vst.msk [vmem:[%s3 + $0x10] sm:$0xff] %vm83, %v78
  %v87 = vpack.c.bf16 %v73, %v70
  %v88 = vpack.c.bf16 %v78, %v78
  %v89 = vld [vmem:[%s2] sm:$0xff]
  %v90 = vld [vmem:[%s2 + $0x8] sm:$0xff]
  %v91 = vld [vmem:[%s2 + $0x10] sm:$0xff]
  %v92 = vld [vmem:[%s2 + $0x18] sm:$0xff]
  %v93 = vld [vmem:[%s2 + $0x20] sm:$0xff]
  %v94 = vld [vmem:[%s2 + $0x28] sm:$0xff]
  %v95 = vld [vmem:[%s2 + $0x30] sm:$0xff]
  %v96 = vld [vmem:[%s2 + $0x38] sm:$0xff]
  %v97 = vpack.c.bf16 %v90, %v89
  %v98 = vpack.c.bf16 %v92, %v91
  %v99 = vpack.c.bf16 %v94, %v93
  %v100 = vpack.c.bf16 %v96, %v95
  %v102 = vsel %vm83, %v87, 0
  %v105 = vsel %vm83, %v88, 0
  %107 = vmatprep.subr.bf16.mxu0 0
  %108 = vmatpush1.bf16.msra.mxu0 %v97
  %109 = vmatprep.subr.bf16.mxu0 0
  %110 = vmatpush1.bf16.msra.mxu0 %v98
  %111 = vmatprep.subr.bf16.mxu0 0
  %112 = vmatpush1.bf16.msra.mxu0 %v99
  %113 = vmatprep.subr.bf16.mxu0 0
  %114 = vmatpush1.bf16.msra.mxu0 %v100
  %115 = vmatprep.subr.bf16.mxu0 0
  %116 = vmatpush1.bf16.msra.mxu0 0
  %117 = vmatprep.subr.bf16.mxu0 0
  %118 = vmatpush1.bf16.msra.mxu0 0
  %119 = vmatprep.subr.bf16.mxu0 0
  %120 = vmatpush1.bf16.msra.mxu0 0
  %121 = vmatprep.subr.bf16.mxu0 0
  %122 = vmatpush1.bf16.msra.mxu0 0
  %123 = vmatprep.subr.bf16.mxu0 0
  %124 = vmatpush1.bf16.msra.mxu0 0
  %125 = vmatprep.subr.bf16.mxu0 0
  %126 = vmatpush1.bf16.msra.mxu0 0
  %127 = vmatprep.subr.bf16.mxu0 0
  %128 = vmatpush1.bf16.msra.mxu0 0
  %129 = vmatprep.subr.bf16.mxu0 0
  %130 = vmatpush1.bf16.msra.mxu0 0
  %131 = vmatprep.subr.bf16.mxu0 0
  %132 = vmatpush1.bf16.msra.mxu0 0
  %133 = vmatprep.subr.bf16.mxu0 0
  %134 = vmatpush1.bf16.msra.mxu0 0
  %135 = vmatprep.subr.bf16.mxu0 0
  %136 = vmatpush1.bf16.msra.mxu0 0
  %137 = vmatprep.subr.bf16.mxu0 0
  %138 = vmatpush1.bf16.msra.mxu0 0
  %139 = vmatprep.mubr.bf16.mxu0 0
  %140 = vmatmul.mubr.bf16.gmra.mrb[0].mxu0 %v102
  %v141 = vpop.f32.mrb[0].mxu0
  %v142 = vadd.f32 0.0, %v141
  %v143 = vpop.f32.mrb[0].mxu0
  %v144 = vpop.f32.mrb[0].mxu0
  %v145 = vadd.f32 0.0, %v144
  %v146 = vpop.f32.mrb[0].mxu0
  %147 = vmatprep.mubr.bf16.mxu0 0
  %148 = vmatmul.mubr.bf16.gmra.mrb[0].mxu0 %v105
  %v149 = vpop.f32.mrb[0].mxu0
  %v150 = vadd.f32 0.0, %v149
  %v151 = vpop.f32.mrb[0].mxu0
  %v152 = vpop.f32.mrb[0].mxu0
  %v153 = vpop.f32.mrb[0].mxu0
  %154 = vdwg.mxu0
  %vm155 = vcmask 15360
  %156 = vst.msk [vmem:[%s4] sm:$0xff] %vm155, %v142
  %157 = vst.msk [vmem:[%s4 + $0x8] sm:$0xff] %vm155, %v145
  %158 = vst.msk [vmem:[%s4 + $0x10] sm:$0xff] %vm155, %v150
  // Predicated region
  $region14: #{gnn_policy_forward.15} parent=0 // pred_check
    _
  $region15: #{gnn_policy_forward.15} parent=0 // pred_check_branch
    %160 = sbr.rel (0) target = $region17
  $region16: #{gnn_policy_forward.15} parent=0 // pred_region
    _
  $region17: #{gnn_policy_forward.15} parent=0 // pred_fallthru
    _
  // Predicated region
  $region18: #{gnn_policy_forward.15} parent=0 // pred_check
    _
  $region19: #{gnn_policy_forward.15} parent=0 // pred_check_branch
    %162 = sbr.rel (0) target = $region21
  $region20: #{gnn_policy_forward.15} parent=0 // pred_region
    _
  $region21: #{gnn_policy_forward.15} parent=0 // pred_fallthru
    _
  // Predicated region
  $region22: #{gnn_policy_forward.15} parent=0 // pred_check
    _
  $region23: #{gnn_policy_forward.15} parent=0 // pred_check_branch
    %164 = sbr.rel (0) target = $region25
  $region24: #{gnn_policy_forward.15} parent=0 // pred_region
    _
  $region25: #{gnn_policy_forward.15} parent=0 // pred_fallthru
    _
  // Predicated region
  $region26: #{gnn_policy_forward.15} parent=0 // pred_check
    _
  $region27: #{gnn_policy_forward.15} parent=0 // pred_check_branch
    %166 = sbr.rel (0) target = $region29
  $region28: #{gnn_policy_forward.15} parent=0 // pred_region
    _
  $region29: #{gnn_policy_forward.15} parent=0 // pred_fallthru
    _

// kernel: gnn_policy_forward.17
$region0: #{gnn_policy_forward.17}
  #allocation0 [shape = 'u32[]', space=smem, size = 0x4, offset = 0x4, fixed_abs, tag = 'smem constant byte address 0x4 - core index']
  #allocation1 [shape = 'u32[144,128]{1,0:T(1,128)}', space=vmem, size = 0x12000, scoped, tag = 'internal scratch']
  %s0 = inlined_call_operand.vmem [shape: f32[40,32], index: 0, kind: input, shape index: {}]
  %s1 = inlined_call_operand.vmem [shape: f32[32,2], index: 1, kind: input, shape index: {}]
  %s2 = inlined_call_operand.vmem [shape: f32[1,2], index: 2, kind: input, shape index: {}]
  %s3 = inlined_call_operand.vmem [shape: f32[40,2], index: 3, kind: output, shape index: {}]
  %s4 = sld [smem:[#allocation0]]
  $region22: #{gnn_policy_forward.17} parent=0
    _
  %s6 = ssub.s32 1, %s4
  %s7 = scalar_select 0, %s6, %s4
  // Predicated region
  $region2: #{gnn_policy_forward.17} parent=0 // pred_check
    _
  $region3: #{gnn_policy_forward.17} parent=0 // pred_check_branch
    %9 = sbr.rel (0) target = $region5
  $region4: #{gnn_policy_forward.17} parent=0 // pred_region
    _
  $region5: #{gnn_policy_forward.17} parent=0 // pred_fallthru
    _
  // Predicated region
  $region6: #{gnn_policy_forward.17} parent=0 // pred_check
    _
  $region7: #{gnn_policy_forward.17} parent=0 // pred_check_branch
    %11 = sbr.rel (0) target = $region9
  $region8: #{gnn_policy_forward.17} parent=0 // pred_region
    _
  $region9: #{gnn_policy_forward.17} parent=0 // pred_fallthru
    _
  // Predicated region
  $region10: #{gnn_policy_forward.17} parent=0 // pred_check
    _
  $region11: #{gnn_policy_forward.17} parent=0 // pred_check_branch
    %13 = sbr.rel (0) target = $region13
  $region12: #{gnn_policy_forward.17} parent=0 // pred_region
    _
  $region13: #{gnn_policy_forward.17} parent=0 // pred_fallthru
    _
  %v15 = vld [vmem:[%s0] sm:$0xff]
  %v16 = vld [vmem:[%s0 + $0x8] sm:$0xff]
  %v17 = vld [vmem:[%s0 + $0x10] sm:$0xff]
  %v18 = vld [vmem:[%s0 + $0x18] sm:$0xff]
  %v19 = vld [vmem:[%s0 + $0x20] sm:$0xff]
  %v20 = vpack.c.bf16 %v16, %v15
  %v21 = vpack.c.bf16 %v18, %v17
  %v22 = vpack.c.bf16 %v19, %v19
  %v23 = vld [vmem:[%s1] sm:$0xff]
  %v24 = vld [vmem:[%s1 + $0x8] sm:$0xff]
  %v25 = vld [vmem:[%s1 + $0x10] sm:$0xff]
  %v26 = vld [vmem:[%s1 + $0x18] sm:$0xff]
  %v27 = vpack.c.bf16 %v24, %v23
  %v28 = vpack.c.bf16 %v26, %v25
  %v29 = vld [vmem:[%s2] sm:$0x1]
  %v31 = vlaneseq
  %v32 = vshrl.u32 %v31, 7
  %v33 = vsub.s32 0, %v32
  %v34 = vrot.slane %v29, %v33
  %vm36 = vcmask 261120
  %v38 = vsel %vm36, %v20, 0
  %v41 = vsel %vm36, %v21, 0
  %v44 = vsel %vm36, %v22, 0
  %46 = vmatprep.subr.bf16.mxu0 0
  %47 = vmatpush1.bf16.msra.mxu0 %v27
  %48 = vmatprep.subr.bf16.mxu0 0
  %49 = vmatpush1.bf16.msra.mxu0 %v28
  %50 = vmatprep.subr.bf16.mxu0 0
  %51 = vmatpush1.bf16.msra.mxu0 0
  %52 = vmatprep.subr.bf16.mxu0 0
  %53 = vmatpush1.bf16.msra.mxu0 0
  %54 = vmatprep.subr.bf16.mxu0 0
  %55 = vmatpush1.bf16.msra.mxu0 0
  %56 = vmatprep.subr.bf16.mxu0 0
  %57 = vmatpush1.bf16.msra.mxu0 0
  %58 = vmatprep.subr.bf16.mxu0 0
  %59 = vmatpush1.bf16.msra.mxu0 0
  %60 = vmatprep.subr.bf16.mxu0 0
  %61 = vmatpush1.bf16.msra.mxu0 0
  %62 = vmatprep.subr.bf16.mxu0 0
  %63 = vmatpush1.bf16.msra.mxu0 0
  %64 = vmatprep.subr.bf16.mxu0 0
  %65 = vmatpush1.bf16.msra.mxu0 0
  %66 = vmatprep.subr.bf16.mxu0 0
  %67 = vmatpush1.bf16.msra.mxu0 0
  %68 = vmatprep.subr.bf16.mxu0 0
  %69 = vmatpush1.bf16.msra.mxu0 0
  %70 = vmatprep.subr.bf16.mxu0 0
  %71 = vmatpush1.bf16.msra.mxu0 0
  %72 = vmatprep.subr.bf16.mxu0 0
  %73 = vmatpush1.bf16.msra.mxu0 0
  %74 = vmatprep.subr.bf16.mxu0 0
  %75 = vmatpush1.bf16.msra.mxu0 0
  %76 = vmatprep.subr.bf16.mxu0 0
  %77 = vmatpush1.bf16.msra.mxu0 0
  %78 = vmatprep.mubr.bf16.mxu0 0
  %79 = vmatmul.mubr.bf16.gmra.mrb[0].mxu0 %v38
  %v80 = vpop.f32.mrb[0].mxu0
  %v81 = vadd.f32 %v34, %v80
  %v82 = vpop.f32.mrb[0].mxu0
  %v83 = vpop.f32.mrb[0].mxu0
  %v84 = vadd.f32 %v34, %v83
  %v85 = vpop.f32.mrb[0].mxu0
  %86 = vmatprep.mubr.bf16.mxu0 0
  %87 = vmatmul.mubr.bf16.gmra.mrb[0].mxu0 %v41
  %v88 = vpop.f32.mrb[0].mxu0
  %v89 = vadd.f32 %v34, %v88
  %v90 = vpop.f32.mrb[0].mxu0
  %v91 = vpop.f32.mrb[0].mxu0
  %v92 = vadd.f32 %v34, %v91
  %v93 = vpop.f32.mrb[0].mxu0
  %94 = vmatprep.mubr.bf16.mxu0 0
  %95 = vmatmul.mubr.bf16.gmra.mrb[0].mxu0 %v44
  %v96 = vpop.f32.mrb[0].mxu0
  %v97 = vadd.f32 %v34, %v96
  %v98 = vpop.f32.mrb[0].mxu0
  %v99 = vpop.f32.mrb[0].mxu0
  %v100 = vpop.f32.mrb[0].mxu0
  %101 = vdwg.mxu0
  %vm102 = vcmask 15360
  %103 = vst.msk [vmem:[%s3] sm:$0xff] %vm102, %v81
  %104 = vst.msk [vmem:[%s3 + $0x8] sm:$0xff] %vm102, %v84
  %105 = vst.msk [vmem:[%s3 + $0x10] sm:$0xff] %vm102, %v89
  %106 = vst.msk [vmem:[%s3 + $0x18] sm:$0xff] %vm102, %v92
  %107 = vst.msk [vmem:[%s3 + $0x20] sm:$0xff] %vm102, %v97
  // Predicated region
  $region14: #{gnn_policy_forward.17} parent=0 // pred_check
    _
  $region15: #{gnn_policy_forward.17} parent=0 // pred_check_branch
    %109 = sbr.rel (0) target = $region17
  $region16: #{gnn_policy_forward.17} parent=0 // pred_region
    _
  $region17: #{gnn_policy_forward.17} parent=0 // pred_fallthru
    _
  // Predicated region
  $region18: #{gnn_policy_forward.17} parent=0 // pred_check
    _
  $region19: #{gnn_policy_forward.17} parent=0 // pred_check_branch
    %111 = sbr.rel (0) target = $region21
  $region20: #{gnn_policy_forward.17} parent=0 // pred_region
    _
  $region21: #{gnn_policy_forward.17} parent=0 // pred_fallthru
    _

// kernel: gnn_policy_forward.12
$region0: #{gnn_policy_forward.12}
  #allocation0 [shape = 'u32[]', space=smem, size = 0x4, offset = 0x4, fixed_abs, tag = 'smem constant byte address 0x4 - core index']
  #allocation1 [shape = 'u32[144,128]{1,0:T(1,128)}', space=vmem, size = 0x12000, scoped, tag = 'internal scratch']
  %s0 = inlined_call_operand.vmem [shape: f32[16,5], index: 0, kind: input, shape index: {}]
  %s1 = inlined_call_operand.vmem [shape: f32[5,32], index: 1, kind: input, shape index: {}]
  %s2 = inlined_call_operand.vmem [shape: f32[1,32], index: 2, kind: input, shape index: {}]
  %s3 = inlined_call_operand.vmem [shape: f32[32,32], index: 3, kind: input, shape index: {}]
  %s4 = inlined_call_operand.vmem [shape: f32[1,32], index: 4, kind: input, shape index: {}]
  %s5 = inlined_call_operand.vmem [shape: f32[16,32], index: 5, kind: output, shape index: {}]
  %s6 = sld [smem:[#allocation0]]
  $region30: #{gnn_policy_forward.12} parent=0
    _
  %s8 = ssub.s32 1, %s6
  %s9 = scalar_select 0, %s8, %s6
  // Predicated region
  $region2: #{gnn_policy_forward.12} parent=0 // pred_check
    _
  $region3: #{gnn_policy_forward.12} parent=0 // pred_check_branch
    %11 = sbr.rel (0) target = $region5
  $region4: #{gnn_policy_forward.12} parent=0 // pred_region
    _
  $region5: #{gnn_policy_forward.12} parent=0 // pred_fallthru
    _
  // Predicated region
  $region6: #{gnn_policy_forward.12} parent=0 // pred_check
    _
  $region7: #{gnn_policy_forward.12} parent=0 // pred_check_branch
    %13 = sbr.rel (0) target = $region9
  $region8: #{gnn_policy_forward.12} parent=0 // pred_region
    _
  $region9: #{gnn_policy_forward.12} parent=0 // pred_fallthru
    _
  // Predicated region
  $region10: #{gnn_policy_forward.12} parent=0 // pred_check
    _
  $region11: #{gnn_policy_forward.12} parent=0 // pred_check_branch
    %15 = sbr.rel (0) target = $region13
  $region12: #{gnn_policy_forward.12} parent=0 // pred_region
    _
  $region13: #{gnn_policy_forward.12} parent=0 // pred_fallthru
    _
  // Predicated region
  $region14: #{gnn_policy_forward.12} parent=0 // pred_check
    _
  $region15: #{gnn_policy_forward.12} parent=0 // pred_check_branch
    %17 = sbr.rel (0) target = $region17
  $region16: #{gnn_policy_forward.12} parent=0 // pred_region
    _
  $region17: #{gnn_policy_forward.12} parent=0 // pred_fallthru
    _
  // Predicated region
  $region18: #{gnn_policy_forward.12} parent=0 // pred_check
    _
  $region19: #{gnn_policy_forward.12} parent=0 // pred_check_branch
    %19 = sbr.rel (0) target = $region21
  $region20: #{gnn_policy_forward.12} parent=0 // pred_region
    _
  $region21: #{gnn_policy_forward.12} parent=0 // pred_fallthru
    _
  %v21 = vld [vmem:[%s0] sm:$0xff]
  %v22 = vld [vmem:[%s0 + $0x8] sm:$0xff]
  %v23 = vpack.c.bf16 %v22, %v21
  %v24 = vld [vmem:[%s1] sm:$0x1f]
  %v25 = vpack.c.bf16 %v24, %v24
  %v26 = vld [vmem:[%s2] sm:$0x1]
  %v28 = vlaneseq
  %v29 = vshrl.u32 %v28, 7
  %v30 = vsub.s32 0, %v29
  %v31 = vrot.slane %v26, %v30
  %vm33 = vcmask 39936
  %v35 = vsel %vm33, %v23, 0
  %vm37 = vcmask 1041408
  %vm38 = vcmask 1042432
  %v39 = vsel %vm37, 4294967295, 65535
  %v40 = vsel %vm38, %v39, 0
  %v42 = vand.u32 %v25, %v40
  %44 = vmatprep.subr.bf16.mxu0 0
  %45 = vmatpush1.bf16.msra.mxu0 %v42
  %46 = vmatprep.subr.bf16.mxu0 0
  %47 = vmatpush1.bf16.msra.mxu0 0
  %48 = vmatprep.subr.bf16.mxu0 0
  %49 = vmatpush1.bf16.msra.mxu0 0
  %50 = vmatprep.subr.bf16.mxu0 0
  %51 = vmatpush1.bf16.msra.mxu0 0
  %52 = vmatprep.subr.bf16.mxu0 0
  %53 = vmatpush1.bf16.msra.mxu0 0
  %54 = vmatprep.subr.bf16.mxu0 0
  %55 = vmatpush1.bf16.msra.mxu0 0
  %56 = vmatprep.subr.bf16.mxu0 0
  %57 = vmatpush1.bf16.msra.mxu0 0
  %58 = vmatprep.subr.bf16.mxu0 0
  %59 = vmatpush1.bf16.msra.mxu0 0
  %60 = vmatprep.subr.bf16.mxu0 0
  %61 = vmatpush1.bf16.msra.mxu0 0
  %62 = vmatprep.subr.bf16.mxu0 0
  %63 = vmatpush1.bf16.msra.mxu0 0
  %64 = vmatprep.subr.bf16.mxu0 0
  %65 = vmatpush1.bf16.msra.mxu0 0
  %66 = vmatprep.subr.bf16.mxu0 0
  %67 = vmatpush1.bf16.msra.mxu0 0
  %68 = vmatprep.subr.bf16.mxu0 0
  %69 = vmatpush1.bf16.msra.mxu0 0
  %70 = vmatprep.subr.bf16.mxu0 0
  %71 = vmatpush1.bf16.msra.mxu0 0
  %72 = vmatprep.subr.bf16.mxu0 0
  %73 = vmatpush1.bf16.msra.mxu0 0
  %74 = vmatprep.subr.bf16.mxu0 0
  %75 = vmatpush1.bf16.msra.mxu0 0
  %76 = vmatprep.mubr.bf16.mxu0 0
  %77 = vmatmul.mubr.bf16.gmra.mrb[0].mxu0 %v35
  %v78 = vpop.f32.mrb[0].mxu0
  %v79 = vadd.f32 %v31, %v78
  %v80 = vpop.f32.mrb[0].mxu0
  %v81 = vpop.f32.mrb[0].mxu0
  %v82 = vadd.f32 %v31, %v81
  %v83 = vpop.f32.mrb[0].mxu0
  %84 = vdwg.mxu0
  %v85 = vmax.f32 %v79, 0.0
  %v86 = vmax.f32 %v82, 0.0
  %v87 = vpack.c.bf16 %v86, %v85
  %v88 = vld [vmem:[%s3] sm:$0xff]
  %v89 = vld [vmem:[%s3 + $0x8] sm:$0xff]
  %v90 = vld [vmem:[%s3 + $0x10] sm:$0xff]
  %v91 = vld [vmem:[%s3 + $0x18] sm:$0xff]
  %v92 = vpack.c.bf16 %v89, %v88
  %v93 = vpack.c.bf16 %v91, %v90
  %v94 = vld [vmem:[%s4] sm:$0x1]
  %v96 = vlaneseq
  %v97 = vshrl.u32 %v96, 7
  %v98 = vsub.s32 0, %v97
  %v99 = vrot.slane %v94, %v98
  %vm101 = vcmask 261120
  %v103 = vsel %vm101, %v87, 0
  %105 = vmatprep.subr.bf16.mxu0 0
  %106 = vmatpush1.bf16.msra.mxu0 %v92
  %107 = vmatprep.subr.bf16.mxu0 0
  %108 = vmatpush1.bf16.msra.mxu0 %v93
  %109 = vmatprep.subr.bf16.mxu0 0
  %110 = vmatpush1.bf16.msra.mxu0 0
  %111 = vmatprep.subr.bf16.mxu0 0
  %112 = vmatpush1.bf16.msra.mxu0 0
  %113 = vmatprep.subr.bf16.mxu0 0
  %114 = vmatpush1.bf16.msra.mxu0 0
  %115 = vmatprep.subr.bf16.mxu0 0
  %116 = vmatpush1.bf16.msra.mxu0 0
  %117 = vmatprep.subr.bf16.mxu0 0
  %118 = vmatpush1.bf16.msra.mxu0 0
  %119 = vmatprep.subr.bf16.mxu0 0
  %120 = vmatpush1.bf16.msra.mxu0 0
  %121 = vmatprep.subr.bf16.mxu0 0
  %122 = vmatpush1.bf16.msra.mxu0 0
  %123 = vmatprep.subr.bf16.mxu0 0
  %124 = vmatpush1.bf16.msra.mxu0 0
  %125 = vmatprep.subr.bf16.mxu0 0
  %126 = vmatpush1.bf16.msra.mxu0 0
  %127 = vmatprep.subr.bf16.mxu0 0
  %128 = vmatpush1.bf16.msra.mxu0 0
  %129 = vmatprep.subr.bf16.mxu0 0
  %130 = vmatpush1.bf16.msra.mxu0 0
  %131 = vmatprep.subr.bf16.mxu0 0
  %132 = vmatpush1.bf16.msra.mxu0 0
  %133 = vmatprep.subr.bf16.mxu0 0
  %134 = vmatpush1.bf16.msra.mxu0 0
  %135 = vmatprep.subr.bf16.mxu0 0
  %136 = vmatpush1.bf16.msra.mxu0 0
  %137 = vmatprep.mubr.bf16.mxu0 0
  %138 = vmatmul.mubr.bf16.gmra.mrb[0].mxu0 %v103
  %v139 = vpop.f32.mrb[0].mxu0
  %v140 = vadd.f32 %v99, %v139
  %v141 = vpop.f32.mrb[0].mxu0
  %v142 = vpop.f32.mrb[0].mxu0
  %v143 = vadd.f32 %v99, %v142
  %v144 = vpop.f32.mrb[0].mxu0
  %145 = vdwg.mxu0
  %v146 = vmax.f32 %v140, 0.0
  %v147 = vmax.f32 %v143, 0.0
  %148 = vst.msk [vmem:[%s5] sm:$0xff] %vm101, %v146
  %149 = vst.msk [vmem:[%s5 + $0x8] sm:$0xff] %vm101, %v147
  // Predicated region
  $region22: #{gnn_policy_forward.12} parent=0 // pred_check
    _
  $region23: #{gnn_policy_forward.12} parent=0 // pred_check_branch
    %151 = sbr.rel (0) target = $region25
  $region24: #{gnn_policy_forward.12} parent=0 // pred_region
    _
  $region25: #{gnn_policy_forward.12} parent=0 // pred_fallthru
    _
  // Predicated region
  $region26: #{gnn_policy_forward.12} parent=0 // pred_check
    _
  $region27: #{gnn_policy_forward.12} parent=0 // pred_check_branch
    %153 = sbr.rel (0) target = $region29
  $region28: #{gnn_policy_forward.12} parent=0 // pred_region
    _
  $region29: #{gnn_policy_forward.12} parent=0 // pred_fallthru
    _

// kernel: gnn_policy_forward.16
$region0: #{gnn_policy_forward.16}
  #allocation0 [shape = 'u32[]', space=smem, size = 0x4, offset = 0x4, fixed_abs, tag = 'smem constant byte address 0x4 - core index']
  #allocation1 [shape = 'u32[144,128]{1,0:T(1,128)}', space=vmem, size = 0x12000, scoped, tag = 'internal scratch']
  %s0 = inlined_call_operand.vmem [shape: f32[16,32], index: 0, kind: input, shape index: {}]
  %s1 = inlined_call_operand.vmem [shape: f32[32,2], index: 1, kind: input, shape index: {}]
  %s2 = inlined_call_operand.vmem [shape: f32[1,2], index: 2, kind: input, shape index: {}]
  %s3 = inlined_call_operand.vmem [shape: f32[16,2], index: 3, kind: output, shape index: {}]
  %s4 = sld [smem:[#allocation0]]
  $region22: #{gnn_policy_forward.16} parent=0
    _
  %s6 = ssub.s32 1, %s4
  %s7 = scalar_select 0, %s6, %s4
  // Predicated region
  $region2: #{gnn_policy_forward.16} parent=0 // pred_check
    _
  $region3: #{gnn_policy_forward.16} parent=0 // pred_check_branch
    %9 = sbr.rel (0) target = $region5
  $region4: #{gnn_policy_forward.16} parent=0 // pred_region
    _
  $region5: #{gnn_policy_forward.16} parent=0 // pred_fallthru
    _
  // Predicated region
  $region6: #{gnn_policy_forward.16} parent=0 // pred_check
    _
  $region7: #{gnn_policy_forward.16} parent=0 // pred_check_branch
    %11 = sbr.rel (0) target = $region9
  $region8: #{gnn_policy_forward.16} parent=0 // pred_region
    _
  $region9: #{gnn_policy_forward.16} parent=0 // pred_fallthru
    _
  // Predicated region
  $region10: #{gnn_policy_forward.16} parent=0 // pred_check
    _
  $region11: #{gnn_policy_forward.16} parent=0 // pred_check_branch
    %13 = sbr.rel (0) target = $region13
  $region12: #{gnn_policy_forward.16} parent=0 // pred_region
    _
  $region13: #{gnn_policy_forward.16} parent=0 // pred_fallthru
    _
  %v15 = vld [vmem:[%s0] sm:$0xff]
  %v16 = vld [vmem:[%s0 + $0x8] sm:$0xff]
  %v17 = vpack.c.bf16 %v16, %v15
  %v18 = vld [vmem:[%s1] sm:$0xff]
  %v19 = vld [vmem:[%s1 + $0x8] sm:$0xff]
  %v20 = vld [vmem:[%s1 + $0x10] sm:$0xff]
  %v21 = vld [vmem:[%s1 + $0x18] sm:$0xff]
  %v22 = vpack.c.bf16 %v19, %v18
  %v23 = vpack.c.bf16 %v21, %v20
  %v24 = vld [vmem:[%s2] sm:$0x1]
  %v26 = vlaneseq
  %v27 = vshrl.u32 %v26, 7
  %v28 = vsub.s32 0, %v27
  %v29 = vrot.slane %v24, %v28
  %vm31 = vcmask 261120
  %v33 = vsel %vm31, %v17, 0
  %35 = vmatprep.subr.bf16.mxu0 0
  %36 = vmatpush1.bf16.msra.mxu0 %v22
  %37 = vmatprep.subr.bf16.mxu0 0
  %38 = vmatpush1.bf16.msra.mxu0 %v23
  %39 = vmatprep.subr.bf16.mxu0 0
  %40 = vmatpush1.bf16.msra.mxu0 0
  %41 = vmatprep.subr.bf16.mxu0 0
  %42 = vmatpush1.bf16.msra.mxu0 0
  %43 = vmatprep.subr.bf16.mxu0 0
  %44 = vmatpush1.bf16.msra.mxu0 0
  %45 = vmatprep.subr.bf16.mxu0 0
  %46 = vmatpush1.bf16.msra.mxu0 0
  %47 = vmatprep.subr.bf16.mxu0 0
  %48 = vmatpush1.bf16.msra.mxu0 0
  %49 = vmatprep.subr.bf16.mxu0 0
  %50 = vmatpush1.bf16.msra.mxu0 0
  %51 = vmatprep.subr.bf16.mxu0 0
  %52 = vmatpush1.bf16.msra.mxu0 0
  %53 = vmatprep.subr.bf16.mxu0 0
  %54 = vmatpush1.bf16.msra.mxu0 0
  %55 = vmatprep.subr.bf16.mxu0 0
  %56 = vmatpush1.bf16.msra.mxu0 0
  %57 = vmatprep.subr.bf16.mxu0 0
  %58 = vmatpush1.bf16.msra.mxu0 0
  %59 = vmatprep.subr.bf16.mxu0 0
  %60 = vmatpush1.bf16.msra.mxu0 0
  %61 = vmatprep.subr.bf16.mxu0 0
  %62 = vmatpush1.bf16.msra.mxu0 0
  %63 = vmatprep.subr.bf16.mxu0 0
  %64 = vmatpush1.bf16.msra.mxu0 0
  %65 = vmatprep.subr.bf16.mxu0 0
  %66 = vmatpush1.bf16.msra.mxu0 0
  %67 = vmatprep.mubr.bf16.mxu0 0
  %68 = vmatmul.mubr.bf16.gmra.mrb[0].mxu0 %v33
  %v69 = vpop.f32.mrb[0].mxu0
  %v70 = vadd.f32 %v29, %v69
  %v71 = vpop.f32.mrb[0].mxu0
  %v72 = vpop.f32.mrb[0].mxu0
  %v73 = vadd.f32 %v29, %v72
  %v74 = vpop.f32.mrb[0].mxu0
  %75 = vdwg.mxu0
  %vm76 = vcmask 15360
  %77 = vst.msk [vmem:[%s3] sm:$0xff] %vm76, %v70
  %78 = vst.msk [vmem:[%s3 + $0x8] sm:$0xff] %vm76, %v73
  // Predicated region
  $region14: #{gnn_policy_forward.16} parent=0 // pred_check
    _
  $region15: #{gnn_policy_forward.16} parent=0 // pred_check_branch
    %80 = sbr.rel (0) target = $region17
  $region16: #{gnn_policy_forward.16} parent=0 // pred_region
    _
  $region17: #{gnn_policy_forward.16} parent=0 // pred_fallthru
    _
  // Predicated region
  $region18: #{gnn_policy_forward.16} parent=0 // pred_check
    _
  $region19: #{gnn_policy_forward.16} parent=0 // pred_check_branch
    %82 = sbr.rel (0) target = $region21
  $region20: #{gnn_policy_forward.16} parent=0 // pred_region
    _
  $region21: #{gnn_policy_forward.16} parent=0 // pred_fallthru
    _

// kernel: gnn_policy_forward.19
$region0: #{gnn_policy_forward.19}
  #allocation0 [shape = 'u32[]', space=smem, size = 0x4, offset = 0x4, fixed_abs, tag = 'smem constant byte address 0x4 - core index']
  #allocation1 [shape = 'u32[144,128]{1,0:T(1,128)}', space=vmem, size = 0x12000, scoped, tag = 'internal scratch']
  %s0 = inlined_call_operand.vmem [shape: f32[16,64], index: 0, kind: input, shape index: {}]
  %s1 = inlined_call_operand.vmem [shape: f32[64,64], index: 1, kind: input, shape index: {}]
  %s2 = inlined_call_operand.vmem [shape: f32[64,2], index: 2, kind: input, shape index: {}]
  %s3 = inlined_call_operand.vmem [shape: f32[16,64], index: 3, kind: output, shape index: {0}]
  %s4 = inlined_call_operand.vmem [shape: f32[16,2], index: 4, kind: output, shape index: {1}]
  %5 = xla_tuple %s3, %s4
  %s6 = sld [smem:[#allocation0]]
  $region30: #{gnn_policy_forward.19} parent=0
    _
  %s8 = ssub.s32 1, %s6
  %s9 = scalar_select 0, %s8, %s6
  // Predicated region
  $region2: #{gnn_policy_forward.19} parent=0 // pred_check
    _
  $region3: #{gnn_policy_forward.19} parent=0 // pred_check_branch
    %11 = sbr.rel (0) target = $region5
  $region4: #{gnn_policy_forward.19} parent=0 // pred_region
    _
  $region5: #{gnn_policy_forward.19} parent=0 // pred_fallthru
    _
  // Predicated region
  $region6: #{gnn_policy_forward.19} parent=0 // pred_check
    _
  $region7: #{gnn_policy_forward.19} parent=0 // pred_check_branch
    %13 = sbr.rel (0) target = $region9
  $region8: #{gnn_policy_forward.19} parent=0 // pred_region
    _
  $region9: #{gnn_policy_forward.19} parent=0 // pred_fallthru
    _
  // Predicated region
  $region10: #{gnn_policy_forward.19} parent=0 // pred_check
    _
  $region11: #{gnn_policy_forward.19} parent=0 // pred_check_branch
    %15 = sbr.rel (0) target = $region13
  $region12: #{gnn_policy_forward.19} parent=0 // pred_region
    _
  $region13: #{gnn_policy_forward.19} parent=0 // pred_fallthru
    _
  %v17 = vld [vmem:[%s0] sm:$0xff]
  %v18 = vld [vmem:[%s0 + $0x8] sm:$0xff]
  %v19 = vpack.c.bf16 %v18, %v17
  %v20 = vld [vmem:[%s1] sm:$0xff]
  %v21 = vld [vmem:[%s1 + $0x8] sm:$0xff]
  %v22 = vld [vmem:[%s1 + $0x10] sm:$0xff]
  %v23 = vld [vmem:[%s1 + $0x18] sm:$0xff]
  %v24 = vld [vmem:[%s1 + $0x20] sm:$0xff]
  %v25 = vld [vmem:[%s1 + $0x28] sm:$0xff]
  %v26 = vld [vmem:[%s1 + $0x30] sm:$0xff]
  %v27 = vld [vmem:[%s1 + $0x38] sm:$0xff]
  %v28 = vpack.c.bf16 %v21, %v20
  %v29 = vpack.c.bf16 %v23, %v22
  %v30 = vpack.c.bf16 %v25, %v24
  %v31 = vpack.c.bf16 %v27, %v26
  %vm32 = vcmask 523264
  %v34 = vsel %vm32, %v19, 0
  %36 = vmatprep.subr.bf16.mxu0 0
  %37 = vmatpush1.bf16.msra.mxu0 %v28
  %38 = vmatprep.subr.bf16.mxu0 0
  %39 = vmatpush1.bf16.msra.mxu0 %v29
  %40 = vmatprep.subr.bf16.mxu0 0
  %41 = vmatpush1.bf16.msra.mxu0 %v30
  %42 = vmatprep.subr.bf16.mxu0 0
  %43 = vmatpush1.bf16.msra.mxu0 %v31
  %44 = vmatprep.subr.bf16.mxu0 0
  %45 = vmatpush1.bf16.msra.mxu0 0
  %46 = vmatprep.subr.bf16.mxu0 0
  %47 = vmatpush1.bf16.msra.mxu0 0
  %48 = vmatprep.subr.bf16.mxu0 0
  %49 = vmatpush1.bf16.msra.mxu0 0
  %50 = vmatprep.subr.bf16.mxu0 0
  %51 = vmatpush1.bf16.msra.mxu0 0
  %52 = vmatprep.subr.bf16.mxu0 0
  %53 = vmatpush1.bf16.msra.mxu0 0
  %54 = vmatprep.subr.bf16.mxu0 0
  %55 = vmatpush1.bf16.msra.mxu0 0
  %56 = vmatprep.subr.bf16.mxu0 0
  %57 = vmatpush1.bf16.msra.mxu0 0
  %58 = vmatprep.subr.bf16.mxu0 0
  %59 = vmatpush1.bf16.msra.mxu0 0
  %60 = vmatprep.subr.bf16.mxu0 0
  %61 = vmatpush1.bf16.msra.mxu0 0
  %62 = vmatprep.subr.bf16.mxu0 0
  %63 = vmatpush1.bf16.msra.mxu0 0
  %64 = vmatprep.subr.bf16.mxu0 0
  %65 = vmatpush1.bf16.msra.mxu0 0
  %66 = vmatprep.subr.bf16.mxu0 0
  %67 = vmatpush1.bf16.msra.mxu0 0
  %68 = vmatprep.mubr.bf16.mxu0 0
  %69 = vmatmul.mubr.bf16.gmra.mrb[0].mxu0 %v34
  %v70 = vpop.f32.mrb[0].mxu0
  %v71 = vadd.f32 0.0, %v70
  %v72 = vpop.f32.mrb[0].mxu0
  %v73 = vpop.f32.mrb[0].mxu0
  %v74 = vadd.f32 0.0, %v73
  %v75 = vpop.f32.mrb[0].mxu0
  %76 = vdwg.mxu0
  %77 = vst.msk [vmem:[%s3] sm:$0xff] %vm32, %v71
  %78 = vst.msk [vmem:[%s3 + $0x8] sm:$0xff] %vm32, %v74
  %v79 = vpack.c.bf16 %v74, %v71
  %v80 = vld [vmem:[%s2] sm:$0xff]
  %v81 = vld [vmem:[%s2 + $0x8] sm:$0xff]
  %v82 = vld [vmem:[%s2 + $0x10] sm:$0xff]
  %v83 = vld [vmem:[%s2 + $0x18] sm:$0xff]
  %v84 = vld [vmem:[%s2 + $0x20] sm:$0xff]
  %v85 = vld [vmem:[%s2 + $0x28] sm:$0xff]
  %v86 = vld [vmem:[%s2 + $0x30] sm:$0xff]
  %v87 = vld [vmem:[%s2 + $0x38] sm:$0xff]
  %v88 = vpack.c.bf16 %v81, %v80
  %v89 = vpack.c.bf16 %v83, %v82
  %v90 = vpack.c.bf16 %v85, %v84
  %v91 = vpack.c.bf16 %v87, %v86
  %v93 = vsel %vm32, %v79, 0
  %95 = vmatprep.subr.bf16.mxu0 0
  %96 = vmatpush1.bf16.msra.mxu0 %v88
  %97 = vmatprep.subr.bf16.mxu0 0
  %98 = vmatpush1.bf16.msra.mxu0 %v89
  %99 = vmatprep.subr.bf16.mxu0 0
  %100 = vmatpush1.bf16.msra.mxu0 %v90
  %101 = vmatprep.subr.bf16.mxu0 0
  %102 = vmatpush1.bf16.msra.mxu0 %v91
  %103 = vmatprep.subr.bf16.mxu0 0
  %104 = vmatpush1.bf16.msra.mxu0 0
  %105 = vmatprep.subr.bf16.mxu0 0
  %106 = vmatpush1.bf16.msra.mxu0 0
  %107 = vmatprep.subr.bf16.mxu0 0
  %108 = vmatpush1.bf16.msra.mxu0 0
  %109 = vmatprep.subr.bf16.mxu0 0
  %110 = vmatpush1.bf16.msra.mxu0 0
  %111 = vmatprep.subr.bf16.mxu0 0
  %112 = vmatpush1.bf16.msra.mxu0 0
  %113 = vmatprep.subr.bf16.mxu0 0
  %114 = vmatpush1.bf16.msra.mxu0 0
  %115 = vmatprep.subr.bf16.mxu0 0
  %116 = vmatpush1.bf16.msra.mxu0 0
  %117 = vmatprep.subr.bf16.mxu0 0
  %118 = vmatpush1.bf16.msra.mxu0 0
  %119 = vmatprep.subr.bf16.mxu0 0
  %120 = vmatpush1.bf16.msra.mxu0 0
  %121 = vmatprep.subr.bf16.mxu0 0
  %122 = vmatpush1.bf16.msra.mxu0 0
  %123 = vmatprep.subr.bf16.mxu0 0
  %124 = vmatpush1.bf16.msra.mxu0 0
  %125 = vmatprep.subr.bf16.mxu0 0
  %126 = vmatpush1.bf16.msra.mxu0 0
  %127 = vmatprep.mubr.bf16.mxu0 0
  %128 = vmatmul.mubr.bf16.gmra.mrb[0].mxu0 %v93
  %v129 = vpop.f32.mrb[0].mxu0
  %v130 = vadd.f32 0.0, %v129
  %v131 = vpop.f32.mrb[0].mxu0
  %v132 = vpop.f32.mrb[0].mxu0
  %v133 = vadd.f32 0.0, %v132
  %v134 = vpop.f32.mrb[0].mxu0
  %135 = vdwg.mxu0
  %vm136 = vcmask 15360
  %137 = vst.msk [vmem:[%s4] sm:$0xff] %vm136, %v130
  %138 = vst.msk [vmem:[%s4 + $0x8] sm:$0xff] %vm136, %v133
  // Predicated region
  $region14: #{gnn_policy_forward.19} parent=0 // pred_check
    _
  $region15: #{gnn_policy_forward.19} parent=0 // pred_check_branch
    %140 = sbr.rel (0) target = $region17
  $region16: #{gnn_policy_forward.19} parent=0 // pred_region
    _
  $region17: #{gnn_policy_forward.19} parent=0 // pred_fallthru
    _
  // Predicated region
  $region18: #{gnn_policy_forward.19} parent=0 // pred_check
    _
  $region19: #{gnn_policy_forward.19} parent=0 // pred_check_branch
    %142 = sbr.rel (0) target = $region21
  $region20: #{gnn_policy_forward.19} parent=0 // pred_region
    _
  $region21: #{gnn_policy_forward.19} parent=0 // pred_fallthru
    _
  // Predicated region
  $region22: #{gnn_policy_forward.19} parent=0 // pred_check
    _
  $region23: #{gnn_policy_forward.19} parent=0 // pred_check_branch
    %144 = sbr.rel (0) target = $region25
  $region24: #{gnn_policy_forward.19} parent=0 // pred_region
    _
  $region25: #{gnn_policy_forward.19} parent=0 // pred_fallthru
    _
  // Predicated region
  $region26: #{gnn_policy_forward.19} parent=0 // pred_check
    _
  $region27: #{gnn_policy_forward.19} parent=0 // pred_check_branch
    %146 = sbr.rel (0) target = $region29
  $region28: #{gnn_policy_forward.19} parent=0 // pred_region
    _
  $region29: #{gnn_policy_forward.19} parent=0 // pred_fallthru
    _

// kernel: gnn_policy_forward.20
$region0: #{gnn_policy_forward.20}
  #allocation0 [shape = 'u32[]', space=smem, size = 0x4, offset = 0x4, fixed_abs, tag = 'smem constant byte address 0x4 - core index']
  #allocation1 [shape = 'u32[144,128]{1,0:T(1,128)}', space=vmem, size = 0x12000, scoped, tag = 'internal scratch']
  %s0 = inlined_call_operand.vmem [shape: f32[24,32], index: 0, kind: input, shape index: {}]
  %s1 = inlined_call_operand.vmem [shape: f32[32,2], index: 1, kind: input, shape index: {}]
  %s2 = inlined_call_operand.vmem [shape: f32[1,2], index: 2, kind: input, shape index: {}]
  %s3 = inlined_call_operand.vmem [shape: f32[24,2], index: 3, kind: output, shape index: {}]
  %s4 = sld [smem:[#allocation0]]
  $region22: #{gnn_policy_forward.20} parent=0
    _
  %s6 = ssub.s32 1, %s4
  %s7 = scalar_select 0, %s6, %s4
  // Predicated region
  $region2: #{gnn_policy_forward.20} parent=0 // pred_check
    _
  $region3: #{gnn_policy_forward.20} parent=0 // pred_check_branch
    %9 = sbr.rel (0) target = $region5
  $region4: #{gnn_policy_forward.20} parent=0 // pred_region
    _
  $region5: #{gnn_policy_forward.20} parent=0 // pred_fallthru
    _
  // Predicated region
  $region6: #{gnn_policy_forward.20} parent=0 // pred_check
    _
  $region7: #{gnn_policy_forward.20} parent=0 // pred_check_branch
    %11 = sbr.rel (0) target = $region9
  $region8: #{gnn_policy_forward.20} parent=0 // pred_region
    _
  $region9: #{gnn_policy_forward.20} parent=0 // pred_fallthru
    _
  // Predicated region
  $region10: #{gnn_policy_forward.20} parent=0 // pred_check
    _
  $region11: #{gnn_policy_forward.20} parent=0 // pred_check_branch
    %13 = sbr.rel (0) target = $region13
  $region12: #{gnn_policy_forward.20} parent=0 // pred_region
    _
  $region13: #{gnn_policy_forward.20} parent=0 // pred_fallthru
    _
  %v15 = vld [vmem:[%s0] sm:$0xff]
  %v16 = vld [vmem:[%s0 + $0x8] sm:$0xff]
  %v17 = vld [vmem:[%s0 + $0x10] sm:$0xff]
  %v18 = vpack.c.bf16 %v16, %v15
  %v19 = vpack.c.bf16 %v17, %v17
  %v20 = vld [vmem:[%s1] sm:$0xff]
  %v21 = vld [vmem:[%s1 + $0x8] sm:$0xff]
  %v22 = vld [vmem:[%s1 + $0x10] sm:$0xff]
  %v23 = vld [vmem:[%s1 + $0x18] sm:$0xff]
  %v24 = vpack.c.bf16 %v21, %v20
  %v25 = vpack.c.bf16 %v23, %v22
  %v26 = vld [vmem:[%s2] sm:$0x1]
  %v28 = vlaneseq
  %v29 = vshrl.u32 %v28, 7
  %v30 = vsub.s32 0, %v29
  %v31 = vrot.slane %v26, %v30
  %vm33 = vcmask 261120
  %v35 = vsel %vm33, %v18, 0
  %v38 = vsel %vm33, %v19, 0
  %40 = vmatprep.subr.bf16.mxu0 0
  %41 = vmatpush1.bf16.msra.mxu0 %v24
  %42 = vmatprep.subr.bf16.mxu0 0
  %43 = vmatpush1.bf16.msra.mxu0 %v25
  %44 = vmatprep.subr.bf16.mxu0 0
  %45 = vmatpush1.bf16.msra.mxu0 0
  %46 = vmatprep.subr.bf16.mxu0 0
  %47 = vmatpush1.bf16.msra.mxu0 0
  %48 = vmatprep.subr.bf16.mxu0 0
  %49 = vmatpush1.bf16.msra.mxu0 0
  %50 = vmatprep.subr.bf16.mxu0 0
  %51 = vmatpush1.bf16.msra.mxu0 0
  %52 = vmatprep.subr.bf16.mxu0 0
  %53 = vmatpush1.bf16.msra.mxu0 0
  %54 = vmatprep.subr.bf16.mxu0 0
  %55 = vmatpush1.bf16.msra.mxu0 0
  %56 = vmatprep.subr.bf16.mxu0 0
  %57 = vmatpush1.bf16.msra.mxu0 0
  %58 = vmatprep.subr.bf16.mxu0 0
  %59 = vmatpush1.bf16.msra.mxu0 0
  %60 = vmatprep.subr.bf16.mxu0 0
  %61 = vmatpush1.bf16.msra.mxu0 0
  %62 = vmatprep.subr.bf16.mxu0 0
  %63 = vmatpush1.bf16.msra.mxu0 0
  %64 = vmatprep.subr.bf16.mxu0 0
  %65 = vmatpush1.bf16.msra.mxu0 0
  %66 = vmatprep.subr.bf16.mxu0 0
  %67 = vmatpush1.bf16.msra.mxu0 0
  %68 = vmatprep.subr.bf16.mxu0 0
  %69 = vmatpush1.bf16.msra.mxu0 0
  %70 = vmatprep.subr.bf16.mxu0 0
  %71 = vmatpush1.bf16.msra.mxu0 0
  %72 = vmatprep.mubr.bf16.mxu0 0
  %73 = vmatmul.mubr.bf16.gmra.mrb[0].mxu0 %v35
  %v74 = vpop.f32.mrb[0].mxu0
  %v75 = vadd.f32 %v31, %v74
  %v76 = vpop.f32.mrb[0].mxu0
  %v77 = vpop.f32.mrb[0].mxu0
  %v78 = vadd.f32 %v31, %v77
  %v79 = vpop.f32.mrb[0].mxu0
  %80 = vmatprep.mubr.bf16.mxu0 0
  %81 = vmatmul.mubr.bf16.gmra.mrb[0].mxu0 %v38
  %v82 = vpop.f32.mrb[0].mxu0
  %v83 = vadd.f32 %v31, %v82
  %v84 = vpop.f32.mrb[0].mxu0
  %v85 = vpop.f32.mrb[0].mxu0
  %v86 = vpop.f32.mrb[0].mxu0
  %87 = vdwg.mxu0
  %vm88 = vcmask 15360
  %89 = vst.msk [vmem:[%s3] sm:$0xff] %vm88, %v75
  %90 = vst.msk [vmem:[%s3 + $0x8] sm:$0xff] %vm88, %v78
  %91 = vst.msk [vmem:[%s3 + $0x10] sm:$0xff] %vm88, %v83
  // Predicated region
  $region14: #{gnn_policy_forward.20} parent=0 // pred_check
    _
  $region15: #{gnn_policy_forward.20} parent=0 // pred_check_branch
    %93 = sbr.rel (0) target = $region17
  $region16: #{gnn_policy_forward.20} parent=0 // pred_region
    _
  $region17: #{gnn_policy_forward.20} parent=0 // pred_fallthru
    _
  // Predicated region
  $region18: #{gnn_policy_forward.20} parent=0 // pred_check
    _
  $region19: #{gnn_policy_forward.20} parent=0 // pred_check_branch
    %95 = sbr.rel (0) target = $region21
  $region20: #{gnn_policy_forward.20} parent=0 // pred_region
    _
  $region21: #{gnn_policy_forward.20} parent=0 // pred_fallthru
    _

// kernel: gnn_policy_forward.18
$region0: #{gnn_policy_forward.18}
  #allocation0 [shape = 'u32[]', space=smem, size = 0x4, offset = 0x4, fixed_abs, tag = 'smem constant byte address 0x4 - core index']
  #allocation1 [shape = 'u32[144,128]{1,0:T(1,128)}', space=vmem, size = 0x12000, scoped, tag = 'internal scratch']
  #allocation2 [shape = 'f32[12,64]{1,0:T(8,128)}', space=vmem, size = 0x2000, scoped, tag = 'scratch operand']
  #allocation3 [shape = 'f32[12,2]{1,0:T(8,128)}', space=vmem, size = 0x2000, scoped, tag = 'scratch operand']
  %s0 = inlined_call_operand.vmem [shape: s32[40,1], index: 0, kind: input, shape index: {}]
  %s1 = inlined_call_operand.vmem [shape: s32[40,1], index: 1, kind: input, shape index: {}]
  %s2 = inlined_call_operand.vmem [shape: bf16[20,64], index: 2, kind: input, shape index: {}]
  %s3 = inlined_call_operand.vmem [shape: bf16[20,2], index: 3, kind: input, shape index: {}]
  %s4 = inlined_call_operand.vmem [shape: bf16[12,2], index: 4, kind: input, shape index: {}]
  %s5 = inlined_call_operand.vmem [shape: f32[40,2], index: 5, kind: input, shape index: {}]
  %s6 = inlined_call_operand.vmem [shape: f32[1,2], index: 6, kind: input, shape index: {}]
  %s7 = inlined_call_operand.vmem [shape: f32[2,64], index: 7, kind: input, shape index: {}]
  %s8 = inlined_call_operand.vmem [shape: f32[1,64], index: 8, kind: input, shape index: {}]
  %s9 = inlined_call_operand.vmem [shape: f32[12,64], index: 9, kind: output, shape index: {}]
  %s10 = sld [smem:[#allocation0]]
  $region54: #{gnn_policy_forward.18} parent=0
    _
  %s12 = ssub.s32 1, %s10
  %s13 = scalar_select 0, %s12, %s10
  // Predicated region
  $region2: #{gnn_policy_forward.18} parent=0 // pred_check
    _
  $region3: #{gnn_policy_forward.18} parent=0 // pred_check_branch
    %15 = sbr.rel (0) target = $region5
  $region4: #{gnn_policy_forward.18} parent=0 // pred_region
    _
  $region5: #{gnn_policy_forward.18} parent=0 // pred_fallthru
    _
  // Predicated region
  $region6: #{gnn_policy_forward.18} parent=0 // pred_check
    _
  $region7: #{gnn_policy_forward.18} parent=0 // pred_check_branch
    %17 = sbr.rel (0) target = $region9
  $region8: #{gnn_policy_forward.18} parent=0 // pred_region
    _
  $region9: #{gnn_policy_forward.18} parent=0 // pred_fallthru
    _
  // Predicated region
  $region10: #{gnn_policy_forward.18} parent=0 // pred_check
    _
  $region11: #{gnn_policy_forward.18} parent=0 // pred_check_branch
    %19 = sbr.rel (0) target = $region13
  $region12: #{gnn_policy_forward.18} parent=0 // pred_region
    _
  $region13: #{gnn_policy_forward.18} parent=0 // pred_fallthru
    _
  // Predicated region
  $region14: #{gnn_policy_forward.18} parent=0 // pred_check
    _
  $region15: #{gnn_policy_forward.18} parent=0 // pred_check_branch
    %21 = sbr.rel (0) target = $region17
  $region16: #{gnn_policy_forward.18} parent=0 // pred_region
    _
  $region17: #{gnn_policy_forward.18} parent=0 // pred_fallthru
    _
  // Predicated region
  $region18: #{gnn_policy_forward.18} parent=0 // pred_check
    _
  $region19: #{gnn_policy_forward.18} parent=0 // pred_check_branch
    %23 = sbr.rel (0) target = $region21
  $region20: #{gnn_policy_forward.18} parent=0 // pred_region
    _
  $region21: #{gnn_policy_forward.18} parent=0 // pred_fallthru
    _
  // Predicated region
  $region22: #{gnn_policy_forward.18} parent=0 // pred_check
    _
  $region23: #{gnn_policy_forward.18} parent=0 // pred_check_branch
    %25 = sbr.rel (0) target = $region25
  $region24: #{gnn_policy_forward.18} parent=0 // pred_region
    _
  $region25: #{gnn_policy_forward.18} parent=0 // pred_fallthru
    _
  // Predicated region
  $region26: #{gnn_policy_forward.18} parent=0 // pred_check
    _
  $region27: #{gnn_policy_forward.18} parent=0 // pred_check_branch
    %27 = sbr.rel (0) target = $region29
  $region28: #{gnn_policy_forward.18} parent=0 // pred_region
    _
  $region29: #{gnn_policy_forward.18} parent=0 // pred_fallthru
    _
  // Predicated region
  $region30: #{gnn_policy_forward.18} parent=0 // pred_check
    _
  $region31: #{gnn_policy_forward.18} parent=0 // pred_check_branch
    %29 = sbr.rel (0) target = $region33
  $region32: #{gnn_policy_forward.18} parent=0 // pred_region
    _
  $region33: #{gnn_policy_forward.18} parent=0 // pred_fallthru
    _
  // Predicated region
  $region34: #{gnn_policy_forward.18} parent=0 // pred_check
    _
  $region35: #{gnn_policy_forward.18} parent=0 // pred_check_branch
    %31 = sbr.rel (0) target = $region37
  $region36: #{gnn_policy_forward.18} parent=0 // pred_region
    _
  $region37: #{gnn_policy_forward.18} parent=0 // pred_fallthru
    _
  %p33 = scmp.eq.s32.totalorder 0, 0
  // Predicated region
  $region38: #{gnn_policy_forward.18} parent=0 // pred_check
    %p34 = pneg %p33
  $region39: #{gnn_policy_forward.18} parent=0 // pred_check_branch
    %36 = sbr.rel (%p34) target = $region41
  $region40: #{gnn_policy_forward.18} parent=0 // pred_region
    %vm37 = vcmask 523264
    %38 = vst.msk [vmem:[#allocation2] sm:$0xff] %vm37, 0.0
    %vm39 = vcmask 519168
    %40 = vst.msk [vmem:[#allocation2 + $0x8] sm:$0xf] %vm39, 0.0
    %vm41 = vcmask 15360
    %42 = vst.msk [vmem:[#allocation3] sm:$0xff] %vm41, 0.0
    %vm43 = vcmask 11264
    %44 = vst.msk [vmem:[#allocation3 + $0x8] sm:$0xf] %vm43, 0.0
  $region41: #{gnn_policy_forward.18} parent=0 // pred_fallthru
    _
  %v45 = vld [vmem:[%s0] sm:$0xff]
  %v46 = vld [vmem:[%s0 + $0x8] sm:$0xff]
  %v47 = vld [vmem:[%s0 + $0x10] sm:$0xff]
  %v48 = vld [vmem:[%s0 + $0x18] sm:$0xff]
  %v49 = vld [vmem:[%s0 + $0x20] sm:$0xff]
  %v50 = vlaneseq
  %v51 = vand.u32 %v50, 127
  %52 = vset.pattern.permute.xlu0 0
  %53 = vperm.xlu0 %52, %v45
  %v54 = vpop.permute.xlu0 %53
  %55 = vset.pattern.permute.xlu0 0
  %56 = vperm.xlu0 %55, %v46
  %v57 = vpop.permute.xlu0 %56
  %58 = vset.pattern.permute.xlu0 0
  %59 = vperm.xlu0 %58, %v47
  %v60 = vpop.permute.xlu0 %59
  %61 = vset.pattern.permute.xlu0 0
  %62 = vperm.xlu0 %61, %v48
  %v63 = vpop.permute.xlu0 %62
  %64 = vset.pattern.permute.xlu0 0
  %65 = vperm.xlu0 %64, %v49
  %v66 = vpop.permute.xlu0 %65
  %vm67 = vcmp.eq.s32.totalorder %v54, %v51
  %vm68 = vcmp.eq.s32.totalorder %v57, %v51
  %vm69 = vcmp.eq.s32.totalorder %v60, %v51
  %vm70 = vcmp.eq.s32.totalorder %v63, %v51
  %vm71 = vcmp.eq.s32.totalorder %v66, %v51
  %v72 = vsel %vm67, 1, 0
  %v73 = vsel %vm68, 1, 0
  %v74 = vsel %vm69, 1, 0
  %v75 = vsel %vm70, 1, 0
  %v76 = vsel %vm71, 1, 0
  %v77 = vcvt.s32.f32 %v72
  %v78 = vcvt.s32.f32 %v73
  %v79 = vcvt.s32.f32 %v74
  %v80 = vcvt.s32.f32 %v75
  %v81 = vcvt.s32.f32 %v76
  %v82 = vpack.c.bf16 %v78, %v77
  %v83 = vpack.c.bf16 %v80, %v79
  %v84 = vpack.c.bf16 %v81, %v81
  %v85 = vld [vmem:[%s1] sm:$0xff]
  %v86 = vld [vmem:[%s1 + $0x8] sm:$0xff]
  %v87 = vld [vmem:[%s1 + $0x10] sm:$0xff]
  %v88 = vld [vmem:[%s1 + $0x18] sm:$0xff]
  %v89 = vld [vmem:[%s1 + $0x20] sm:$0xff]
  %90 = vset.pattern.permute.xlu0 0
  %91 = vperm.xlu0 %90, %v85
  %v92 = vpop.permute.xlu0 %91
  %93 = vset.pattern.permute.xlu0 0
  %94 = vperm.xlu0 %93, %v86
  %v95 = vpop.permute.xlu0 %94
  %96 = vset.pattern.permute.xlu0 0
  %97 = vperm.xlu0 %96, %v87
  %v98 = vpop.permute.xlu0 %97
  %99 = vset.pattern.permute.xlu0 0
  %100 = vperm.xlu0 %99, %v88
  %v101 = vpop.permute.xlu0 %100
  %102 = vset.pattern.permute.xlu0 0
  %103 = vperm.xlu0 %102, %v89
  %v104 = vpop.permute.xlu0 %103
  %vm105 = vcmp.eq.s32.totalorder %v92, %v51
  %vm106 = vcmp.eq.s32.totalorder %v95, %v51
  %vm107 = vcmp.eq.s32.totalorder %v98, %v51
  %vm108 = vcmp.eq.s32.totalorder %v101, %v51
  %vm109 = vcmp.eq.s32.totalorder %v104, %v51
  %v110 = vsel %vm105, 1, 0
  %v111 = vsel %vm106, 1, 0
  %v112 = vsel %vm107, 1, 0
  %v113 = vsel %vm108, 1, 0
  %v114 = vsel %vm109, 1, 0
  %v115 = vcvt.s32.f32 %v110
  %v116 = vcvt.s32.f32 %v111
  %v117 = vcvt.s32.f32 %v112
  %v118 = vcvt.s32.f32 %v113
  %v119 = vcvt.s32.f32 %v114
  %v120 = vpack.c.bf16 %v116, %v115
  %v121 = vpack.c.bf16 %v118, %v117
  %v122 = vpack.c.bf16 %v119, %v119
  %v123 = vld [vmem:[%s3] sm:$0xf]
  %v124 = vld [vmem:[%s3 + $0x4] sm:$0xf]
  %v125 = vld [vmem:[%s3 + $0x8] sm:$0x3]
  %v126 = vld [vmem:[%s4] sm:$0xf]
  %v127 = vld [vmem:[%s4 + $0x4] sm:$0x3]
  %v130 = vunpack.c.l.b16 %v126
  %v131 = vunpack.c.l.b16 %v127
  %v132 = vpack.c.b16 %v131, %v130
  %vm133 = vcmask 97280
  %v135 = vsel %vm133, %v120, 0
  %v138 = vsel %vm133, %v121, 0
  %v141 = vsel %vm133, %v122, 0
  %vm143 = vcmask 1045504
  %v145 = vsel %vm143, %v132, 0
  %147 = vmatprep.subr.bf16.mxu0 0
  %148 = vmatpush1.bf16.msra.mxu0 %v145
  %149 = vmatprep.subr.bf16.mxu0 0
  %150 = vmatpush1.bf16.msra.mxu0 0
  %151 = vmatprep.subr.bf16.mxu0 0
  %152 = vmatpush1.bf16.msra.mxu0 0
  %153 = vmatprep.subr.bf16.mxu0 0
  %154 = vmatpush1.bf16.msra.mxu0 0
  %155 = vmatprep.subr.bf16.mxu0 0
  %156 = vmatpush1.bf16.msra.mxu0 0
  %157 = vmatprep.subr.bf16.mxu0 0
  %158 = vmatpush1.bf16.msra.mxu0 0
  %159 = vmatprep.subr.bf16.mxu0 0
  %160 = vmatpush1.bf16.msra.mxu0 0
  %161 = vmatprep.subr.bf16.mxu0 0
  %162 = vmatpush1.bf16.msra.mxu0 0
  %163 = vmatprep.subr.bf16.mxu0 0
  %164 = vmatpush1.bf16.msra.mxu0 0
  %165 = vmatprep.subr.bf16.mxu0 0
  %166 = vmatpush1.bf16.msra.mxu0 0
  %167 = vmatprep.subr.bf16.mxu0 0
  %168 = vmatpush1.bf16.msra.mxu0 0
  %169 = vmatprep.subr.bf16.mxu0 0
  %170 = vmatpush1.bf16.msra.mxu0 0
  %171 = vmatprep.subr.bf16.mxu0 0
  %172 = vmatpush1.bf16.msra.mxu0 0
  %173 = vmatprep.subr.bf16.mxu0 0
  %174 = vmatpush1.bf16.msra.mxu0 0
  %175 = vmatprep.subr.bf16.mxu0 0
  %176 = vmatpush1.bf16.msra.mxu0 0
  %177 = vmatprep.subr.bf16.mxu0 0
  %178 = vmatpush1.bf16.msra.mxu0 0
  %179 = vmatprep.mubr.bf16.mxu0 0
  %180 = vmatmul.mubr.bf16.gmra.mrb[0].mxu0 %v135
  %v181 = vpop.f32.mrb[0].mxu0
  %v182 = vadd.f32 0.0, %v181
  %v183 = vpop.f32.mrb[0].mxu0
  %v184 = vpop.f32.mrb[0].mxu0
  %v185 = vadd.f32 0.0, %v184
  %v186 = vpop.f32.mrb[0].mxu0
  %187 = vmatprep.mubr.bf16.mxu0 0
  %188 = vmatmul.mubr.bf16.gmra.mrb[0].mxu0 %v138
  %v189 = vpop.f32.mrb[0].mxu0
  %v190 = vadd.f32 0.0, %v189
  %v191 = vpop.f32.mrb[0].mxu0
  %v192 = vpop.f32.mrb[0].mxu0
  %v193 = vadd.f32 0.0, %v192
  %v194 = vpop.f32.mrb[0].mxu0
  %195 = vmatprep.mubr.bf16.mxu0 0
  %196 = vmatmul.mubr.bf16.gmra.mrb[0].mxu0 %v141
  %v197 = vpop.f32.mrb[0].mxu0
  %v198 = vadd.f32 0.0, %v197
  %v199 = vpop.f32.mrb[0].mxu0
  %v200 = vpop.f32.mrb[0].mxu0
  %v201 = vpop.f32.mrb[0].mxu0
  %202 = vdwg.mxu0
  %v206 = vunpack.c.l.b16 %v123
  %v207 = vunpack.c.l.b16 %v124
  %v208 = vunpack.c.l.b16 %v125
  %v209 = vpack.c.b16 %v207, %v206
  %v210 = vpack.c.b16 %v208, %v208
  %vm212 = vcmask 162816
  %v214 = vsel %vm212, %v82, 0
  %v217 = vsel %vm212, %v83, 0
  %v220 = vsel %vm212, %v84, 0
  %vm222 = vcmask 1041408
  %v224 = vsel %vm222, %v210, 0
  %226 = vmatprep.subr.bf16.mxu0 0
  %227 = vmatpush1.bf16.msra.mxu0 %v209
  %228 = vmatprep.subr.bf16.mxu0 0
  %229 = vmatpush1.bf16.msra.mxu0 %v224
  %230 = vmatprep.subr.bf16.mxu0 0
  %231 = vmatpush1.bf16.msra.mxu0 0
  %232 = vmatprep.subr.bf16.mxu0 0
  %233 = vmatpush1.bf16.msra.mxu0 0
  %234 = vmatprep.subr.bf16.mxu0 0
  %235 = vmatpush1.bf16.msra.mxu0 0
  %236 = vmatprep.subr.bf16.mxu0 0
  %237 = vmatpush1.bf16.msra.mxu0 0
  %238 = vmatprep.subr.bf16.mxu0 0
  %239 = vmatpush1.bf16.msra.mxu0 0
  %240 = vmatprep.subr.bf16.mxu0 0
  %241 = vmatpush1.bf16.msra.mxu0 0
  %242 = vmatprep.subr.bf16.mxu0 0
  %243 = vmatpush1.bf16.msra.mxu0 0
  %244 = vmatprep.subr.bf16.mxu0 0
  %245 = vmatpush1.bf16.msra.mxu0 0
  %246 = vmatprep.subr.bf16.mxu0 0
  %247 = vmatpush1.bf16.msra.mxu0 0
  %248 = vmatprep.subr.bf16.mxu0 0
  %249 = vmatpush1.bf16.msra.mxu0 0
  %250 = vmatprep.subr.bf16.mxu0 0
  %251 = vmatpush1.bf16.msra.mxu0 0
  %252 = vmatprep.subr.bf16.mxu0 0
  %253 = vmatpush1.bf16.msra.mxu0 0
  %254 = vmatprep.subr.bf16.mxu0 0
  %255 = vmatpush1.bf16.msra.mxu0 0
  %256 = vmatprep.subr.bf16.mxu0 0
  %257 = vmatpush1.bf16.msra.mxu0 0
  %258 = vmatprep.mubr.bf16.mxu0 0
  %259 = vmatmul.mubr.bf16.gmra.mrb[0].mxu0 %v214
  %v260 = vpop.f32.mrb[0].mxu0
  %v261 = vadd.f32 %v182, %v260
  %v262 = vpop.f32.mrb[0].mxu0
  %v263 = vpop.f32.mrb[0].mxu0
  %v264 = vadd.f32 %v185, %v263
  %v265 = vpop.f32.mrb[0].mxu0
  %266 = vmatprep.mubr.bf16.mxu0 0
  %267 = vmatmul.mubr.bf16.gmra.mrb[0].mxu0 %v217
  %v268 = vpop.f32.mrb[0].mxu0
  %v269 = vadd.f32 %v190, %v268
  %v270 = vpop.f32.mrb[0].mxu0
  %v271 = vpop.f32.mrb[0].mxu0
  %v272 = vadd.f32 %v193, %v271
  %v273 = vpop.f32.mrb[0].mxu0
  %274 = vmatprep.mubr.bf16.mxu0 0
  %275 = vmatmul.mubr.bf16.gmra.mrb[0].mxu0 %v220
  %v276 = vpop.f32.mrb[0].mxu0
  %v277 = vadd.f32 %v198, %v276
  %v278 = vpop.f32.mrb[0].mxu0
  %v279 = vpop.f32.mrb[0].mxu0
  %v280 = vpop.f32.mrb[0].mxu0
  %281 = vdwg.mxu0
  %v282 = vld [vmem:[%s5] sm:$0xff]
  %v283 = vld [vmem:[%s5 + $0x8] sm:$0xff]
  %v284 = vld [vmem:[%s5 + $0x10] sm:$0xff]
  %v285 = vld [vmem:[%s5 + $0x18] sm:$0xff]
  %v286 = vld [vmem:[%s5 + $0x20] sm:$0xff]
  %v287 = vadd.f32 %v261, %v282
  %v288 = vadd.f32 %v264, %v283
  %v289 = vadd.f32 %v269, %v284
  %v290 = vadd.f32 %v272, %v285
  %v291 = vadd.f32 %v277, %v286
  %vm292 = vcmp.gt.f32.partialorder %v287, 0.0
  %vm293 = vcmp.gt.f32.partialorder %v288, 0.0
  %vm294 = vcmp.gt.f32.partialorder %v289, 0.0
  %vm295 = vcmp.gt.f32.partialorder %v290, 0.0
  %vm296 = vcmp.gt.f32.partialorder %v291, 0.0
  %v297 = vmul.f32 %v287, 0.2
  %v298 = vmul.f32 %v288, 0.2
  %v299 = vmul.f32 %v289, 0.2
  %v300 = vmul.f32 %v290, 0.2
  %v301 = vmul.f32 %v291, 0.2
  %v302 = vsel %vm292, %v287, %v297
  %v303 = vsel %vm293, %v288, %v298
  %v304 = vsel %vm294, %v289, %v299
  %v305 = vsel %vm295, %v290, %v300
  %v306 = vsel %vm296, %v291, %v301
  %v307 = vld [vmem:[%s6] sm:$0x1]
  %v309 = vlaneseq
  %v310 = vshrl.u32 %v309, 7
  %v311 = vsub.s32 0, %v310
  %v312 = vrot.slane %v307, %v311
  %v314 = vsub.f32 %v302, %v312
  %v315 = vsub.f32 %v303, %v312
  %v316 = vsub.f32 %v304, %v312
  %v317 = vsub.f32 %v305, %v312
  %v318 = vsub.f32 %v306, %v312
  %v319 = vmul.f32 %v314, 1.442695
  %v320 = vpow.pop %v319
  %v321 = vmul.f32 %v315, 1.442695
  %v322 = vpow.pop %v321
  %v323 = vmul.f32 %v316, 1.442695
  %v324 = vpow.pop %v323
  %v325 = vmul.f32 %v317, 1.442695
  %v326 = vpow.pop %v325
  %v327 = vmul.f32 %v318, 1.442695
  %v328 = vpow.pop %v327
  %v329 = vld [vmem:[%s2] sm:$0xf]
  %v330 = vld [vmem:[%s2 + $0x4] sm:$0xf]
  %v331 = vld [vmem:[%s2 + $0x8] sm:$0x3]
  %v335 = vunpack.c.l.b16 %v329
  %v336 = vunpack.c.l.b16 %v330
  %v337 = vunpack.c.l.b16 %v331
  %v338 = vpack.c.b16 %v336, %v335
  %v339 = vpack.c.b16 %v337, %v337
  %v342 = vsel %vm222, %v339, 0
  %344 = vmatprep.subr.bf16.mxu0 0
  %345 = vmatpush1.bf16.msra.mxu0 %v338
  %346 = vmatprep.subr.bf16.mxu0 0
  %347 = vmatpush1.bf16.msra.mxu0 %v342
  %348 = vmatprep.subr.bf16.mxu0 0
  %349 = vmatpush1.bf16.msra.mxu0 0
  %350 = vmatprep.subr.bf16.mxu0 0
  %351 = vmatpush1.bf16.msra.mxu0 0
  %352 = vmatprep.subr.bf16.mxu0 0
  %353 = vmatpush1.bf16.msra.mxu0 0
  %354 = vmatprep.subr.bf16.mxu0 0
  %355 = vmatpush1.bf16.msra.mxu0 0
  %356 = vmatprep.subr.bf16.mxu0 0
  %357 = vmatpush1.bf16.msra.mxu0 0
  %358 = vmatprep.subr.bf16.mxu0 0
  %359 = vmatpush1.bf16.msra.mxu0 0
  %360 = vmatprep.subr.bf16.mxu0 0
  %361 = vmatpush1.bf16.msra.mxu0 0
  %362 = vmatprep.subr.bf16.mxu0 0
  %363 = vmatpush1.bf16.msra.mxu0 0
  %364 = vmatprep.subr.bf16.mxu0 0
  %365 = vmatpush1.bf16.msra.mxu0 0
  %366 = vmatprep.subr.bf16.mxu0 0
  %367 = vmatpush1.bf16.msra.mxu0 0
  %368 = vmatprep.subr.bf16.mxu0 0
  %369 = vmatpush1.bf16.msra.mxu0 0
  %370 = vmatprep.subr.bf16.mxu0 0
  %371 = vmatpush1.bf16.msra.mxu0 0
  %372 = vmatprep.subr.bf16.mxu0 0
  %373 = vmatpush1.bf16.msra.mxu0 0
  %374 = vmatprep.subr.bf16.mxu0 0
  %375 = vmatpush1.bf16.msra.mxu0 0
  %376 = vmatprep.mubr.bf16.mxu0 0
  %377 = vmatmul.mubr.bf16.gmra.mrb[0].mxu0 %v214
  %v378 = vpop.f32.mrb[0].mxu0
  %v379 = vadd.f32 0.0, %v378
  %v380 = vpop.f32.mrb[0].mxu0
  %v381 = vpop.f32.mrb[0].mxu0
  %v382 = vadd.f32 0.0, %v381
  %v383 = vpop.f32.mrb[0].mxu0
  %384 = vmatprep.mubr.bf16.mxu0 0
  %385 = vmatmul.mubr.bf16.gmra.mrb[0].mxu0 %v217
  %v386 = vpop.f32.mrb[0].mxu0
  %v387 = vadd.f32 0.0, %v386
  %v388 = vpop.f32.mrb[0].mxu0
  %v389 = vpop.f32.mrb[0].mxu0
  %v390 = vadd.f32 0.0, %v389
  %v391 = vpop.f32.mrb[0].mxu0
  %392 = vmatprep.mubr.bf16.mxu0 0
  %393 = vmatmul.mubr.bf16.gmra.mrb[0].mxu0 %v220
  %v394 = vpop.f32.mrb[0].mxu0
  %v395 = vadd.f32 0.0, %v394
  %v396 = vpop.f32.mrb[0].mxu0
  %v397 = vpop.f32.mrb[0].mxu0
  %v398 = vpop.f32.mrb[0].mxu0
  %399 = vdwg.mxu0
  %v400 = vld [vmem:[%s7] sm:$0x3]
  %vm401 = vcmask 15360
  %v403 = vsel %vm401, %v320, 0
  %v406 = vsel %vm401, %v322, 0
  %v409 = vsel %vm401, %v324, 0
  %v412 = vsel %vm401, %v326, 0
  %v415 = vsel %vm401, %v328, 0
  %v418 = vsel %vm222, %v400, 0
  %420 = vmatprep.subr.mxu0 0.0
  %421 = vmatpush1.msra.mxu0 %v418
  %422 = vmatprep.subr.mxu0 0.0
  %423 = vmatpush1.msra.mxu0 0.0
  %424 = vmatprep.subr.mxu0 0.0
  %425 = vmatpush1.msra.mxu0 0.0
  %426 = vmatprep.subr.mxu0 0.0
  %427 = vmatpush1.msra.mxu0 0.0
  %428 = vmatprep.subr.mxu0 0.0
  %429 = vmatpush1.msra.mxu0 0.0
  %430 = vmatprep.subr.mxu0 0.0
  %431 = vmatpush1.msra.mxu0 0.0
  %432 = vmatprep.subr.mxu0 0.0
  %433 = vmatpush1.msra.mxu0 0.0
  %434 = vmatprep.subr.mxu0 0.0
  %435 = vmatpush1.msra.mxu0 0.0
  %436 = vmatprep.subr.mxu0 0.0
  %437 = vmatpush1.msra.mxu0 0.0
  %438 = vmatprep.subr.mxu0 0.0
  %439 = vmatpush1.msra.mxu0 0.0
  %440 = vmatprep.subr.mxu0 0.0
  %441 = vmatpush1.msra.mxu0 0.0
  %442 = vmatprep.subr.mxu0 0.0
  %443 = vmatpush1.msra.mxu0 0.0
  %444 = vmatprep.subr.mxu0 0.0
  %445 = vmatpush1.msra.mxu0 0.0
  %446 = vmatprep.subr.mxu0 0.0
  %447 = vmatpush1.msra.mxu0 0.0
  %448 = vmatprep.subr.mxu0 0.0
  %449 = vmatpush1.msra.mxu0 0.0
  %450 = vmatprep.subr.mxu0 0.0
  %451 = vmatpush1.msra.mxu0 0.0
  %452 = vmatprep.subr.mxu0 0.0
  %453 = vmatpush1.msra.mxu0 0.0
  %454 = vmatprep.subr.mxu0 0.0
  %455 = vmatpush1.msra.mxu0 0.0
  %456 = vmatprep.subr.mxu0 0.0
  %457 = vmatpush1.msra.mxu0 0.0
  %458 = vmatprep.subr.mxu0 0.0
  %459 = vmatpush1.msra.mxu0 0.0
  %460 = vmatprep.subr.mxu0 0.0
  %461 = vmatpush1.msra.mxu0 0.0
  %462 = vmatprep.subr.mxu0 0.0
  %463 = vmatpush1.msra.mxu0 0.0
  %464 = vmatprep.subr.mxu0 0.0
  %465 = vmatpush1.msra.mxu0 0.0
  %466 = vmatprep.subr.mxu0 0.0
  %467 = vmatpush1.msra.mxu0 0.0
  %468 = vmatprep.subr.mxu0 0.0
  %469 = vmatpush1.msra.mxu0 0.0
  %470 = vmatprep.subr.mxu0 0.0
  %471 = vmatpush1.msra.mxu0 0.0
  %472 = vmatprep.subr.mxu0 0.0
  %473 = vmatpush1.msra.mxu0 0.0
  %474 = vmatprep.subr.mxu0 0.0
  %475 = vmatpush1.msra.mxu0 0.0
  %476 = vmatprep.subr.mxu0 0.0
  %477 = vmatpush1.msra.mxu0 0.0
  %478 = vmatprep.subr.mxu0 0.0
  %479 = vmatpush1.msra.mxu0 0.0
  %480 = vmatprep.subr.mxu0 0.0
  %481 = vmatpush1.msra.mxu0 0.0
  %482 = vmatprep.subr.mxu0 0.0
  %483 = vmatpush1.msra.mxu0 0.0
  %484 = vmatprep.mubr.f32.mxu0 0.0
  %485 = vmatmul.mubr.f32.gmra.mrb[0].mxu0 %v403
  %v486 = vpop.f32.mrb[0].mxu0
  %v487 = vadd.f32 0.0, %v486
  %v488 = vpop.f32.mrb[0].mxu0
  %489 = vmatprep.mubr.f32.mxu0 0.0
  %490 = vmatmul.mubr.f32.gmra.mrb[0].mxu0 %v406
  %v491 = vpop.f32.mrb[0].mxu0
  %v492 = vadd.f32 0.0, %v491
  %v493 = vpop.f32.mrb[0].mxu0
  %494 = vmatprep.mubr.f32.mxu0 0.0
  %495 = vmatmul.mubr.f32.gmra.mrb[0].mxu0 %v409
  %v496 = vpop.f32.mrb[0].mxu0
  %v497 = vadd.f32 0.0, %v496
  %v498 = vpop.f32.mrb[0].mxu0
  %499 = vmatprep.mubr.f32.mxu0 0.0
  %500 = vmatmul.mubr.f32.gmra.mrb[0].mxu0 %v412
  %v501 = vpop.f32.mrb[0].mxu0
  %v502 = vadd.f32 0.0, %v501
  %v503 = vpop.f32.mrb[0].mxu0
  %504 = vmatprep.mubr.f32.mxu0 0.0
  %505 = vmatmul.mubr.f32.gmra.mrb[0].mxu0 %v415
  %v506 = vpop.f32.mrb[0].mxu0
  %v507 = vadd.f32 0.0, %v506
  %v508 = vpop.f32.mrb[0].mxu0
  %509 = vdwg.mxu0
  %v510 = vmul.f32 %v379, %v487
  %v511 = vmul.f32 %v382, %v492
  %v512 = vmul.f32 %v387, %v497
  %v513 = vmul.f32 %v390, %v502
  %v514 = vmul.f32 %v395, %v507
  %v515 = vpack.c.bf16 %v511, %v510
  %v516 = vpack.c.bf16 %v513, %v512
  %v517 = vpack.c.bf16 %v514, %v514
  %v518 = vld [vmem:[#allocation2] sm:$0xff]
  %v519 = vld [vmem:[#allocation2 + $0x8] sm:$0xf]
  %520 = vxpose.xlu0.c.b16.start [1/8] %v120, 128
  %521 = vxpose.xlu0.c.b16.cont [2/8] %v121, 128
  %522 = vxpose.xlu0.c.b16.cont [3/8] %v122, 128
  %523 = vxpose.xlu0.c.b16.cont [4/8] 0, 128
  %524 = vxpose.xlu0.c.b16.cont [5/8] 0, 128
  %525 = vxpose.xlu0.c.b16.cont [6/8] 0, 128
  %526 = vxpose.xlu0.c.b16.cont [7/8] 0, 128
  %527 = vxpose.xlu0.c.b16.end [8/8] 0, 128
  %v528 = vpop.trf.xlu0
  %v529 = vpop.trf.xlu0
  %v530 = vpop.trf.xlu0
  %v531 = vpop.trf.xlu0
  %v532 = vpop.trf.xlu0
  %v533 = vpop.trf.xlu0
  %v534 = vpop.trf.xlu0
  %v535 = vpop.trf.xlu0
  %vm536 = vcmask 326656
  %v538 = vsel %vm536, %v528, 0
  %vm540 = vcmask 1043456
  %v542 = vsel %vm540, %v517, 0
  %544 = vmatprep.subr.bf16.mxu0 0
  %545 = vmatpush1.bf16.msra.mxu0 %v515
  %546 = vmatprep.subr.bf16.mxu0 0
  %547 = vmatpush1.bf16.msra.mxu0 %v516
  %548 = vmatprep.subr.bf16.mxu0 0
  %549 = vmatpush1.bf16.msra.mxu0 %v542
  %550 = vmatprep.subr.bf16.mxu0 0
  %551 = vmatpush1.bf16.msra.mxu0 0
  %552 = vmatprep.subr.bf16.mxu0 0
  %553 = vmatpush1.bf16.msra.mxu0 0
  %554 = vmatprep.subr.bf16.mxu0 0
  %555 = vmatpush1.bf16.msra.mxu0 0
  %556 = vmatprep.subr.bf16.mxu0 0
  %557 = vmatpush1.bf16.msra.mxu0 0
  %558 = vmatprep.subr.bf16.mxu0 0
  %559 = vmatpush1.bf16.msra.mxu0 0
  %560 = vmatprep.subr.bf16.mxu0 0
  %561 = vmatpush1.bf16.msra.mxu0 0
  %562 = vmatprep.subr.bf16.mxu0 0
  %563 = vmatpush1.bf16.msra.mxu0 0
  %564 = vmatprep.subr.bf16.mxu0 0
  %565 = vmatpush1.bf16.msra.mxu0 0
  %566 = vmatprep.subr.bf16.mxu0 0
  %567 = vmatpush1.bf16.msra.mxu0 0
  %568 = vmatprep.subr.bf16.mxu0 0
  %569 = vmatpush1.bf16.msra.mxu0 0
  %570 = vmatprep.subr.bf16.mxu0 0
  %571 = vmatpush1.bf16.msra.mxu0 0
  %572 = vmatprep.subr.bf16.mxu0 0
  %573 = vmatpush1.bf16.msra.mxu0 0
  %574 = vmatprep.subr.bf16.mxu0 0
  %575 = vmatpush1.bf16.msra.mxu0 0
  %576 = vmatprep.mubr.bf16.mxu0 0
  %577 = vmatmul.mubr.bf16.gmra.mrb[0].mxu0 %v538
  %v578 = vpop.f32.mrb[0].mxu0
  %v579 = vadd.f32 0.0, %v578
  %v580 = vpop.f32.mrb[0].mxu0
  %v581 = vpop.f32.mrb[0].mxu0
  %v582 = vadd.f32 0.0, %v581
  %v583 = vpop.f32.mrb[0].mxu0
  %584 = vdwg.mxu0
  %v585 = vadd.f32 %v518, %v579
  %v586 = vadd.f32 %v519, %v582
  %vm587 = vcmask 523264
  %588 = vst.msk [vmem:[#allocation2] sm:$0xff] %vm587, %v585
  %vm589 = vcmask 519168
  %590 = vst.msk [vmem:[#allocation2 + $0x8] sm:$0xf] %vm589, %v586
  %v591 = vld [vmem:[#allocation3] sm:$0xff]
  %v592 = vld [vmem:[#allocation3 + $0x8] sm:$0xf]
  %v593 = vpack.c.bf16 %v322, %v320
  %v594 = vpack.c.bf16 %v326, %v324
  %v595 = vpack.c.bf16 %v328, %v328
  %v597 = vsel %vm540, %v595, 0
  %599 = vmatprep.subr.bf16.mxu0 0
  %600 = vmatpush1.bf16.msra.mxu0 %v593
  %601 = vmatprep.subr.bf16.mxu0 0
  %602 = vmatpush1.bf16.msra.mxu0 %v594
  %603 = vmatprep.subr.bf16.mxu0 0
  %604 = vmatpush1.bf16.msra.mxu0 %v597
  %605 = vmatprep.subr.bf16.mxu0 0
  %606 = vmatpush1.bf16.msra.mxu0 0
  %607 = vmatprep.subr.bf16.mxu0 0
  %608 = vmatpush1.bf16.msra.mxu0 0
  %609 = vmatprep.subr.bf16.mxu0 0
  %610 = vmatpush1.bf16.msra.mxu0 0
  %611 = vmatprep.subr.bf16.mxu0 0
  %612 = vmatpush1.bf16.msra.mxu0 0
  %613 = vmatprep.subr.bf16.mxu0 0
  %614 = vmatpush1.bf16.msra.mxu0 0
  %615 = vmatprep.subr.bf16.mxu0 0
  %616 = vmatpush1.bf16.msra.mxu0 0
  %617 = vmatprep.subr.bf16.mxu0 0
  %618 = vmatpush1.bf16.msra.mxu0 0
  %619 = vmatprep.subr.bf16.mxu0 0
  %620 = vmatpush1.bf16.msra.mxu0 0
  %621 = vmatprep.subr.bf16.mxu0 0
  %622 = vmatpush1.bf16.msra.mxu0 0
  %623 = vmatprep.subr.bf16.mxu0 0
  %624 = vmatpush1.bf16.msra.mxu0 0
  %625 = vmatprep.subr.bf16.mxu0 0
  %626 = vmatpush1.bf16.msra.mxu0 0
  %627 = vmatprep.subr.bf16.mxu0 0
  %628 = vmatpush1.bf16.msra.mxu0 0
  %629 = vmatprep.subr.bf16.mxu0 0
  %630 = vmatpush1.bf16.msra.mxu0 0
  %631 = vmatprep.mubr.bf16.mxu0 0
  %632 = vmatmul.mubr.bf16.gmra.mrb[0].mxu0 %v538
  %v633 = vpop.f32.mrb[0].mxu0
  %v634 = vadd.f32 0.0, %v633
  %v635 = vpop.f32.mrb[0].mxu0
  %v636 = vpop.f32.mrb[0].mxu0
  %v637 = vadd.f32 0.0, %v636
  %v638 = vpop.f32.mrb[0].mxu0
  %639 = vdwg.mxu0
  %v640 = vadd.f32 %v591, %v634
  %v641 = vadd.f32 %v592, %v637
  %642 = vst.msk [vmem:[#allocation3] sm:$0xff] %vm401, %v640
  %vm643 = vcmask 11264
  %644 = vst.msk [vmem:[#allocation3 + $0x8] sm:$0xf] %vm643, %v641
  // Predicated region
  $region42: #{gnn_policy_forward.18} parent=0 // pred_check
    %p645 = pneg %p33
  $region43: #{gnn_policy_forward.18} parent=0 // pred_check_branch
    %647 = sbr.rel (%p645) target = $region45
  $region44: #{gnn_policy_forward.18} parent=0 // pred_region
    %v648 = vld [vmem:[#allocation3] sm:$0xff]
    %v649 = vld [vmem:[#allocation3 + $0x8] sm:$0xf]
    %v650 = vld [vmem:[%s7] sm:$0x3]
    %v651 = vld [vmem:[#allocation2] sm:$0xff]
    %v652 = vld [vmem:[#allocation2 + $0x8] sm:$0xf]
    %v654 = vsel %vm401, %v648, 0
    %v657 = vsel %vm401, %v649, 0
    %v660 = vsel %vm222, %v650, 0
    %662 = vmatprep.subr.mxu0 0.0
    %663 = vmatpush1.msra.mxu0 %v660
    %664 = vmatprep.subr.mxu0 0.0
    %665 = vmatpush1.msra.mxu0 0.0
    %666 = vmatprep.subr.mxu0 0.0
    %667 = vmatpush1.msra.mxu0 0.0
    %668 = vmatprep.subr.mxu0 0.0
    %669 = vmatpush1.msra.mxu0 0.0
    %670 = vmatprep.subr.mxu0 0.0
    %671 = vmatpush1.msra.mxu0 0.0
    %672 = vmatprep.subr.mxu0 0.0
    %673 = vmatpush1.msra.mxu0 0.0
    %674 = vmatprep.subr.mxu0 0.0
    %675 = vmatpush1.msra.mxu0 0.0
    %676 = vmatprep.subr.mxu0 0.0
    %677 = vmatpush1.msra.mxu0 0.0
    %678 = vmatprep.subr.mxu0 0.0
    %679 = vmatpush1.msra.mxu0 0.0
    %680 = vmatprep.subr.mxu0 0.0
    %681 = vmatpush1.msra.mxu0 0.0
    %682 = vmatprep.subr.mxu0 0.0
    %683 = vmatpush1.msra.mxu0 0.0
    %684 = vmatprep.subr.mxu0 0.0
    %685 = vmatpush1.msra.mxu0 0.0
    %686 = vmatprep.subr.mxu0 0.0
    %687 = vmatpush1.msra.mxu0 0.0
    %688 = vmatprep.subr.mxu0 0.0
    %689 = vmatpush1.msra.mxu0 0.0
    %690 = vmatprep.subr.mxu0 0.0
    %691 = vmatpush1.msra.mxu0 0.0
    %692 = vmatprep.subr.mxu0 0.0
    %693 = vmatpush1.msra.mxu0 0.0
    %694 = vmatprep.subr.mxu0 0.0
    %695 = vmatpush1.msra.mxu0 0.0
    %696 = vmatprep.subr.mxu0 0.0
    %697 = vmatpush1.msra.mxu0 0.0
    %698 = vmatprep.subr.mxu0 0.0
    %699 = vmatpush1.msra.mxu0 0.0
    %700 = vmatprep.subr.mxu0 0.0
    %701 = vmatpush1.msra.mxu0 0.0
    %702 = vmatprep.subr.mxu0 0.0
    %703 = vmatpush1.msra.mxu0 0.0
    %704 = vmatprep.subr.mxu0 0.0
    %705 = vmatpush1.msra.mxu0 0.0
    %706 = vmatprep.subr.mxu0 0.0
    %707 = vmatpush1.msra.mxu0 0.0
    %708 = vmatprep.subr.mxu0 0.0
    %709 = vmatpush1.msra.mxu0 0.0
    %710 = vmatprep.subr.mxu0 0.0
    %711 = vmatpush1.msra.mxu0 0.0
    %712 = vmatprep.subr.mxu0 0.0
    %713 = vmatpush1.msra.mxu0 0.0
    %714 = vmatprep.subr.mxu0 0.0
    %715 = vmatpush1.msra.mxu0 0.0
    %716 = vmatprep.subr.mxu0 0.0
    %717 = vmatpush1.msra.mxu0 0.0
    %718 = vmatprep.subr.mxu0 0.0
    %719 = vmatpush1.msra.mxu0 0.0
    %720 = vmatprep.subr.mxu0 0.0
    %721 = vmatpush1.msra.mxu0 0.0
    %722 = vmatprep.subr.mxu0 0.0
    %723 = vmatpush1.msra.mxu0 0.0
    %724 = vmatprep.subr.mxu0 0.0
    %725 = vmatpush1.msra.mxu0 0.0
    %726 = vmatprep.mubr.f32.mxu0 0.0
    %727 = vmatmul.mubr.f32.gmra.mrb[0].mxu0 %v654
    %v728 = vpop.f32.mrb[0].mxu0
    %v729 = vadd.f32 1e-16, %v728
    %v730 = vpop.f32.mrb[0].mxu0
    %731 = vmatprep.mubr.f32.mxu0 0.0
    %732 = vmatmul.mubr.f32.gmra.mrb[0].mxu0 %v657
    %v733 = vpop.f32.mrb[0].mxu0
    %v734 = vadd.f32 1e-16, %v733
    %v735 = vpop.f32.mrb[0].mxu0
    %736 = vdwg.mxu0
    %v737 = vrcp.pop %v729
    %v738 = vmul.f32 %v651, %v737
    %v739 = vrcp.pop %v734
    %v740 = vmul.f32 %v652, %v739
    %v741 = vld [vmem:[%s8] sm:$0x1]
    %v743 = vlaneseq
    %v744 = vshrl.u32 %v743, 7
    %v745 = vsub.s32 0, %v744
    %v746 = vrot.slane %v741, %v745
    %v748 = vadd.f32 %v738, %v746
    %v749 = vadd.f32 %v740, %v746
    %750 = vst.msk [vmem:[%s9] sm:$0xff] %vm587, %v748
    %751 = vst.msk [vmem:[%s9 + $0x8] sm:$0xf] %vm589, %v749
  $region45: #{gnn_policy_forward.18} parent=0 // pred_fallthru
    _
  // Predicated region
  $region46: #{gnn_policy_forward.18} parent=0 // pred_check
    _
  $region47: #{gnn_policy_forward.18} parent=0 // pred_check_branch
    %753 = sbr.rel (0) target = $region49
  $region48: #{gnn_policy_forward.18} parent=0 // pred_region
    _
  $region49: #{gnn_policy_forward.18} parent=0 // pred_fallthru
    _
  // Predicated region
  $region50: #{gnn_policy_forward.18} parent=0 // pred_check
    _
  $region51: #{gnn_policy_forward.18} parent=0 // pred_check_branch
    %755 = sbr.rel (0) target = $region53
  $region52: #{gnn_policy_forward.18} parent=0 // pred_region
    _
  $region53: #{gnn_policy_forward.18} parent=0 // pred_fallthru
    _

// kernel: gnn_policy_forward.23
$region0: #{gnn_policy_forward.23}
  #allocation0 [shape = 'u32[]', space=smem, size = 0x4, offset = 0x4, fixed_abs, tag = 'smem constant byte address 0x4 - core index']
  #allocation1 [shape = 'u32[144,128]{1,0:T(1,128)}', space=vmem, size = 0x12000, scoped, tag = 'internal scratch']
  #allocation2 [shape = 'f32[1,1]{1,0:T(1,128)S(1)}', space=vmem, size = 0x200, scoped, tag = 'scoped memory for gnn_policy_forward.23']
  %s0 = inlined_call_operand.vmem [shape: f32[24,64], index: 0, kind: input, shape index: {}]
  %s1 = inlined_call_operand.vmem [shape: f32[64,64], index: 1, kind: input, shape index: {}]
  %s2 = inlined_call_operand.vmem [shape: f32[1,64], index: 2, kind: input, shape index: {}]
  %s3 = inlined_call_operand.vmem [shape: f32[64,1], index: 3, kind: input, shape index: {}]
  %s4 = inlined_call_operand.<no memory space> [shape: f32[1,1], index: 4, kind: input, shape index: {}]
  %s5 = inlined_call_operand.vmem [shape: f32[24,1], index: 5, kind: output, shape index: {}]
  %s6 = sld [smem:[#allocation0]]
  $region30: #{gnn_policy_forward.23} parent=0
    _
  %s8 = ssub.s32 1, %s6
  %s9 = scalar_select 0, %s8, %s6
  %v10 = vstv %s4
  %11 = vst [vmem:[#allocation2] sm:$0x1] %v10
  // Predicated region
  $region2: #{gnn_policy_forward.23} parent=0 // pred_check
    _
  $region3: #{gnn_policy_forward.23} parent=0 // pred_check_branch
    %13 = sbr.rel (0) target = $region5
  $region4: #{gnn_policy_forward.23} parent=0 // pred_region
    _
  $region5: #{gnn_policy_forward.23} parent=0 // pred_fallthru
    _
  // Predicated region
  $region6: #{gnn_policy_forward.23} parent=0 // pred_check
    _
  $region7: #{gnn_policy_forward.23} parent=0 // pred_check_branch
    %15 = sbr.rel (0) target = $region9
  $region8: #{gnn_policy_forward.23} parent=0 // pred_region
    _
  $region9: #{gnn_policy_forward.23} parent=0 // pred_fallthru
    _
  // Predicated region
  $region10: #{gnn_policy_forward.23} parent=0 // pred_check
    _
  $region11: #{gnn_policy_forward.23} parent=0 // pred_check_branch
    %17 = sbr.rel (0) target = $region13
  $region12: #{gnn_policy_forward.23} parent=0 // pred_region
    _
  $region13: #{gnn_policy_forward.23} parent=0 // pred_fallthru
    _
  // Predicated region
  $region14: #{gnn_policy_forward.23} parent=0 // pred_check
    _
  $region15: #{gnn_policy_forward.23} parent=0 // pred_check_branch
    %19 = sbr.rel (0) target = $region17
  $region16: #{gnn_policy_forward.23} parent=0 // pred_region
    _
  $region17: #{gnn_policy_forward.23} parent=0 // pred_fallthru
    _
  // Predicated region
  $region18: #{gnn_policy_forward.23} parent=0 // pred_check
    _
  $region19: #{gnn_policy_forward.23} parent=0 // pred_check_branch
    %21 = sbr.rel (0) target = $region21
  $region20: #{gnn_policy_forward.23} parent=0 // pred_region
    _
  $region21: #{gnn_policy_forward.23} parent=0 // pred_fallthru
    _
  %v23 = vld [vmem:[%s0] sm:$0xff]
  %v24 = vld [vmem:[%s0 + $0x8] sm:$0xff]
  %v25 = vld [vmem:[%s0 + $0x10] sm:$0xff]
  %v26 = vpack.c.bf16 %v24, %v23
  %v27 = vpack.c.bf16 %v25, %v25
  %v28 = vld [vmem:[%s1] sm:$0xff]
  %v29 = vld [vmem:[%s1 + $0x8] sm:$0xff]
  %v30 = vld [vmem:[%s1 + $0x10] sm:$0xff]
  %v31 = vld [vmem:[%s1 + $0x18] sm:$0xff]
  %v32 = vld [vmem:[%s1 + $0x20] sm:$0xff]
  %v33 = vld [vmem:[%s1 + $0x28] sm:$0xff]
  %v34 = vld [vmem:[%s1 + $0x30] sm:$0xff]
  %v35 = vld [vmem:[%s1 + $0x38] sm:$0xff]
  %v36 = vpack.c.bf16 %v29, %v28
  %v37 = vpack.c.bf16 %v31, %v30
  %v38 = vpack.c.bf16 %v33, %v32
  %v39 = vpack.c.bf16 %v35, %v34
  %v40 = vld [vmem:[%s2] sm:$0x1]
  %v42 = vlaneseq
  %v43 = vshrl.u32 %v42, 7
  %v44 = vsub.s32 0, %v43
  %v45 = vrot.slane %v40, %v44
  %vm47 = vcmask 523264
  %v49 = vsel %vm47, %v26, 0
  %v52 = vsel %vm47, %v27, 0
  %54 = vmatprep.subr.bf16.mxu0 0
  %55 = vmatpush1.bf16.msra.mxu0 %v36
  %56 = vmatprep.subr.bf16.mxu0 0
  %57 = vmatpush1.bf16.msra.mxu0 %v37
  %58 = vmatprep.subr.bf16.mxu0 0
  %59 = vmatpush1.bf16.msra.mxu0 %v38
  %60 = vmatprep.subr.bf16.mxu0 0
  %61 = vmatpush1.bf16.msra.mxu0 %v39
  %62 = vmatprep.subr.bf16.mxu0 0
  %63 = vmatpush1.bf16.msra.mxu0 0
  %64 = vmatprep.subr.bf16.mxu0 0
  %65 = vmatpush1.bf16.msra.mxu0 0
  %66 = vmatprep.subr.bf16.mxu0 0
  %67 = vmatpush1.bf16.msra.mxu0 0
  %68 = vmatprep.subr.bf16.mxu0 0
  %69 = vmatpush1.bf16.msra.mxu0 0
  %70 = vmatprep.subr.bf16.mxu0 0
  %71 = vmatpush1.bf16.msra.mxu0 0
  %72 = vmatprep.subr.bf16.mxu0 0
  %73 = vmatpush1.bf16.msra.mxu0 0
  %74 = vmatprep.subr.bf16.mxu0 0
  %75 = vmatpush1.bf16.msra.mxu0 0
  %76 = vmatprep.subr.bf16.mxu0 0
  %77 = vmatpush1.bf16.msra.mxu0 0
  %78 = vmatprep.subr.bf16.mxu0 0
  %79 = vmatpush1.bf16.msra.mxu0 0
  %80 = vmatprep.subr.bf16.mxu0 0
  %81 = vmatpush1.bf16.msra.mxu0 0
  %82 = vmatprep.subr.bf16.mxu0 0
  %83 = vmatpush1.bf16.msra.mxu0 0
  %84 = vmatprep.subr.bf16.mxu0 0
  %85 = vmatpush1.bf16.msra.mxu0 0
  %86 = vmatprep.mubr.bf16.mxu0 0
  %87 = vmatmul.mubr.bf16.gmra.mrb[0].mxu0 %v49
  %v88 = vpop.f32.mrb[0].mxu0
  %v89 = vadd.f32 %v45, %v88
  %v90 = vpop.f32.mrb[0].mxu0
  %v91 = vpop.f32.mrb[0].mxu0
  %v92 = vadd.f32 %v45, %v91
  %v93 = vpop.f32.mrb[0].mxu0
  %94 = vmatprep.mubr.bf16.mxu0 0
  %95 = vmatmul.mubr.bf16.gmra.mrb[0].mxu0 %v52
  %v96 = vpop.f32.mrb[0].mxu0
  %v97 = vadd.f32 %v45, %v96
  %v98 = vpop.f32.mrb[0].mxu0
  %v99 = vpop.f32.mrb[0].mxu0
  %v100 = vpop.f32.mrb[0].mxu0
  %101 = vdwg.mxu0
  %v102 = vmax.f32 %v89, 0.0
  %v103 = vmax.f32 %v92, 0.0
  %v104 = vmax.f32 %v97, 0.0
  %v105 = vpack.c.bf16 %v103, %v102
  %v106 = vpack.c.bf16 %v104, %v104
  %v107 = vld [vmem:[%s3] sm:$0xff]
  %v108 = vld [vmem:[%s3 + $0x8] sm:$0xff]
  %v109 = vld [vmem:[%s3 + $0x10] sm:$0xff]
  %v110 = vld [vmem:[%s3 + $0x18] sm:$0xff]
  %v111 = vld [vmem:[%s3 + $0x20] sm:$0xff]
  %v112 = vld [vmem:[%s3 + $0x28] sm:$0xff]
  %v113 = vld [vmem:[%s3 + $0x30] sm:$0xff]
  %v114 = vld [vmem:[%s3 + $0x38] sm:$0xff]
  %v115 = vpack.c.bf16 %v108, %v107
  %v116 = vpack.c.bf16 %v110, %v109
  %v117 = vpack.c.bf16 %v112, %v111
  %v118 = vpack.c.bf16 %v114, %v113
  %v119 = vld [vmem:[#allocation2] sm:$0x1]
  %v121 = vlaneseq
  %v122 = vshrl.u32 %v121, 7
  %v123 = vsub.s32 0, %v122
  %v124 = vrot.slane %v119, %v123
  %v127 = vsel %vm47, %v105, 0
  %v130 = vsel %vm47, %v106, 0
  %132 = vmatprep.subr.bf16.mxu0 0
  %133 = vmatpush1.bf16.msra.mxu0 %v115
  %134 = vmatprep.subr.bf16.mxu0 0
  %135 = vmatpush1.bf16.msra.mxu0 %v116
  %136 = vmatprep.subr.bf16.mxu0 0
  %137 = vmatpush1.bf16.msra.mxu0 %v117
  %138 = vmatprep.subr.bf16.mxu0 0
  %139 = vmatpush1.bf16.msra.mxu0 %v118
  %140 = vmatprep.subr.bf16.mxu0 0
  %141 = vmatpush1.bf16.msra.mxu0 0
  %142 = vmatprep.subr.bf16.mxu0 0
  %143 = vmatpush1.bf16.msra.mxu0 0
  %144 = vmatprep.subr.bf16.mxu0 0
  %145 = vmatpush1.bf16.msra.mxu0 0
  %146 = vmatprep.subr.bf16.mxu0 0
  %147 = vmatpush1.bf16.msra.mxu0 0
  %148 = vmatprep.subr.bf16.mxu0 0
  %149 = vmatpush1.bf16.msra.mxu0 0
  %150 = vmatprep.subr.bf16.mxu0 0
  %151 = vmatpush1.bf16.msra.mxu0 0
  %152 = vmatprep.subr.bf16.mxu0 0
  %153 = vmatpush1.bf16.msra.mxu0 0
  %154 = vmatprep.subr.bf16.mxu0 0
  %155 = vmatpush1.bf16.msra.mxu0 0
  %156 = vmatprep.subr.bf16.mxu0 0
  %157 = vmatpush1.bf16.msra.mxu0 0
  %158 = vmatprep.subr.bf16.mxu0 0
  %159 = vmatpush1.bf16.msra.mxu0 0
  %160 = vmatprep.subr.bf16.mxu0 0
  %161 = vmatpush1.bf16.msra.mxu0 0
  %162 = vmatprep.subr.bf16.mxu0 0
  %163 = vmatpush1.bf16.msra.mxu0 0
  %164 = vmatprep.mubr.bf16.mxu0 0
  %165 = vmatmul.mubr.bf16.gmra.mrb[0].mxu0 %v127
  %v166 = vpop.f32.mrb[0].mxu0
  %v167 = vadd.f32 %v124, %v166
  %v168 = vpop.f32.mrb[0].mxu0
  %v169 = vpop.f32.mrb[0].mxu0
  %v170 = vadd.f32 %v124, %v169
  %v171 = vpop.f32.mrb[0].mxu0
  %172 = vmatprep.mubr.bf16.mxu0 0
  %173 = vmatmul.mubr.bf16.gmra.mrb[0].mxu0 %v130
  %v174 = vpop.f32.mrb[0].mxu0
  %v175 = vadd.f32 %v124, %v174
  %v176 = vpop.f32.mrb[0].mxu0
  %v177 = vpop.f32.mrb[0].mxu0
  %v178 = vpop.f32.mrb[0].mxu0
  %179 = vdwg.mxu0
  %vm180 = vcmask 7168
  %181 = vst.msk [vmem:[%s5] sm:$0xff] %vm180, %v167
  %182 = vst.msk [vmem:[%s5 + $0x8] sm:$0xff] %vm180, %v170
  %183 = vst.msk [vmem:[%s5 + $0x10] sm:$0xff] %vm180, %v175
  // Predicated region
  $region22: #{gnn_policy_forward.23} parent=0 // pred_check
    _
  $region23: #{gnn_policy_forward.23} parent=0 // pred_check_branch
    %185 = sbr.rel (0) target = $region25
  $region24: #{gnn_policy_forward.23} parent=0 // pred_region
    _
  $region25: #{gnn_policy_forward.23} parent=0 // pred_fallthru
    _
  // Predicated region
  $region26: #{gnn_policy_forward.23} parent=0 // pred_check
    _
  $region27: #{gnn_policy_forward.23} parent=0 // pred_check_branch
    %187 = sbr.rel (0) target = $region29
  $region28: #{gnn_policy_forward.23} parent=0 // pred_region
    _
  $region29: #{gnn_policy_forward.23} parent=0 // pred_fallthru
    _

// kernel: gnn_policy_forward.22
$region0: #{gnn_policy_forward.22}
  #allocation0 [shape = 'u32[]', space=smem, size = 0x4, offset = 0x4, fixed_abs, tag = 'smem constant byte address 0x4 - core index']
  #allocation1 [shape = 'u32[144,128]{1,0:T(1,128)}', space=vmem, size = 0x12000, scoped, tag = 'internal scratch']
  #allocation2 [shape = 'f32[20,64]{1,0:T(8,128)}', space=vmem, size = 0x3000, scoped, tag = 'scratch operand']
  #allocation3 [shape = 'f32[20,2]{1,0:T(8,128)}', space=vmem, size = 0x3000, scoped, tag = 'scratch operand']
  %s0 = inlined_call_operand.vmem [shape: s32[40,1], index: 0, kind: input, shape index: {}]
  %s1 = inlined_call_operand.vmem [shape: s32[40,1], index: 1, kind: input, shape index: {}]
  %s2 = inlined_call_operand.vmem [shape: bf16[12,64], index: 2, kind: input, shape index: {}]
  %s3 = inlined_call_operand.vmem [shape: bf16[12,2], index: 3, kind: input, shape index: {}]
  %s4 = inlined_call_operand.vmem [shape: bf16[20,2], index: 4, kind: input, shape index: {}]
  %s5 = inlined_call_operand.vmem [shape: f32[40,2], index: 5, kind: input, shape index: {}]
  %s6 = inlined_call_operand.vmem [shape: f32[1,2], index: 6, kind: input, shape index: {}]
  %s7 = inlined_call_operand.vmem [shape: f32[2,64], index: 7, kind: input, shape index: {}]
  %s8 = inlined_call_operand.vmem [shape: f32[1,64], index: 8, kind: input, shape index: {}]
  %s9 = inlined_call_operand.vmem [shape: f32[20,64], index: 9, kind: output, shape index: {}]
  %s10 = sld [smem:[#allocation0]]
  $region54: #{gnn_policy_forward.22} parent=0
    _
  %s12 = ssub.s32 1, %s10
  %s13 = scalar_select 0, %s12, %s10
  // Predicated region
  $region2: #{gnn_policy_forward.22} parent=0 // pred_check
    _
  $region3: #{gnn_policy_forward.22} parent=0 // pred_check_branch
    %15 = sbr.rel (0) target = $region5
  $region4: #{gnn_policy_forward.22} parent=0 // pred_region
    _
  $region5: #{gnn_policy_forward.22} parent=0 // pred_fallthru
    _
  // Predicated region
  $region6: #{gnn_policy_forward.22} parent=0 // pred_check
    _
  $region7: #{gnn_policy_forward.22} parent=0 // pred_check_branch
    %17 = sbr.rel (0) target = $region9
  $region8: #{gnn_policy_forward.22} parent=0 // pred_region
    _
  $region9: #{gnn_policy_forward.22} parent=0 // pred_fallthru
    _
  // Predicated region
  $region10: #{gnn_policy_forward.22} parent=0 // pred_check
    _
  $region11: #{gnn_policy_forward.22} parent=0 // pred_check_branch
    %19 = sbr.rel (0) target = $region13
  $region12: #{gnn_policy_forward.22} parent=0 // pred_region
    _
  $region13: #{gnn_policy_forward.22} parent=0 // pred_fallthru
    _
  // Predicated region
  $region14: #{gnn_policy_forward.22} parent=0 // pred_check
    _
  $region15: #{gnn_policy_forward.22} parent=0 // pred_check_branch
    %21 = sbr.rel (0) target = $region17
  $region16: #{gnn_policy_forward.22} parent=0 // pred_region
    _
  $region17: #{gnn_policy_forward.22} parent=0 // pred_fallthru
    _
  // Predicated region
  $region18: #{gnn_policy_forward.22} parent=0 // pred_check
    _
  $region19: #{gnn_policy_forward.22} parent=0 // pred_check_branch
    %23 = sbr.rel (0) target = $region21
  $region20: #{gnn_policy_forward.22} parent=0 // pred_region
    _
  $region21: #{gnn_policy_forward.22} parent=0 // pred_fallthru
    _
  // Predicated region
  $region22: #{gnn_policy_forward.22} parent=0 // pred_check
    _
  $region23: #{gnn_policy_forward.22} parent=0 // pred_check_branch
    %25 = sbr.rel (0) target = $region25
  $region24: #{gnn_policy_forward.22} parent=0 // pred_region
    _
  $region25: #{gnn_policy_forward.22} parent=0 // pred_fallthru
    _
  // Predicated region
  $region26: #{gnn_policy_forward.22} parent=0 // pred_check
    _
  $region27: #{gnn_policy_forward.22} parent=0 // pred_check_branch
    %27 = sbr.rel (0) target = $region29
  $region28: #{gnn_policy_forward.22} parent=0 // pred_region
    _
  $region29: #{gnn_policy_forward.22} parent=0 // pred_fallthru
    _
  // Predicated region
  $region30: #{gnn_policy_forward.22} parent=0 // pred_check
    _
  $region31: #{gnn_policy_forward.22} parent=0 // pred_check_branch
    %29 = sbr.rel (0) target = $region33
  $region32: #{gnn_policy_forward.22} parent=0 // pred_region
    _
  $region33: #{gnn_policy_forward.22} parent=0 // pred_fallthru
    _
  // Predicated region
  $region34: #{gnn_policy_forward.22} parent=0 // pred_check
    _
  $region35: #{gnn_policy_forward.22} parent=0 // pred_check_branch
    %31 = sbr.rel (0) target = $region37
  $region36: #{gnn_policy_forward.22} parent=0 // pred_region
    _
  $region37: #{gnn_policy_forward.22} parent=0 // pred_fallthru
    _
  %p33 = scmp.eq.s32.totalorder 0, 0
  // Predicated region
  $region38: #{gnn_policy_forward.22} parent=0 // pred_check
    %p34 = pneg %p33
  $region39: #{gnn_policy_forward.22} parent=0 // pred_check_branch
    %36 = sbr.rel (%p34) target = $region41
  $region40: #{gnn_policy_forward.22} parent=0 // pred_region
    %vm37 = vcmask 523264
    %38 = vst.msk [vmem:[#allocation2] sm:$0xff] %vm37, 0.0
    %39 = vst.msk [vmem:[#allocation2 + $0x8] sm:$0xff] %vm37, 0.0
    %vm40 = vcmask 519168
    %41 = vst.msk [vmem:[#allocation2 + $0x10] sm:$0xf] %vm40, 0.0
    %vm42 = vcmask 15360
    %43 = vst.msk [vmem:[#allocation3] sm:$0xff] %vm42, 0.0
    %44 = vst.msk [vmem:[#allocation3 + $0x8] sm:$0xff] %vm42, 0.0
    %vm45 = vcmask 11264
    %46 = vst.msk [vmem:[#allocation3 + $0x10] sm:$0xf] %vm45, 0.0
  $region41: #{gnn_policy_forward.22} parent=0 // pred_fallthru
    _
  %v47 = vld [vmem:[%s0] sm:$0xff]
  %v48 = vld [vmem:[%s0 + $0x8] sm:$0xff]
  %v49 = vld [vmem:[%s0 + $0x10] sm:$0xff]
  %v50 = vld [vmem:[%s0 + $0x18] sm:$0xff]
  %v51 = vld [vmem:[%s0 + $0x20] sm:$0xff]
  %v52 = vlaneseq
  %v53 = vand.u32 %v52, 127
  %54 = vset.pattern.permute.xlu0 0
  %55 = vperm.xlu0 %54, %v47
  %v56 = vpop.permute.xlu0 %55
  %57 = vset.pattern.permute.xlu0 0
  %58 = vperm.xlu0 %57, %v48
  %v59 = vpop.permute.xlu0 %58
  %60 = vset.pattern.permute.xlu0 0
  %61 = vperm.xlu0 %60, %v49
  %v62 = vpop.permute.xlu0 %61
  %63 = vset.pattern.permute.xlu0 0
  %64 = vperm.xlu0 %63, %v50
  %v65 = vpop.permute.xlu0 %64
  %66 = vset.pattern.permute.xlu0 0
  %67 = vperm.xlu0 %66, %v51
  %v68 = vpop.permute.xlu0 %67
  %vm69 = vcmp.eq.s32.totalorder %v56, %v53
  %vm70 = vcmp.eq.s32.totalorder %v59, %v53
  %vm71 = vcmp.eq.s32.totalorder %v62, %v53
  %vm72 = vcmp.eq.s32.totalorder %v65, %v53
  %vm73 = vcmp.eq.s32.totalorder %v68, %v53
  %v74 = vsel %vm69, 1, 0
  %v75 = vsel %vm70, 1, 0
  %v76 = vsel %vm71, 1, 0
  %v77 = vsel %vm72, 1, 0
  %v78 = vsel %vm73, 1, 0
  %v79 = vcvt.s32.f32 %v74
  %v80 = vcvt.s32.f32 %v75
  %v81 = vcvt.s32.f32 %v76
  %v82 = vcvt.s32.f32 %v77
  %v83 = vcvt.s32.f32 %v78
  %v84 = vpack.c.bf16 %v80, %v79
  %v85 = vpack.c.bf16 %v82, %v81
  %v86 = vpack.c.bf16 %v83, %v83
  %v87 = vld [vmem:[%s1] sm:$0xff]
  %v88 = vld [vmem:[%s1 + $0x8] sm:$0xff]
  %v89 = vld [vmem:[%s1 + $0x10] sm:$0xff]
  %v90 = vld [vmem:[%s1 + $0x18] sm:$0xff]
  %v91 = vld [vmem:[%s1 + $0x20] sm:$0xff]
  %92 = vset.pattern.permute.xlu0 0
  %93 = vperm.xlu0 %92, %v87
  %v94 = vpop.permute.xlu0 %93
  %95 = vset.pattern.permute.xlu0 0
  %96 = vperm.xlu0 %95, %v88
  %v97 = vpop.permute.xlu0 %96
  %98 = vset.pattern.permute.xlu0 0
  %99 = vperm.xlu0 %98, %v89
  %v100 = vpop.permute.xlu0 %99
  %101 = vset.pattern.permute.xlu0 0
  %102 = vperm.xlu0 %101, %v90
  %v103 = vpop.permute.xlu0 %102
  %104 = vset.pattern.permute.xlu0 0
  %105 = vperm.xlu0 %104, %v91
  %v106 = vpop.permute.xlu0 %105
  %vm107 = vcmp.eq.s32.totalorder %v94, %v53
  %vm108 = vcmp.eq.s32.totalorder %v97, %v53
  %vm109 = vcmp.eq.s32.totalorder %v100, %v53
  %vm110 = vcmp.eq.s32.totalorder %v103, %v53
  %vm111 = vcmp.eq.s32.totalorder %v106, %v53
  %v112 = vsel %vm107, 1, 0
  %v113 = vsel %vm108, 1, 0
  %v114 = vsel %vm109, 1, 0
  %v115 = vsel %vm110, 1, 0
  %v116 = vsel %vm111, 1, 0
  %v117 = vcvt.s32.f32 %v112
  %v118 = vcvt.s32.f32 %v113
  %v119 = vcvt.s32.f32 %v114
  %v120 = vcvt.s32.f32 %v115
  %v121 = vcvt.s32.f32 %v116
  %v122 = vpack.c.bf16 %v118, %v117
  %v123 = vpack.c.bf16 %v120, %v119
  %v124 = vpack.c.bf16 %v121, %v121
  %v125 = vld [vmem:[%s3] sm:$0xf]
  %v126 = vld [vmem:[%s3 + $0x4] sm:$0x3]
  %v127 = vld [vmem:[%s4] sm:$0xf]
  %v128 = vld [vmem:[%s4 + $0x4] sm:$0xf]
  %v129 = vld [vmem:[%s4 + $0x8] sm:$0x3]
  %v133 = vunpack.c.l.b16 %v127
  %v134 = vunpack.c.l.b16 %v128
  %v135 = vunpack.c.l.b16 %v129
  %v136 = vpack.c.b16 %v134, %v133
  %v137 = vpack.c.b16 %v135, %v135
  %vm139 = vcmask 162816
  %v141 = vsel %vm139, %v122, 0
  %v144 = vsel %vm139, %v123, 0
  %v147 = vsel %vm139, %v124, 0
  %vm149 = vcmask 1041408
  %v151 = vsel %vm149, %v137, 0
  %153 = vmatprep.subr.bf16.mxu0 0
  %154 = vmatpush1.bf16.msra.mxu0 %v136
  %155 = vmatprep.subr.bf16.mxu0 0
  %156 = vmatpush1.bf16.msra.mxu0 %v151
  %157 = vmatprep.subr.bf16.mxu0 0
  %158 = vmatpush1.bf16.msra.mxu0 0
  %159 = vmatprep.subr.bf16.mxu0 0
  %160 = vmatpush1.bf16.msra.mxu0 0
  %161 = vmatprep.subr.bf16.mxu0 0
  %162 = vmatpush1.bf16.msra.mxu0 0
  %163 = vmatprep.subr.bf16.mxu0 0
  %164 = vmatpush1.bf16.msra.mxu0 0
  %165 = vmatprep.subr.bf16.mxu0 0
  %166 = vmatpush1.bf16.msra.mxu0 0
  %167 = vmatprep.subr.bf16.mxu0 0
  %168 = vmatpush1.bf16.msra.mxu0 0
  %169 = vmatprep.subr.bf16.mxu0 0
  %170 = vmatpush1.bf16.msra.mxu0 0
  %171 = vmatprep.subr.bf16.mxu0 0
  %172 = vmatpush1.bf16.msra.mxu0 0
  %173 = vmatprep.subr.bf16.mxu0 0
  %174 = vmatpush1.bf16.msra.mxu0 0
  %175 = vmatprep.subr.bf16.mxu0 0
  %176 = vmatpush1.bf16.msra.mxu0 0
  %177 = vmatprep.subr.bf16.mxu0 0
  %178 = vmatpush1.bf16.msra.mxu0 0
  %179 = vmatprep.subr.bf16.mxu0 0
  %180 = vmatpush1.bf16.msra.mxu0 0
  %181 = vmatprep.subr.bf16.mxu0 0
  %182 = vmatpush1.bf16.msra.mxu0 0
  %183 = vmatprep.subr.bf16.mxu0 0
  %184 = vmatpush1.bf16.msra.mxu0 0
  %185 = vmatprep.mubr.bf16.mxu0 0
  %186 = vmatmul.mubr.bf16.gmra.mrb[0].mxu0 %v141
  %v187 = vpop.f32.mrb[0].mxu0
  %v188 = vadd.f32 0.0, %v187
  %v189 = vpop.f32.mrb[0].mxu0
  %v190 = vpop.f32.mrb[0].mxu0
  %v191 = vadd.f32 0.0, %v190
  %v192 = vpop.f32.mrb[0].mxu0
  %193 = vmatprep.mubr.bf16.mxu0 0
  %194 = vmatmul.mubr.bf16.gmra.mrb[0].mxu0 %v144
  %v195 = vpop.f32.mrb[0].mxu0
  %v196 = vadd.f32 0.0, %v195
  %v197 = vpop.f32.mrb[0].mxu0
  %v198 = vpop.f32.mrb[0].mxu0
  %v199 = vadd.f32 0.0, %v198
  %v200 = vpop.f32.mrb[0].mxu0
  %201 = vmatprep.mubr.bf16.mxu0 0
  %202 = vmatmul.mubr.bf16.gmra.mrb[0].mxu0 %v147
  %v203 = vpop.f32.mrb[0].mxu0
  %v204 = vadd.f32 0.0, %v203
  %v205 = vpop.f32.mrb[0].mxu0
  %v206 = vpop.f32.mrb[0].mxu0
  %v207 = vpop.f32.mrb[0].mxu0
  %208 = vdwg.mxu0
  %v211 = vunpack.c.l.b16 %v125
  %v212 = vunpack.c.l.b16 %v126
  %v213 = vpack.c.b16 %v212, %v211
  %vm214 = vcmask 97280
  %v216 = vsel %vm214, %v84, 0
  %v219 = vsel %vm214, %v85, 0
  %v222 = vsel %vm214, %v86, 0
  %vm224 = vcmask 1045504
  %v226 = vsel %vm224, %v213, 0
  %228 = vmatprep.subr.bf16.mxu0 0
  %229 = vmatpush1.bf16.msra.mxu0 %v226
  %230 = vmatprep.subr.bf16.mxu0 0
  %231 = vmatpush1.bf16.msra.mxu0 0
  %232 = vmatprep.subr.bf16.mxu0 0
  %233 = vmatpush1.bf16.msra.mxu0 0
  %234 = vmatprep.subr.bf16.mxu0 0
  %235 = vmatpush1.bf16.msra.mxu0 0
  %236 = vmatprep.subr.bf16.mxu0 0
  %237 = vmatpush1.bf16.msra.mxu0 0
  %238 = vmatprep.subr.bf16.mxu0 0
  %239 = vmatpush1.bf16.msra.mxu0 0
  %240 = vmatprep.subr.bf16.mxu0 0
  %241 = vmatpush1.bf16.msra.mxu0 0
  %242 = vmatprep.subr.bf16.mxu0 0
  %243 = vmatpush1.bf16.msra.mxu0 0
  %244 = vmatprep.subr.bf16.mxu0 0
  %245 = vmatpush1.bf16.msra.mxu0 0
  %246 = vmatprep.subr.bf16.mxu0 0
  %247 = vmatpush1.bf16.msra.mxu0 0
  %248 = vmatprep.subr.bf16.mxu0 0
  %249 = vmatpush1.bf16.msra.mxu0 0
  %250 = vmatprep.subr.bf16.mxu0 0
  %251 = vmatpush1.bf16.msra.mxu0 0
  %252 = vmatprep.subr.bf16.mxu0 0
  %253 = vmatpush1.bf16.msra.mxu0 0
  %254 = vmatprep.subr.bf16.mxu0 0
  %255 = vmatpush1.bf16.msra.mxu0 0
  %256 = vmatprep.subr.bf16.mxu0 0
  %257 = vmatpush1.bf16.msra.mxu0 0
  %258 = vmatprep.subr.bf16.mxu0 0
  %259 = vmatpush1.bf16.msra.mxu0 0
  %260 = vmatprep.mubr.bf16.mxu0 0
  %261 = vmatmul.mubr.bf16.gmra.mrb[0].mxu0 %v216
  %v262 = vpop.f32.mrb[0].mxu0
  %v263 = vadd.f32 %v188, %v262
  %v264 = vpop.f32.mrb[0].mxu0
  %v265 = vpop.f32.mrb[0].mxu0
  %v266 = vadd.f32 %v191, %v265
  %v267 = vpop.f32.mrb[0].mxu0
  %268 = vmatprep.mubr.bf16.mxu0 0
  %269 = vmatmul.mubr.bf16.gmra.mrb[0].mxu0 %v219
  %v270 = vpop.f32.mrb[0].mxu0
  %v271 = vadd.f32 %v196, %v270
  %v272 = vpop.f32.mrb[0].mxu0
  %v273 = vpop.f32.mrb[0].mxu0
  %v274 = vadd.f32 %v199, %v273
  %v275 = vpop.f32.mrb[0].mxu0
  %276 = vmatprep.mubr.bf16.mxu0 0
  %277 = vmatmul.mubr.bf16.gmra.mrb[0].mxu0 %v222
  %v278 = vpop.f32.mrb[0].mxu0
  %v279 = vadd.f32 %v204, %v278
  %v280 = vpop.f32.mrb[0].mxu0
  %v281 = vpop.f32.mrb[0].mxu0
  %v282 = vpop.f32.mrb[0].mxu0
  %283 = vdwg.mxu0
  %v284 = vld [vmem:[%s5] sm:$0xff]
  %v285 = vld [vmem:[%s5 + $0x8] sm:$0xff]
  %v286 = vld [vmem:[%s5 + $0x10] sm:$0xff]
  %v287 = vld [vmem:[%s5 + $0x18] sm:$0xff]
  %v288 = vld [vmem:[%s5 + $0x20] sm:$0xff]
  %v289 = vadd.f32 %v263, %v284
  %v290 = vadd.f32 %v266, %v285
  %v291 = vadd.f32 %v271, %v286
  %v292 = vadd.f32 %v274, %v287
  %v293 = vadd.f32 %v279, %v288
  %vm294 = vcmp.gt.f32.partialorder %v289, 0.0
  %vm295 = vcmp.gt.f32.partialorder %v290, 0.0
  %vm296 = vcmp.gt.f32.partialorder %v291, 0.0
  %vm297 = vcmp.gt.f32.partialorder %v292, 0.0
  %vm298 = vcmp.gt.f32.partialorder %v293, 0.0
  %v299 = vmul.f32 %v289, 0.2
  %v300 = vmul.f32 %v290, 0.2
  %v301 = vmul.f32 %v291, 0.2
  %v302 = vmul.f32 %v292, 0.2
  %v303 = vmul.f32 %v293, 0.2
  %v304 = vsel %vm294, %v289, %v299
  %v305 = vsel %vm295, %v290, %v300
  %v306 = vsel %vm296, %v291, %v301
  %v307 = vsel %vm297, %v292, %v302
  %v308 = vsel %vm298, %v293, %v303
  %v309 = vld [vmem:[%s6] sm:$0x1]
  %v311 = vlaneseq
  %v312 = vshrl.u32 %v311, 7
  %v313 = vsub.s32 0, %v312
  %v314 = vrot.slane %v309, %v313
  %v316 = vsub.f32 %v304, %v314
  %v317 = vsub.f32 %v305, %v314
  %v318 = vsub.f32 %v306, %v314
  %v319 = vsub.f32 %v307, %v314
  %v320 = vsub.f32 %v308, %v314
  %v321 = vmul.f32 %v316, 1.442695
  %v322 = vpow.pop %v321
  %v323 = vmul.f32 %v317, 1.442695
  %v324 = vpow.pop %v323
  %v325 = vmul.f32 %v318, 1.442695
  %v326 = vpow.pop %v325
  %v327 = vmul.f32 %v319, 1.442695
  %v328 = vpow.pop %v327
  %v329 = vmul.f32 %v320, 1.442695
  %v330 = vpow.pop %v329
  %v331 = vld [vmem:[%s2] sm:$0xf]
  %v332 = vld [vmem:[%s2 + $0x4] sm:$0x3]
  %v335 = vunpack.c.l.b16 %v331
  %v336 = vunpack.c.l.b16 %v332
  %v337 = vpack.c.b16 %v336, %v335
  %v339 = vsel %vm224, %v337, 0
  %341 = vmatprep.subr.bf16.mxu0 0
  %342 = vmatpush1.bf16.msra.mxu0 %v339
  %343 = vmatprep.subr.bf16.mxu0 0
  %344 = vmatpush1.bf16.msra.mxu0 0
  %345 = vmatprep.subr.bf16.mxu0 0
  %346 = vmatpush1.bf16.msra.mxu0 0
  %347 = vmatprep.subr.bf16.mxu0 0
  %348 = vmatpush1.bf16.msra.mxu0 0
  %349 = vmatprep.subr.bf16.mxu0 0
  %350 = vmatpush1.bf16.msra.mxu0 0
  %351 = vmatprep.subr.bf16.mxu0 0
  %352 = vmatpush1.bf16.msra.mxu0 0
  %353 = vmatprep.subr.bf16.mxu0 0
  %354 = vmatpush1.bf16.msra.mxu0 0
  %355 = vmatprep.subr.bf16.mxu0 0
  %356 = vmatpush1.bf16.msra.mxu0 0
  %357 = vmatprep.subr.bf16.mxu0 0
  %358 = vmatpush1.bf16.msra.mxu0 0
  %359 = vmatprep.subr.bf16.mxu0 0
  %360 = vmatpush1.bf16.msra.mxu0 0
  %361 = vmatprep.subr.bf16.mxu0 0
  %362 = vmatpush1.bf16.msra.mxu0 0
  %363 = vmatprep.subr.bf16.mxu0 0
  %364 = vmatpush1.bf16.msra.mxu0 0
  %365 = vmatprep.subr.bf16.mxu0 0
  %366 = vmatpush1.bf16.msra.mxu0 0
  %367 = vmatprep.subr.bf16.mxu0 0
  %368 = vmatpush1.bf16.msra.mxu0 0
  %369 = vmatprep.subr.bf16.mxu0 0
  %370 = vmatpush1.bf16.msra.mxu0 0
  %371 = vmatprep.subr.bf16.mxu0 0
  %372 = vmatpush1.bf16.msra.mxu0 0
  %373 = vmatprep.mubr.bf16.mxu0 0
  %374 = vmatmul.mubr.bf16.gmra.mrb[0].mxu0 %v216
  %v375 = vpop.f32.mrb[0].mxu0
  %v376 = vadd.f32 0.0, %v375
  %v377 = vpop.f32.mrb[0].mxu0
  %v378 = vpop.f32.mrb[0].mxu0
  %v379 = vadd.f32 0.0, %v378
  %v380 = vpop.f32.mrb[0].mxu0
  %381 = vmatprep.mubr.bf16.mxu0 0
  %382 = vmatmul.mubr.bf16.gmra.mrb[0].mxu0 %v219
  %v383 = vpop.f32.mrb[0].mxu0
  %v384 = vadd.f32 0.0, %v383
  %v385 = vpop.f32.mrb[0].mxu0
  %v386 = vpop.f32.mrb[0].mxu0
  %v387 = vadd.f32 0.0, %v386
  %v388 = vpop.f32.mrb[0].mxu0
  %389 = vmatprep.mubr.bf16.mxu0 0
  %390 = vmatmul.mubr.bf16.gmra.mrb[0].mxu0 %v222
  %v391 = vpop.f32.mrb[0].mxu0
  %v392 = vadd.f32 0.0, %v391
  %v393 = vpop.f32.mrb[0].mxu0
  %v394 = vpop.f32.mrb[0].mxu0
  %v395 = vpop.f32.mrb[0].mxu0
  %396 = vdwg.mxu0
  %v397 = vld [vmem:[%s7] sm:$0x3]
  %vm398 = vcmask 15360
  %v400 = vsel %vm398, %v322, 0
  %v403 = vsel %vm398, %v324, 0
  %v406 = vsel %vm398, %v326, 0
  %v409 = vsel %vm398, %v328, 0
  %v412 = vsel %vm398, %v330, 0
  %v415 = vsel %vm149, %v397, 0
  %417 = vmatprep.subr.mxu0 0.0
  %418 = vmatpush1.msra.mxu0 %v415
  %419 = vmatprep.subr.mxu0 0.0
  %420 = vmatpush1.msra.mxu0 0.0
  %421 = vmatprep.subr.mxu0 0.0
  %422 = vmatpush1.msra.mxu0 0.0
  %423 = vmatprep.subr.mxu0 0.0
  %424 = vmatpush1.msra.mxu0 0.0
  %425 = vmatprep.subr.mxu0 0.0
  %426 = vmatpush1.msra.mxu0 0.0
  %427 = vmatprep.subr.mxu0 0.0
  %428 = vmatpush1.msra.mxu0 0.0
  %429 = vmatprep.subr.mxu0 0.0
  %430 = vmatpush1.msra.mxu0 0.0
  %431 = vmatprep.subr.mxu0 0.0
  %432 = vmatpush1.msra.mxu0 0.0
  %433 = vmatprep.subr.mxu0 0.0
  %434 = vmatpush1.msra.mxu0 0.0
  %435 = vmatprep.subr.mxu0 0.0
  %436 = vmatpush1.msra.mxu0 0.0
  %437 = vmatprep.subr.mxu0 0.0
  %438 = vmatpush1.msra.mxu0 0.0
  %439 = vmatprep.subr.mxu0 0.0
  %440 = vmatpush1.msra.mxu0 0.0
  %441 = vmatprep.subr.mxu0 0.0
  %442 = vmatpush1.msra.mxu0 0.0
  %443 = vmatprep.subr.mxu0 0.0
  %444 = vmatpush1.msra.mxu0 0.0
  %445 = vmatprep.subr.mxu0 0.0
  %446 = vmatpush1.msra.mxu0 0.0
  %447 = vmatprep.subr.mxu0 0.0
  %448 = vmatpush1.msra.mxu0 0.0
  %449 = vmatprep.subr.mxu0 0.0
  %450 = vmatpush1.msra.mxu0 0.0
  %451 = vmatprep.subr.mxu0 0.0
  %452 = vmatpush1.msra.mxu0 0.0
  %453 = vmatprep.subr.mxu0 0.0
  %454 = vmatpush1.msra.mxu0 0.0
  %455 = vmatprep.subr.mxu0 0.0
  %456 = vmatpush1.msra.mxu0 0.0
  %457 = vmatprep.subr.mxu0 0.0
  %458 = vmatpush1.msra.mxu0 0.0
  %459 = vmatprep.subr.mxu0 0.0
  %460 = vmatpush1.msra.mxu0 0.0
  %461 = vmatprep.subr.mxu0 0.0
  %462 = vmatpush1.msra.mxu0 0.0
  %463 = vmatprep.subr.mxu0 0.0
  %464 = vmatpush1.msra.mxu0 0.0
  %465 = vmatprep.subr.mxu0 0.0
  %466 = vmatpush1.msra.mxu0 0.0
  %467 = vmatprep.subr.mxu0 0.0
  %468 = vmatpush1.msra.mxu0 0.0
  %469 = vmatprep.subr.mxu0 0.0
  %470 = vmatpush1.msra.mxu0 0.0
  %471 = vmatprep.subr.mxu0 0.0
  %472 = vmatpush1.msra.mxu0 0.0
  %473 = vmatprep.subr.mxu0 0.0
  %474 = vmatpush1.msra.mxu0 0.0
  %475 = vmatprep.subr.mxu0 0.0
  %476 = vmatpush1.msra.mxu0 0.0
  %477 = vmatprep.subr.mxu0 0.0
  %478 = vmatpush1.msra.mxu0 0.0
  %479 = vmatprep.subr.mxu0 0.0
  %480 = vmatpush1.msra.mxu0 0.0
  %481 = vmatprep.mubr.f32.mxu0 0.0
  %482 = vmatmul.mubr.f32.gmra.mrb[0].mxu0 %v400
  %v483 = vpop.f32.mrb[0].mxu0
  %v484 = vadd.f32 0.0, %v483
  %v485 = vpop.f32.mrb[0].mxu0
  %486 = vmatprep.mubr.f32.mxu0 0.0
  %487 = vmatmul.mubr.f32.gmra.mrb[0].mxu0 %v403
  %v488 = vpop.f32.mrb[0].mxu0
  %v489 = vadd.f32 0.0, %v488
  %v490 = vpop.f32.mrb[0].mxu0
  %491 = vmatprep.mubr.f32.mxu0 0.0
  %492 = vmatmul.mubr.f32.gmra.mrb[0].mxu0 %v406
  %v493 = vpop.f32.mrb[0].mxu0
  %v494 = vadd.f32 0.0, %v493
  %v495 = vpop.f32.mrb[0].mxu0
  %496 = vmatprep.mubr.f32.mxu0 0.0
  %497 = vmatmul.mubr.f32.gmra.mrb[0].mxu0 %v409
  %v498 = vpop.f32.mrb[0].mxu0
  %v499 = vadd.f32 0.0, %v498
  %v500 = vpop.f32.mrb[0].mxu0
  %501 = vmatprep.mubr.f32.mxu0 0.0
  %502 = vmatmul.mubr.f32.gmra.mrb[0].mxu0 %v412
  %v503 = vpop.f32.mrb[0].mxu0
  %v504 = vadd.f32 0.0, %v503
  %v505 = vpop.f32.mrb[0].mxu0
  %506 = vdwg.mxu0
  %v507 = vmul.f32 %v376, %v484
  %v508 = vmul.f32 %v379, %v489
  %v509 = vmul.f32 %v384, %v494
  %v510 = vmul.f32 %v387, %v499
  %v511 = vmul.f32 %v392, %v504
  %v512 = vpack.c.bf16 %v508, %v507
  %v513 = vpack.c.bf16 %v510, %v509
  %v514 = vpack.c.bf16 %v511, %v511
  %v515 = vld [vmem:[#allocation2] sm:$0xff]
  %v516 = vld [vmem:[#allocation2 + $0x8] sm:$0xff]
  %v517 = vld [vmem:[#allocation2 + $0x10] sm:$0xf]
  %518 = vxpose.xlu0.c.b16.start [1/8] %v122, 128
  %519 = vxpose.xlu0.c.b16.cont [2/8] %v123, 128
  %520 = vxpose.xlu0.c.b16.cont [3/8] %v124, 128
  %521 = vxpose.xlu0.c.b16.cont [4/8] 0, 128
  %522 = vxpose.xlu0.c.b16.cont [5/8] 0, 128
  %523 = vxpose.xlu0.c.b16.cont [6/8] 0, 128
  %524 = vxpose.xlu0.c.b16.cont [7/8] 0, 128
  %525 = vxpose.xlu0.c.b16.end [8/8] 0, 128
  %v526 = vpop.trf.xlu0
  %v527 = vpop.trf.xlu0
  %v528 = vpop.trf.xlu0
  %v529 = vpop.trf.xlu0
  %v530 = vpop.trf.xlu0
  %v531 = vpop.trf.xlu0
  %v532 = vpop.trf.xlu0
  %v533 = vpop.trf.xlu0
  %vm534 = vcmask 326656
  %v536 = vsel %vm534, %v526, 0
  %v539 = vsel %vm534, %v527, 0
  %vm541 = vcmask 1043456
  %v543 = vsel %vm541, %v514, 0
  %545 = vmatprep.subr.bf16.mxu0 0
  %546 = vmatpush1.bf16.msra.mxu0 %v512
  %547 = vmatprep.subr.bf16.mxu0 0
  %548 = vmatpush1.bf16.msra.mxu0 %v513
  %549 = vmatprep.subr.bf16.mxu0 0
  %550 = vmatpush1.bf16.msra.mxu0 %v543
  %551 = vmatprep.subr.bf16.mxu0 0
  %552 = vmatpush1.bf16.msra.mxu0 0
  %553 = vmatprep.subr.bf16.mxu0 0
  %554 = vmatpush1.bf16.msra.mxu0 0
  %555 = vmatprep.subr.bf16.mxu0 0
  %556 = vmatpush1.bf16.msra.mxu0 0
  %557 = vmatprep.subr.bf16.mxu0 0
  %558 = vmatpush1.bf16.msra.mxu0 0
  %559 = vmatprep.subr.bf16.mxu0 0
  %560 = vmatpush1.bf16.msra.mxu0 0
  %561 = vmatprep.subr.bf16.mxu0 0
  %562 = vmatpush1.bf16.msra.mxu0 0
  %563 = vmatprep.subr.bf16.mxu0 0
  %564 = vmatpush1.bf16.msra.mxu0 0
  %565 = vmatprep.subr.bf16.mxu0 0
  %566 = vmatpush1.bf16.msra.mxu0 0
  %567 = vmatprep.subr.bf16.mxu0 0
  %568 = vmatpush1.bf16.msra.mxu0 0
  %569 = vmatprep.subr.bf16.mxu0 0
  %570 = vmatpush1.bf16.msra.mxu0 0
  %571 = vmatprep.subr.bf16.mxu0 0
  %572 = vmatpush1.bf16.msra.mxu0 0
  %573 = vmatprep.subr.bf16.mxu0 0
  %574 = vmatpush1.bf16.msra.mxu0 0
  %575 = vmatprep.subr.bf16.mxu0 0
  %576 = vmatpush1.bf16.msra.mxu0 0
  %577 = vmatprep.mubr.bf16.mxu0 0
  %578 = vmatmul.mubr.bf16.gmra.mrb[0].mxu0 %v536
  %v579 = vpop.f32.mrb[0].mxu0
  %v580 = vadd.f32 0.0, %v579
  %v581 = vpop.f32.mrb[0].mxu0
  %v582 = vpop.f32.mrb[0].mxu0
  %v583 = vadd.f32 0.0, %v582
  %v584 = vpop.f32.mrb[0].mxu0
  %585 = vmatprep.mubr.bf16.mxu0 0
  %586 = vmatmul.mubr.bf16.gmra.mrb[0].mxu0 %v539
  %v587 = vpop.f32.mrb[0].mxu0
  %v588 = vadd.f32 0.0, %v587
  %v589 = vpop.f32.mrb[0].mxu0
  %v590 = vpop.f32.mrb[0].mxu0
  %v591 = vpop.f32.mrb[0].mxu0
  %592 = vdwg.mxu0
  %v593 = vadd.f32 %v515, %v580
  %v594 = vadd.f32 %v516, %v583
  %v595 = vadd.f32 %v517, %v588
  %vm596 = vcmask 523264
  %597 = vst.msk [vmem:[#allocation2] sm:$0xff] %vm596, %v593
  %598 = vst.msk [vmem:[#allocation2 + $0x8] sm:$0xff] %vm596, %v594
  %vm599 = vcmask 519168
  %600 = vst.msk [vmem:[#allocation2 + $0x10] sm:$0xf] %vm599, %v595
  %v601 = vld [vmem:[#allocation3] sm:$0xff]
  %v602 = vld [vmem:[#allocation3 + $0x8] sm:$0xff]
  %v603 = vld [vmem:[#allocation3 + $0x10] sm:$0xf]
  %v604 = vpack.c.bf16 %v324, %v322
  %v605 = vpack.c.bf16 %v328, %v326
  %v606 = vpack.c.bf16 %v330, %v330
  %v608 = vsel %vm541, %v606, 0
  %610 = vmatprep.subr.bf16.mxu0 0
  %611 = vmatpush1.bf16.msra.mxu0 %v604
  %612 = vmatprep.subr.bf16.mxu0 0
  %613 = vmatpush1.bf16.msra.mxu0 %v605
  %614 = vmatprep.subr.bf16.mxu0 0
  %615 = vmatpush1.bf16.msra.mxu0 %v608
  %616 = vmatprep.subr.bf16.mxu0 0
  %617 = vmatpush1.bf16.msra.mxu0 0
  %618 = vmatprep.subr.bf16.mxu0 0
  %619 = vmatpush1.bf16.msra.mxu0 0
  %620 = vmatprep.subr.bf16.mxu0 0
  %621 = vmatpush1.bf16.msra.mxu0 0
  %622 = vmatprep.subr.bf16.mxu0 0
  %623 = vmatpush1.bf16.msra.mxu0 0
  %624 = vmatprep.subr.bf16.mxu0 0
  %625 = vmatpush1.bf16.msra.mxu0 0
  %626 = vmatprep.subr.bf16.mxu0 0
  %627 = vmatpush1.bf16.msra.mxu0 0
  %628 = vmatprep.subr.bf16.mxu0 0
  %629 = vmatpush1.bf16.msra.mxu0 0
  %630 = vmatprep.subr.bf16.mxu0 0
  %631 = vmatpush1.bf16.msra.mxu0 0
  %632 = vmatprep.subr.bf16.mxu0 0
  %633 = vmatpush1.bf16.msra.mxu0 0
  %634 = vmatprep.subr.bf16.mxu0 0
  %635 = vmatpush1.bf16.msra.mxu0 0
  %636 = vmatprep.subr.bf16.mxu0 0
  %637 = vmatpush1.bf16.msra.mxu0 0
  %638 = vmatprep.subr.bf16.mxu0 0
  %639 = vmatpush1.bf16.msra.mxu0 0
  %640 = vmatprep.subr.bf16.mxu0 0
  %641 = vmatpush1.bf16.msra.mxu0 0
  %642 = vmatprep.mubr.bf16.mxu0 0
  %643 = vmatmul.mubr.bf16.gmra.mrb[0].mxu0 %v536
  %v644 = vpop.f32.mrb[0].mxu0
  %v645 = vadd.f32 0.0, %v644
  %v646 = vpop.f32.mrb[0].mxu0
  %v647 = vpop.f32.mrb[0].mxu0
  %v648 = vadd.f32 0.0, %v647
  %v649 = vpop.f32.mrb[0].mxu0
  %650 = vmatprep.mubr.bf16.mxu0 0
  %651 = vmatmul.mubr.bf16.gmra.mrb[0].mxu0 %v539
  %v652 = vpop.f32.mrb[0].mxu0
  %v653 = vadd.f32 0.0, %v652
  %v654 = vpop.f32.mrb[0].mxu0
  %v655 = vpop.f32.mrb[0].mxu0
  %v656 = vpop.f32.mrb[0].mxu0
  %657 = vdwg.mxu0
  %v658 = vadd.f32 %v601, %v645
  %v659 = vadd.f32 %v602, %v648
  %v660 = vadd.f32 %v603, %v653
  %661 = vst.msk [vmem:[#allocation3] sm:$0xff] %vm398, %v658
  %662 = vst.msk [vmem:[#allocation3 + $0x8] sm:$0xff] %vm398, %v659
  %vm663 = vcmask 11264
  %664 = vst.msk [vmem:[#allocation3 + $0x10] sm:$0xf] %vm663, %v660
  // Predicated region
  $region42: #{gnn_policy_forward.22} parent=0 // pred_check
    %p665 = pneg %p33
  $region43: #{gnn_policy_forward.22} parent=0 // pred_check_branch
    %667 = sbr.rel (%p665) target = $region45
  $region44: #{gnn_policy_forward.22} parent=0 // pred_region
    %v668 = vld [vmem:[#allocation3] sm:$0xff]
    %v669 = vld [vmem:[#allocation3 + $0x8] sm:$0xff]
    %v670 = vld [vmem:[#allocation3 + $0x10] sm:$0xf]
    %v671 = vld [vmem:[%s7] sm:$0x3]
    %v672 = vld [vmem:[#allocation2] sm:$0xff]
    %v673 = vld [vmem:[#allocation2 + $0x8] sm:$0xff]
    %v674 = vld [vmem:[#allocation2 + $0x10] sm:$0xf]
    %v676 = vsel %vm398, %v668, 0
    %v679 = vsel %vm398, %v669, 0
    %v682 = vsel %vm398, %v670, 0
    %v685 = vsel %vm149, %v671, 0
    %687 = vmatprep.subr.mxu0 0.0
    %688 = vmatpush1.msra.mxu0 %v685
    %689 = vmatprep.subr.mxu0 0.0
    %690 = vmatpush1.msra.mxu0 0.0
    %691 = vmatprep.subr.mxu0 0.0
    %692 = vmatpush1.msra.mxu0 0.0
    %693 = vmatprep.subr.mxu0 0.0
    %694 = vmatpush1.msra.mxu0 0.0
    %695 = vmatprep.subr.mxu0 0.0
    %696 = vmatpush1.msra.mxu0 0.0
    %697 = vmatprep.subr.mxu0 0.0
    %698 = vmatpush1.msra.mxu0 0.0
    %699 = vmatprep.subr.mxu0 0.0
    %700 = vmatpush1.msra.mxu0 0.0
    %701 = vmatprep.subr.mxu0 0.0
    %702 = vmatpush1.msra.mxu0 0.0
    %703 = vmatprep.subr.mxu0 0.0
    %704 = vmatpush1.msra.mxu0 0.0
    %705 = vmatprep.subr.mxu0 0.0
    %706 = vmatpush1.msra.mxu0 0.0
    %707 = vmatprep.subr.mxu0 0.0
    %708 = vmatpush1.msra.mxu0 0.0
    %709 = vmatprep.subr.mxu0 0.0
    %710 = vmatpush1.msra.mxu0 0.0
    %711 = vmatprep.subr.mxu0 0.0
    %712 = vmatpush1.msra.mxu0 0.0
    %713 = vmatprep.subr.mxu0 0.0
    %714 = vmatpush1.msra.mxu0 0.0
    %715 = vmatprep.subr.mxu0 0.0
    %716 = vmatpush1.msra.mxu0 0.0
    %717 = vmatprep.subr.mxu0 0.0
    %718 = vmatpush1.msra.mxu0 0.0
    %719 = vmatprep.subr.mxu0 0.0
    %720 = vmatpush1.msra.mxu0 0.0
    %721 = vmatprep.subr.mxu0 0.0
    %722 = vmatpush1.msra.mxu0 0.0
    %723 = vmatprep.subr.mxu0 0.0
    %724 = vmatpush1.msra.mxu0 0.0
    %725 = vmatprep.subr.mxu0 0.0
    %726 = vmatpush1.msra.mxu0 0.0
    %727 = vmatprep.subr.mxu0 0.0
    %728 = vmatpush1.msra.mxu0 0.0
    %729 = vmatprep.subr.mxu0 0.0
    %730 = vmatpush1.msra.mxu0 0.0
    %731 = vmatprep.subr.mxu0 0.0
    %732 = vmatpush1.msra.mxu0 0.0
    %733 = vmatprep.subr.mxu0 0.0
    %734 = vmatpush1.msra.mxu0 0.0
    %735 = vmatprep.subr.mxu0 0.0
    %736 = vmatpush1.msra.mxu0 0.0
    %737 = vmatprep.subr.mxu0 0.0
    %738 = vmatpush1.msra.mxu0 0.0
    %739 = vmatprep.subr.mxu0 0.0
    %740 = vmatpush1.msra.mxu0 0.0
    %741 = vmatprep.subr.mxu0 0.0
    %742 = vmatpush1.msra.mxu0 0.0
    %743 = vmatprep.subr.mxu0 0.0
    %744 = vmatpush1.msra.mxu0 0.0
    %745 = vmatprep.subr.mxu0 0.0
    %746 = vmatpush1.msra.mxu0 0.0
    %747 = vmatprep.subr.mxu0 0.0
    %748 = vmatpush1.msra.mxu0 0.0
    %749 = vmatprep.subr.mxu0 0.0
    %750 = vmatpush1.msra.mxu0 0.0
    %751 = vmatprep.mubr.f32.mxu0 0.0
    %752 = vmatmul.mubr.f32.gmra.mrb[0].mxu0 %v676
    %v753 = vpop.f32.mrb[0].mxu0
    %v754 = vadd.f32 1e-16, %v753
    %v755 = vpop.f32.mrb[0].mxu0
    %756 = vmatprep.mubr.f32.mxu0 0.0
    %757 = vmatmul.mubr.f32.gmra.mrb[0].mxu0 %v679
    %v758 = vpop.f32.mrb[0].mxu0
    %v759 = vadd.f32 1e-16, %v758
    %v760 = vpop.f32.mrb[0].mxu0
    %761 = vmatprep.mubr.f32.mxu0 0.0
    %762 = vmatmul.mubr.f32.gmra.mrb[0].mxu0 %v682
    %v763 = vpop.f32.mrb[0].mxu0
    %v764 = vadd.f32 1e-16, %v763
    %v765 = vpop.f32.mrb[0].mxu0
    %766 = vdwg.mxu0
    %v767 = vrcp.pop %v754
    %v768 = vmul.f32 %v672, %v767
    %v769 = vrcp.pop %v759
    %v770 = vmul.f32 %v673, %v769
    %v771 = vrcp.pop %v764
    %v772 = vmul.f32 %v674, %v771
    %v773 = vld [vmem:[%s8] sm:$0x1]
    %v775 = vlaneseq
    %v776 = vshrl.u32 %v775, 7
    %v777 = vsub.s32 0, %v776
    %v778 = vrot.slane %v773, %v777
    %v780 = vadd.f32 %v768, %v778
    %v781 = vadd.f32 %v770, %v778
    %v782 = vadd.f32 %v772, %v778
    %783 = vst.msk [vmem:[%s9] sm:$0xff] %vm596, %v780
    %784 = vst.msk [vmem:[%s9 + $0x8] sm:$0xff] %vm596, %v781
    %785 = vst.msk [vmem:[%s9 + $0x10] sm:$0xf] %vm599, %v782
  $region45: #{gnn_policy_forward.22} parent=0 // pred_fallthru
    _
  // Predicated region
  $region46: #{gnn_policy_forward.22} parent=0 // pred_check
    _
  $region47: #{gnn_policy_forward.22} parent=0 // pred_check_branch
    %787 = sbr.rel (0) target = $region49
  $region48: #{gnn_policy_forward.22} parent=0 // pred_region
    _
  $region49: #{gnn_policy_forward.22} parent=0 // pred_fallthru
    _
  // Predicated region
  $region50: #{gnn_policy_forward.22} parent=0 // pred_check
    _
  $region51: #{gnn_policy_forward.22} parent=0 // pred_check_branch
    %789 = sbr.rel (0) target = $region53
  $region52: #{gnn_policy_forward.22} parent=0 // pred_region
    _
  $region53: #{gnn_policy_forward.22} parent=0 // pred_fallthru
    _

</llo_original>
